<compile_context>
chip_gen: v7x
topology: tpu7x:2x2x1
jax: 0.10.0
libtpu: 0.0.40
codegen_flags: <defaults>
</compile_context>

<pallas_src>
import functools

import jax
import jax.numpy as jnp
from jax.experimental import pallas as pl
from jax.experimental.pallas import tpu as pltpu


def _round_up(x, m):
    return ((x + m - 1) // m) * m


def _tree_lstm_kernel(x_ref,      # VMEM (BT, E)      bf16  gathered embeddings
                      ch_h_ref,   # VMEM (NC, BT, H)  bf16  mask-folded child h
                      ch_c_ref,   # VMEM (NC, BT, H)  bf16  mask-folded child c
                      w_ref,      # VMEM (E, 4H)      bf16  [W_i | W_o | W_u | W_f]
                      u3_ref,     # VMEM (H, 3H)      bf16  [U_i | U_o | U_u]
                      uf_ref,     # VMEM (H, H)       bf16  U_f
                      b_ref,      # VMEM (1, 4H)      f32   bias
                      h_ref,      # VMEM out (BT, H)  f32
                      c_ref):     # VMEM out (BT, H)  f32
    NC, BT, H = ch_h_ref.shape

    # ---- input projection: all 4 gates in one MXU call ---------------------
    gx = jnp.dot(x_ref[...], w_ref[...],
                 preferred_element_type=jnp.float32) + b_ref[...]     # (BT, 4H)
    gx_i = gx[:, 0 * H:1 * H]
    gx_o = gx[:, 1 * H:2 * H]
    gx_u = gx[:, 2 * H:3 * H]
    gx_f = gx[:, 3 * H:4 * H]

    # ---- h_tilde = sum_j h_j (children pre-masked), f32 VPU accumulate -----
    h_tilde = ch_h_ref[0].astype(jnp.float32)
    for j in range(1, NC):                                   # static, NC small
        h_tilde = h_tilde + ch_h_ref[j].astype(jnp.float32)

    # i/o/u hidden term: one (BT, H) @ (H, 3H) matmul (bf16 MXU, f32 acc).
    gh = jnp.dot(h_tilde.astype(jnp.bfloat16), u3_ref[...],
                 preferred_element_type=jnp.float32)                  # (BT, 3H)

    i_g = jax.nn.sigmoid(gx_i + gh[:, 0 * H:1 * H])
    o_g = jax.nn.sigmoid(gx_o + gh[:, 1 * H:2 * H])
    u_g = jnp.tanh(gx_u + gh[:, 2 * H:3 * H])

    # ---- per-child forget gates: single fused (NC*BT, H) @ (H, H) ----------
    # Leading-dim merge is tile-aligned (BT % 8 == 0) -> free relayout.
    ch2d = ch_h_ref[...].reshape(NC * BT, H)                           # bf16
    g_f = jnp.dot(ch2d, uf_ref[...],
                  preferred_element_type=jnp.float32).reshape(NC, BT, H)
    f = jax.nn.sigmoid(gx_f[None, :, :] + g_f)                         # (NC,BT,H)
    # c_j is pre-masked, so phantom children contribute zero.
    fc = jnp.sum(f * ch_c_ref[...].astype(jnp.float32), axis=0)        # (BT, H)

    c = i_g * u_g + fc
    # Two separate lane-dense outputs (H is a multiple of 128 in the demo);
    # no concatenate, no masked vst.
    h_ref[...] = o_g * jnp.tanh(c)
    c_ref[...] = c


@functools.partial(jax.jit, static_argnames=("block_nodes",))
def child_sum_tree_lstm_level(word_ids, child_h, child_c, child_mask, params,
                              *, block_nodes=128):
    """One batched tree level: all same-depth nodes processed in one call.

    word_ids:   (N,)        int32 token ids for the nodes at this level
    child_h:    (NC, N, H)  children hidden states (zero-padded)
    child_c:    (NC, N, H)  children cell states   (zero-padded)
    child_mask: (NC, N, 1)  1.0 where a child exists, else 0.0
    """
    NC, N, H = child_h.shape
    V, E = params["embedding"].shape

    # Embedding gather in XLA: keeps the (V, E) table out of VMEM and streams
    # only the (N, E) rows actually needed.
    emb = params["embedding"].astype(jnp.bfloat16)
    x = jnp.take(emb, word_ids.astype(jnp.int32), axis=0)              # (N, E)

    # Fold the mask into the child states on the host (single fused multiply);
    # padded children must be genuinely zeroed for correctness of h_tilde / fc.
    # Streamed operands go over HBM->VMEM as bf16; accumulation stays f32.
    ch_h = (child_mask * child_h).astype(jnp.bfloat16)                 # (NC,N,H)
    ch_c = (child_mask * child_c).astype(jnp.bfloat16)                 # (NC,N,H)

    W = params["W"].astype(jnp.bfloat16)                               # (E, 4H)
    U3 = params["U"].astype(jnp.bfloat16)                              # (H, 3H)
    Uf = params["Uf"].astype(jnp.bfloat16)                             # (H, H)
    b = params["b"].reshape(1, 4 * H).astype(jnp.float32)

    # Node tile: large (per-step overhead / MXU rows), multiple of 8 sublanes,
    # clamped to the level size.
    BT = max(8, min(_round_up(block_nodes, 8), _round_up(N, 8)))
    Np = _round_up(N, BT)
    pad = Np - N
    if pad:
        x = jnp.pad(x, ((0, pad), (0, 0)))
        ch_h = jnp.pad(ch_h, ((0, 0), (0, pad), (0, 0)))
        ch_c = jnp.pad(ch_c, ((0, 0), (0, pad), (0, 0)))

    num_tiles = Np // BT
    # Only shard across TensorCores (v7x) when there are enough substantial
    # tiles; otherwise the duplicated resident-weight DMA outweighs the split.
    semantics = ("parallel",) if num_tiles >= 4 else ("arbitrary",)

    # Resident (constant index_map) specs for the small weight matrices.
    const = lambda shape: pl.BlockSpec(shape, lambda i: (0,) * len(shape))

    h_out, c_out = pl.pallas_call(
        _tree_lstm_kernel,
        out_shape=(jax.ShapeDtypeStruct((Np, H), jnp.float32),
                   jax.ShapeDtypeStruct((Np, H), jnp.float32)),
        grid_spec=pltpu.PrefetchScalarGridSpec(
            num_scalar_prefetch=0,
            grid=(num_tiles,),
            in_specs=[
                pl.BlockSpec((BT, E), lambda i: (i, 0)),               # x
                pl.BlockSpec((NC, BT, H), lambda i: (0, i, 0)),        # child_h
                pl.BlockSpec((NC, BT, H), lambda i: (0, i, 0)),        # child_c
                const((E, 4 * H)),                                     # W
                const((H, 3 * H)),                                     # U_iou
                const((H, H)),                                         # U_f
                const((1, 4 * H)),                                     # b
            ],
            out_specs=(pl.BlockSpec((BT, H), lambda i: (i, 0)),        # h
                       pl.BlockSpec((BT, H), lambda i: (i, 0))),       # c
        ),
        compiler_params=pltpu.CompilerParams(
            dimension_semantics=semantics,
            vmem_limit_bytes=32 * 1024 * 1024),
    )(x, ch_h, ch_c, W, U3, Uf, b)

    return h_out[:N], c_out[:N]


def _reference(word_ids, child_h, child_c, child_mask, params):
    """Pure-JAX f32 reference for validation."""
    x = jnp.take(params["embedding"], word_ids, axis=0)
    H = child_h.shape[-1]
    gx = x @ params["W"] + params["b"][None, :]
    gx_i, gx_o, gx_u, gx_f = (gx[:, k * H:(k + 1) * H] for k in range(4))
    h_sum = jnp.sum(child_mask * child_h, axis=0)
    gh = h_sum @ params["U"]
    i_g = jax.nn.sigmoid(gx_i + gh[:, 0:H])
    o_g = jax.nn.sigmoid(gx_o + gh[:, H:2 * H])
    u_g = jnp.tanh(gx_u + gh[:, 2 * H:3 * H])
    f = jax.nn.sigmoid(gx_f[None] + child_h @ params["Uf"])   # (NC, N, H)
    c = i_g * u_g + jnp.sum(child_mask * f * child_c, axis=0)
    h = o_g * jnp.tanh(c)
    return h, c


def _init_params(key, vocab_size, embedding_dim, hidden_dim):
    k1, k2, k3, k4, k5 = jax.random.split(key, 5)
    s = 0.1
    return {
        "embedding": s * jax.random.normal(k1, (vocab_size, embedding_dim), jnp.float32),
        "W": s * jax.random.normal(k2, (embedding_dim, 4 * hidden_dim), jnp.float32),
        "U": s * jax.random.normal(k3, (hidden_dim, 3 * hidden_dim), jnp.float32),
        "Uf": s * jax.random.normal(k4, (hidden_dim, hidden_dim), jnp.float32),
        "b": s * jax.random.normal(k5, (4 * hidden_dim,), jnp.float32),
    }


if __name__ == "__main__":
    # Small but lane-dense demo: H a multiple of 128 so both outputs and all
    # matmul lane dims are unmasked; one level of 200 same-depth tree nodes.
    VOCAB, E, H = 64, 128, 128
    N, NC = 200, 4        # nodes at this level, max children per node
    BT = 128              # node tile per grid step (clamped in the wrapper)

    root = jax.random.PRNGKey(0)
    kp, kw, kh, kc, km = jax.random.split(root, 5)

    params = _init_params(kp, VOCAB, E, H)

    word_ids = jax.random.randint(kw, (N,), 0, VOCAB, dtype=jnp.int32)
    child_h = 0.25 * jax.random.normal(kh, (NC, N, H), jnp.float32)
    child_c = 0.25 * jax.random.normal(kc, (NC, N, H), jnp.float32)
    child_mask = (jax.random.uniform(km, (NC, N, 1)) > 0.3).astype(jnp.float32)

    h_out, c_out = child_sum_tree_lstm_level(word_ids, child_h, child_c,
                                             child_mask, params,
                                             block_nodes=BT)
    jax.block_until_ready((h_out, c_out))

    h_ref, c_ref = _reference(word_ids, child_h, child_c, child_mask, params)
    # bf16 MXU operands + bf16-streamed child states -> loosened tolerance.
    err_h = float(jnp.max(jnp.abs(h_out - h_ref)))
    err_c = float(jnp.max(jnp.abs(c_out - c_ref)))
    assert err_h < 5e-2, ("h mismatch", err_h)
    assert err_c < 5e-2, ("c mismatch", err_c)

    print("KERNEL_OK")
</pallas_src>

<mosaic_0001>
module attributes {stable_mosaic.version = 11 : i64} {
  func.func @_tree_lstm_kernel(%arg0: i32, %arg1: memref<128x128xbf16, #tpu.memory_space<vmem>>, %arg2: memref<4x128x128xbf16, #tpu.memory_space<vmem>>, %arg3: memref<4x128x128xbf16, #tpu.memory_space<vmem>>, %arg4: memref<128x512xbf16, #tpu.memory_space<vmem>>, %arg5: memref<128x384xbf16, #tpu.memory_space<vmem>>, %arg6: memref<128x128xbf16, #tpu.memory_space<vmem>>, %arg7: memref<1x512xf32, #tpu.memory_space<vmem>>, %arg8: memref<128x128xf32, #tpu.memory_space<vmem>>, %arg9: memref<128x128xf32, #tpu.memory_space<vmem>>) attributes {dimension_semantics = [#tpu.dimension_semantics<arbitrary>], iteration_bounds = array<i64: 2>, scalar_prefetch = 0 : i64, scratch_operands = 0 : i64, tpu.core_type = #tpu.core_type<tc>, window_params = [{transform_indices = @transform_0, window_bounds = array<i64: 128, 128>}, {transform_indices = @transform_1, window_bounds = array<i64: 4, 128, 128>}, {transform_indices = @transform_2, window_bounds = array<i64: 4, 128, 128>}, {pipeline_mode = #tpu.pipeline_mode<synchronous>, transform_indices = @transform_3, window_bounds = array<i64: 128, 512>}, {pipeline_mode = #tpu.pipeline_mode<synchronous>, transform_indices = @transform_4, window_bounds = array<i64: 128, 384>}, {pipeline_mode = #tpu.pipeline_mode<synchronous>, transform_indices = @transform_5, window_bounds = array<i64: 128, 128>}, {pipeline_mode = #tpu.pipeline_mode<synchronous>, transform_indices = @transform_6, window_bounds = array<i64: 1, 512>}, {transform_indices = @transform_7, window_bounds = array<i64: 128, 128>}, {transform_indices = @transform_8, window_bounds = array<i64: 128, 128>}]} {
    %c0 = arith.constant 0 : index
    %c0_0 = arith.constant 0 : index
    %0 = vector.load %arg1[%c0, %c0_0] : memref<128x128xbf16, #tpu.memory_space<vmem>>, vector<128x128xbf16>
    %c0_1 = arith.constant 0 : index
    %c0_2 = arith.constant 0 : index
    %1 = vector.load %arg4[%c0_1, %c0_2] : memref<128x512xbf16, #tpu.memory_space<vmem>>, vector<128x512xbf16>
    %cst = arith.constant dense<0.000000e+00> : vector<128x512xf32>
    %2 = tpu.matmul %0, %1, %cst {dimension_numbers = #tpu.dot_dimension_numbers<[1], [0], [0], [1], [0, 0, 1, 1], [], []>} : vector<128x128xbf16>, vector<128x512xbf16>, vector<128x512xf32> -> vector<128x512xf32>
    %c0_3 = arith.constant 0 : index
    %c0_4 = arith.constant 0 : index
    %3 = vector.load %arg7[%c0_3, %c0_4] : memref<1x512xf32, #tpu.memory_space<vmem>>, vector<1x512xf32>
    %4 = vector.broadcast %3 : vector<1x512xf32> to vector<128x512xf32>
    %5 = arith.addf %2, %4 : vector<128x512xf32>
    %6 = vector.extract_strided_slice %5 {offsets = [0, 0], sizes = [128, 128], strides = [1, 1]} : vector<128x512xf32> to vector<128x128xf32>
    %7 = vector.extract_strided_slice %5 {offsets = [0, 128], sizes = [128, 128], strides = [1, 1]} : vector<128x512xf32> to vector<128x128xf32>
    %8 = vector.extract_strided_slice %5 {offsets = [0, 256], sizes = [128, 128], strides = [1, 1]} : vector<128x512xf32> to vector<128x128xf32>
    %9 = vector.extract_strided_slice %5 {offsets = [0, 384], sizes = [128, 128], strides = [1, 1]} : vector<128x512xf32> to vector<128x128xf32>
    %c0_5 = arith.constant 0 : index
    %c0_6 = arith.constant 0 : index
    %c0_7 = arith.constant 0 : index
    %10 = vector.load %arg2[%c0_5, %c0_6, %c0_7] : memref<4x128x128xbf16, #tpu.memory_space<vmem>>, vector<1x128x128xbf16>
    %11 = vector.shape_cast %10 : vector<1x128x128xbf16> to vector<128x128xbf16>
    %12 = arith.extf %11 : vector<128x128xbf16> to vector<128x128xf32>
    %c1 = arith.constant 1 : index
    %c0_8 = arith.constant 0 : index
    %c0_9 = arith.constant 0 : index
    %13 = vector.load %arg2[%c1, %c0_8, %c0_9] : memref<4x128x128xbf16, #tpu.memory_space<vmem>>, vector<1x128x128xbf16>
    %14 = vector.shape_cast %13 : vector<1x128x128xbf16> to vector<128x128xbf16>
    %15 = arith.extf %14 : vector<128x128xbf16> to vector<128x128xf32>
    %16 = arith.addf %12, %15 : vector<128x128xf32>
    %c2 = arith.constant 2 : index
    %c0_10 = arith.constant 0 : index
    %c0_11 = arith.constant 0 : index
    %17 = vector.load %arg2[%c2, %c0_10, %c0_11] : memref<4x128x128xbf16, #tpu.memory_space<vmem>>, vector<1x128x128xbf16>
    %18 = vector.shape_cast %17 : vector<1x128x128xbf16> to vector<128x128xbf16>
    %19 = arith.extf %18 : vector<128x128xbf16> to vector<128x128xf32>
    %20 = arith.addf %16, %19 : vector<128x128xf32>
    %c3 = arith.constant 3 : index
    %c0_12 = arith.constant 0 : index
    %c0_13 = arith.constant 0 : index
    %21 = vector.load %arg2[%c3, %c0_12, %c0_13] : memref<4x128x128xbf16, #tpu.memory_space<vmem>>, vector<1x128x128xbf16>
    %22 = vector.shape_cast %21 : vector<1x128x128xbf16> to vector<128x128xbf16>
    %23 = arith.extf %22 : vector<128x128xbf16> to vector<128x128xf32>
    %24 = arith.addf %20, %23 : vector<128x128xf32>
    %25 = arith.truncf %24 : vector<128x128xf32> to vector<128x128xbf16>
    %c0_14 = arith.constant 0 : index
    %c0_15 = arith.constant 0 : index
    %26 = vector.load %arg5[%c0_14, %c0_15] : memref<128x384xbf16, #tpu.memory_space<vmem>>, vector<128x384xbf16>
    %cst_16 = arith.constant dense<0.000000e+00> : vector<128x384xf32>
    %27 = tpu.matmul %25, %26, %cst_16 {dimension_numbers = #tpu.dot_dimension_numbers<[1], [0], [0], [1], [0, 0, 1, 1], [], []>} : vector<128x128xbf16>, vector<128x384xbf16>, vector<128x384xf32> -> vector<128x384xf32>
    %28 = vector.extract_strided_slice %27 {offsets = [0, 0], sizes = [128, 128], strides = [1, 1]} : vector<128x384xf32> to vector<128x128xf32>
    %29 = arith.addf %6, %28 : vector<128x128xf32>
    %30 = arith.negf %29 : vector<128x128xf32>
    %31 = math.exp %30 : vector<128x128xf32>
    %cst_17 = arith.constant 1.000000e+00 : f32
    %32 = vector.broadcast %cst_17 : f32 to vector<128x128xf32>
    %33 = arith.addf %32, %31 : vector<128x128xf32>
    %34 = arith.divf %32, %33 : vector<128x128xf32>
    %35 = vector.extract_strided_slice %27 {offsets = [0, 128], sizes = [128, 128], strides = [1, 1]} : vector<128x384xf32> to vector<128x128xf32>
    %36 = arith.addf %7, %35 : vector<128x128xf32>
    %37 = arith.negf %36 : vector<128x128xf32>
    %38 = math.exp %37 : vector<128x128xf32>
    %cst_18 = arith.constant 1.000000e+00 : f32
    %39 = vector.broadcast %cst_18 : f32 to vector<128x128xf32>
    %40 = arith.addf %39, %38 : vector<128x128xf32>
    %41 = arith.divf %39, %40 : vector<128x128xf32>
    %42 = vector.extract_strided_slice %27 {offsets = [0, 256], sizes = [128, 128], strides = [1, 1]} : vector<128x384xf32> to vector<128x128xf32>
    %43 = arith.addf %8, %42 : vector<128x128xf32>
    %44 = math.tanh %43 : vector<128x128xf32>
    %c0_19 = arith.constant 0 : index
    %c0_20 = arith.constant 0 : index
    %c0_21 = arith.constant 0 : index
    %45 = vector.load %arg2[%c0_19, %c0_20, %c0_21] : memref<4x128x128xbf16, #tpu.memory_space<vmem>>, vector<4x128x128xbf16>
    %46 = vector.shape_cast %45 : vector<4x128x128xbf16> to vector<512x128xbf16>
    %c0_22 = arith.constant 0 : index
    %c0_23 = arith.constant 0 : index
    %47 = vector.load %arg6[%c0_22, %c0_23] : memref<128x128xbf16, #tpu.memory_space<vmem>>, vector<128x128xbf16>
    %cst_24 = arith.constant dense<0.000000e+00> : vector<512x128xf32>
    %48 = tpu.matmul %46, %47, %cst_24 {dimension_numbers = #tpu.dot_dimension_numbers<[1], [0], [0], [1], [0, 0, 1, 1], [], []>} : vector<512x128xbf16>, vector<128x128xbf16>, vector<512x128xf32> -> vector<512x128xf32>
    %49 = vector.shape_cast %48 : vector<512x128xf32> to vector<4x128x128xf32>
    %50 = vector.shape_cast %9 : vector<128x128xf32> to vector<1x128x128xf32>
    %51 = vector.broadcast %50 : vector<1x128x128xf32> to vector<4x128x128xf32>
    %52 = arith.addf %51, %49 : vector<4x128x128xf32>
    %53 = arith.negf %52 : vector<4x128x128xf32>
    %54 = math.exp %53 : vector<4x128x128xf32>
    %cst_25 = arith.constant 1.000000e+00 : f32
    %55 = vector.broadcast %cst_25 : f32 to vector<4x128x128xf32>
    %56 = arith.addf %55, %54 : vector<4x128x128xf32>
    %57 = arith.divf %55, %56 : vector<4x128x128xf32>
    %c0_26 = arith.constant 0 : index
    %c0_27 = arith.constant 0 : index
    %c0_28 = arith.constant 0 : index
    %58 = vector.load %arg3[%c0_26, %c0_27, %c0_28] : memref<4x128x128xbf16, #tpu.memory_space<vmem>>, vector<4x128x128xbf16>
    %59 = arith.extf %58 : vector<4x128x128xbf16> to vector<4x128x128xf32>
    %60 = arith.mulf %57, %59 : vector<4x128x128xf32>
    %cst_29 = arith.constant dense<0.000000e+00> : vector<128x128xf32>
    %61 = vector.multi_reduction <add>, %60, %cst_29 [0] : vector<4x128x128xf32> to vector<128x128xf32>
    %62 = arith.mulf %34, %44 : vector<128x128xf32>
    %63 = arith.addf %62, %61 : vector<128x128xf32>
    %64 = math.tanh %63 : vector<128x128xf32>
    %65 = arith.mulf %41, %64 : vector<128x128xf32>
    %c0_30 = arith.constant 0 : index
    %c0_31 = arith.constant 0 : index
    %66 = vector.load %arg8[%c0_30, %c0_31] : memref<128x128xf32, #tpu.memory_space<vmem>>, vector<128x128xf32>
    tpu.vector_store %arg8[%c0_30, %c0_31], %65 {strides = array<i32>} : memref<128x128xf32, #tpu.memory_space<vmem>>, vector<128x128xf32>,
    %c0_32 = arith.constant 0 : index
    %c0_33 = arith.constant 0 : index
    %67 = vector.load %arg9[%c0_32, %c0_33] : memref<128x128xf32, #tpu.memory_space<vmem>>, vector<128x128xf32>
    tpu.vector_store %arg9[%c0_32, %c0_33], %63 {strides = array<i32>} : memref<128x128xf32, #tpu.memory_space<vmem>>, vector<128x128xf32>,
    return
  }
  func.func @transform_0(%arg0: i32) -> (i32, i32) {
    %c0_i32 = arith.constant 0 : i32
    %c0_i32_0 = arith.constant 0 : i32
    return %arg0, %c0_i32 : i32, i32
  }
  func.func @transform_1(%arg0: i32) -> (i32, i32, i32) {
    %c0_i32 = arith.constant 0 : i32
    %c0_i32_0 = arith.constant 0 : i32
    %c0_i32_1 = arith.constant 0 : i32
    return %c0_i32, %arg0, %c0_i32_0 : i32, i32, i32
  }
  func.func @transform_2(%arg0: i32) -> (i32, i32, i32) {
    %c0_i32 = arith.constant 0 : i32
    %c0_i32_0 = arith.constant 0 : i32
    %c0_i32_1 = arith.constant 0 : i32
    return %c0_i32, %arg0, %c0_i32_0 : i32, i32, i32
  }
  func.func @transform_3(%arg0: i32) -> (i32, i32) {
    %c0_i32 = arith.constant 0 : i32
    %c0_i32_0 = arith.constant 0 : i32
    %c0_i32_1 = arith.constant 0 : i32
    return %c0_i32, %c0_i32_0 : i32, i32
  }
  func.func @transform_4(%arg0: i32) -> (i32, i32) {
    %c0_i32 = arith.constant 0 : i32
    %c0_i32_0 = arith.constant 0 : i32
    %c0_i32_1 = arith.constant 0 : i32
    return %c0_i32, %c0_i32_0 : i32, i32
  }
  func.func @transform_5(%arg0: i32) -> (i32, i32) {
    %c0_i32 = arith.constant 0 : i32
    %c0_i32_0 = arith.constant 0 : i32
    %c0_i32_1 = arith.constant 0 : i32
    return %c0_i32, %c0_i32_0 : i32, i32
  }
  func.func @transform_6(%arg0: i32) -> (i32, i32) {
    %c0_i32 = arith.constant 0 : i32
    %c0_i32_0 = arith.constant 0 : i32
    %c0_i32_1 = arith.constant 0 : i32
    return %c0_i32, %c0_i32_0 : i32, i32
  }
  func.func @transform_7(%arg0: i32) -> (i32, i32) {
    %c0_i32 = arith.constant 0 : i32
    %c0_i32_0 = arith.constant 0 : i32
    return %arg0, %c0_i32 : i32, i32
  }
  func.func @transform_8(%arg0: i32) -> (i32, i32) {
    %c0_i32 = arith.constant 0 : i32
    %c0_i32_0 = arith.constant 0 : i32
    return %arg0, %c0_i32 : i32, i32
  }
}

</mosaic_0001>

<llo_original>
// kernel: child_sum_tree_lstm_level.1
$region0: #{child_sum_tree_lstm_level.1}
  #allocation0 [shape = 'u32[]', space=smem, size = 0x4, offset = 0x4, fixed_abs, tag = 'smem constant byte address 0x4 - core index']
  #allocation1 [shape = 'u32[144,128]{1,0:T(1,128)}', space=vmem, size = 0x12000, scoped, tag = 'internal scratch']
  %s0 = inlined_call_operand.vmem [shape: bf16[256,128], index: 0, kind: input, shape index: {}]
  %s1 = inlined_call_operand.vmem [shape: bf16[4,256,128], index: 1, kind: input, shape index: {}]
  %s2 = inlined_call_operand.vmem [shape: bf16[4,256,128], index: 2, kind: input, shape index: {}]
  %s3 = inlined_call_operand.vmem [shape: bf16[128,512], index: 3, kind: input, shape index: {}]
  %s4 = inlined_call_operand.vmem [shape: bf16[128,384], index: 4, kind: input, shape index: {}]
  %s5 = inlined_call_operand.vmem [shape: bf16[128,128], index: 5, kind: input, shape index: {}]
  %s6 = inlined_call_operand.vmem [shape: f32[1,512], index: 6, kind: input, shape index: {}]
  %s7 = inlined_call_operand.vmem [shape: f32[256,128], index: 7, kind: output, shape index: {0}]
  %s8 = inlined_call_operand.vmem [shape: f32[256,128], index: 8, kind: output, shape index: {1}]
  %9 = xla_tuple %s7, %s8
  %s10 = sld [smem:[#allocation0]]
  $region151: #{child_sum_tree_lstm_level.1} parent=0
    _
  %s12 = ssub.s32 1, %s10
  %s13 = scalar_select 0, %s12, %s10
  $region1: #{child_sum_tree_lstm_level.1} parent=0
    #allocation2 [shape = 'u8[262144]{0}', space=vmem, size = 0x40000, scoped, tag = 'input window, operand 1']
    #allocation3 [shape = 'u8[262144]{0}', space=vmem, size = 0x40000, scoped, tag = 'input window, operand 2']
    loop: start=0, step=1, limit=4
    $region2: #{child_sum_tree_lstm_level.1} parent=1 // loop_pre_header
      _
    $region3: #{child_sum_tree_lstm_level.1} parent=1 // loop_header
      %s15 = sphi 0, %s19
      %p16 = scmp.ge.s32.totalorder %s15, 4
      %s25 = sphi 0, %s27
      %s28 = sphi 0, %s25
      %s29 = sphi 0, %s28
      %s45 = sphi 0, %s29
      %s51 = sphi 0, %s53
      %s54 = sphi 0, %s51
      %s55 = sphi 0, %s54
      %s71 = sphi 0, %s55
      %s77 = sphi 0, %s79
      %s80 = sphi 0, %s77
      %s81 = sphi 0, %s80
      %s97 = sphi 0, %s81
      %s101 = sphi 0, %s101
      %s103 = sphi 0, %s101
      %s104 = sphi 0, %s103
      %s118 = sphi 0, %s104
      %s122 = sphi 0, %s122
      %s124 = sphi 0, %s122
      %s125 = sphi 0, %s124
      %s139 = sphi 0, %s125
      %s143 = sphi 0, %s143
      %s145 = sphi 0, %s143
      %s146 = sphi 0, %s145
      %s160 = sphi 0, %s146
      %s164 = sphi 0, %s164
      %s166 = sphi 0, %s164
      %s167 = sphi 0, %s166
      %s181 = sphi 0, %s167
      %s187 = sphi 0, %s189
      %s190 = sphi 0, %s187
      %s191 = sphi 0, %s190
      %s207 = sphi 0, %s191
      %s213 = sphi 0, %s215
      %s216 = sphi 0, %s213
      %s217 = sphi 0, %s216
      %s233 = sphi 0, %s217
    $region4: #{child_sum_tree_lstm_level.1} parent=1 // loop_header_branch
      %18 = sbr.rel (%p16) target = $region8
    $region5: #{child_sum_tree_lstm_level.1} parent=1 // loop_body
      %s20 = ssub.s32 %s15, 1
      %s21 = ssub.s32 %s15, 2
      %s22 = sadd.s32 %s15, 1
      %s23 = ssub.s32 %s15, %s22
      %p24 = scmp.eq.s32.totalorder %s23, 0
      %s26 = sadd.s32 %s25, 1
      %s27 = scalar_select %p24, %s25, %s26
      %p30 = pneg %p24
      %p31 = scmp.eq.s32.totalorder %s15, 1
      %p32 = por %p30, %p31
      %p33 = scmp.ne.s32.totalorder %s25, %s28
      %p34 = scmp.eq.s32.totalorder %s15, 0
      %p35 = por %p33, %p34
      %p36 = scmp.ne.s32.totalorder %s25, %s28
      %p37 = scmp.eq.s32.totalorder %s20, 1
      %p38 = por %p36, %p37
      %p39 = scmp.ne.s32.totalorder %s28, %s29
      %p40 = scmp.eq.s32.totalorder %s20, 0
      %p41 = por %p39, %p40
      %p42 = scmp.ne.s32.totalorder %s28, %s29
      %p43 = scmp.eq.s32.totalorder %s21, 1
      %p44 = por %p42, %p43
      %p46 = scmp.ne.s32.totalorder %s29, %s45
      %p47 = scmp.eq.s32.totalorder %s21, 0
      %p48 = por %p46, %p47
      %s49 = ssub.s32 %s15, %s22
      %p50 = scmp.eq.s32.totalorder %s49, 0
      %s52 = sadd.s32 %s51, 1
      %s53 = scalar_select %p50, %s51, %s52
      %p56 = pneg %p50
      %p57 = scmp.eq.s32.totalorder %s15, 1
      %p58 = por %p56, %p57
      %p59 = scmp.ne.s32.totalorder %s51, %s54
      %p60 = scmp.eq.s32.totalorder %s15, 0
      %p61 = por %p59, %p60
      %p62 = scmp.ne.s32.totalorder %s51, %s54
      %p63 = scmp.eq.s32.totalorder %s20, 1
      %p64 = por %p62, %p63
      %p65 = scmp.ne.s32.totalorder %s54, %s55
      %p66 = scmp.eq.s32.totalorder %s20, 0
      %p67 = por %p65, %p66
      %p68 = scmp.ne.s32.totalorder %s54, %s55
      %p69 = scmp.eq.s32.totalorder %s21, 1
      %p70 = por %p68, %p69
      %p72 = scmp.ne.s32.totalorder %s55, %s71
      %p73 = scmp.eq.s32.totalorder %s21, 0
      %p74 = por %p72, %p73
      %s75 = ssub.s32 %s15, %s22
      %p76 = scmp.eq.s32.totalorder %s75, 0
      %s78 = sadd.s32 %s77, 1
      %s79 = scalar_select %p76, %s77, %s78
      %p82 = pneg %p76
      %p83 = scmp.eq.s32.totalorder %s15, 1
      %p84 = por %p82, %p83
      %p85 = scmp.ne.s32.totalorder %s77, %s80
      %p86 = scmp.eq.s32.totalorder %s15, 0
      %p87 = por %p85, %p86
      %p88 = scmp.ne.s32.totalorder %s77, %s80
      %p89 = scmp.eq.s32.totalorder %s20, 1
      %p90 = por %p88, %p89
      %p91 = scmp.ne.s32.totalorder %s80, %s81
      %p92 = scmp.eq.s32.totalorder %s20, 0
      %p93 = por %p91, %p92
      %p94 = scmp.ne.s32.totalorder %s80, %s81
      %p95 = scmp.eq.s32.totalorder %s21, 1
      %p96 = por %p94, %p95
      %p98 = scmp.ne.s32.totalorder %s81, %s97
      %p99 = scmp.eq.s32.totalorder %s21, 0
      %p100 = por %p98, %p99
      %s102 = sadd.s32 %s101, 1
      %p105 = scmp.eq.s32.totalorder %s15, 1
      %p106 = scmp.ne.s32.totalorder %s101, %s103
      %p107 = scmp.eq.s32.totalorder %s15, 0
      %p108 = por %p106, %p107
      %p109 = scmp.ne.s32.totalorder %s101, %s103
      %p110 = scmp.eq.s32.totalorder %s20, 1
      %p111 = por %p109, %p110
      %p112 = scmp.ne.s32.totalorder %s103, %s104
      %p113 = scmp.eq.s32.totalorder %s20, 0
      %p114 = por %p112, %p113
      %p115 = scmp.ne.s32.totalorder %s103, %s104
      %p116 = scmp.eq.s32.totalorder %s21, 1
      %p117 = por %p115, %p116
      %p119 = scmp.ne.s32.totalorder %s104, %s118
      %p120 = scmp.eq.s32.totalorder %s21, 0
      %p121 = por %p119, %p120
      %s123 = sadd.s32 %s122, 1
      %p126 = scmp.eq.s32.totalorder %s15, 1
      %p127 = scmp.ne.s32.totalorder %s122, %s124
      %p128 = scmp.eq.s32.totalorder %s15, 0
      %p129 = por %p127, %p128
      %p130 = scmp.ne.s32.totalorder %s122, %s124
      %p131 = scmp.eq.s32.totalorder %s20, 1
      %p132 = por %p130, %p131
      %p133 = scmp.ne.s32.totalorder %s124, %s125
      %p134 = scmp.eq.s32.totalorder %s20, 0
      %p135 = por %p133, %p134
      %p136 = scmp.ne.s32.totalorder %s124, %s125
      %p137 = scmp.eq.s32.totalorder %s21, 1
      %p138 = por %p136, %p137
      %p140 = scmp.ne.s32.totalorder %s125, %s139
      %p141 = scmp.eq.s32.totalorder %s21, 0
      %p142 = por %p140, %p141
      %s144 = sadd.s32 %s143, 1
      %p147 = scmp.eq.s32.totalorder %s15, 1
      %p148 = scmp.ne.s32.totalorder %s143, %s145
      %p149 = scmp.eq.s32.totalorder %s15, 0
      %p150 = por %p148, %p149
      %p151 = scmp.ne.s32.totalorder %s143, %s145
      %p152 = scmp.eq.s32.totalorder %s20, 1
      %p153 = por %p151, %p152
      %p154 = scmp.ne.s32.totalorder %s145, %s146
      %p155 = scmp.eq.s32.totalorder %s20, 0
      %p156 = por %p154, %p155
      %p157 = scmp.ne.s32.totalorder %s145, %s146
      %p158 = scmp.eq.s32.totalorder %s21, 1
      %p159 = por %p157, %p158
      %p161 = scmp.ne.s32.totalorder %s146, %s160
      %p162 = scmp.eq.s32.totalorder %s21, 0
      %p163 = por %p161, %p162
      %s165 = sadd.s32 %s164, 1
      %p168 = scmp.eq.s32.totalorder %s15, 1
      %p169 = scmp.ne.s32.totalorder %s164, %s166
      %p170 = scmp.eq.s32.totalorder %s15, 0
      %p171 = por %p169, %p170
      %p172 = scmp.ne.s32.totalorder %s164, %s166
      %p173 = scmp.eq.s32.totalorder %s20, 1
      %p174 = por %p172, %p173
      %p175 = scmp.ne.s32.totalorder %s166, %s167
      %p176 = scmp.eq.s32.totalorder %s20, 0
      %p177 = por %p175, %p176
      %p178 = scmp.ne.s32.totalorder %s166, %s167
      %p179 = scmp.eq.s32.totalorder %s21, 1
      %p180 = por %p178, %p179
      %p182 = scmp.ne.s32.totalorder %s167, %s181
      %p183 = scmp.eq.s32.totalorder %s21, 0
      %p184 = por %p182, %p183
      %s185 = ssub.s32 %s15, %s22
      %p186 = scmp.eq.s32.totalorder %s185, 0
      %s188 = sadd.s32 %s187, 1
      %s189 = scalar_select %p186, %s187, %s188
      %p192 = pneg %p186
      %p193 = scmp.eq.s32.totalorder %s15, 1
      %p194 = por %p192, %p193
      %p195 = scmp.ne.s32.totalorder %s187, %s190
      %p196 = scmp.eq.s32.totalorder %s15, 0
      %p197 = por %p195, %p196
      %p198 = scmp.ne.s32.totalorder %s187, %s190
      %p199 = scmp.eq.s32.totalorder %s20, 1
      %p200 = por %p198, %p199
      %p201 = scmp.ne.s32.totalorder %s190, %s191
      %p202 = scmp.eq.s32.totalorder %s20, 0
      %p203 = por %p201, %p202
      %p204 = scmp.ne.s32.totalorder %s190, %s191
      %p205 = scmp.eq.s32.totalorder %s21, 1
      %p206 = por %p204, %p205
      %p208 = scmp.ne.s32.totalorder %s191, %s207
      %p209 = scmp.eq.s32.totalorder %s21, 0
      %p210 = por %p208, %p209
      %s211 = ssub.s32 %s15, %s22
      %p212 = scmp.eq.s32.totalorder %s211, 0
      %s214 = sadd.s32 %s213, 1
      %s215 = scalar_select %p212, %s213, %s214
      %p218 = pneg %p212
      %p219 = scmp.eq.s32.totalorder %s15, 1
      %p220 = por %p218, %p219
      %p221 = scmp.ne.s32.totalorder %s213, %s216
      %p222 = scmp.eq.s32.totalorder %s15, 0
      %p223 = por %p221, %p222
      %p224 = scmp.ne.s32.totalorder %s213, %s216
      %p225 = scmp.eq.s32.totalorder %s20, 1
      %p226 = por %p224, %p225
      %p227 = scmp.ne.s32.totalorder %s216, %s217
      %p228 = scmp.eq.s32.totalorder %s20, 0
      %p229 = por %p227, %p228
      %p230 = scmp.ne.s32.totalorder %s216, %s217
      %p231 = scmp.eq.s32.totalorder %s21, 1
      %p232 = por %p230, %p231
      %p234 = scmp.ne.s32.totalorder %s217, %s233
      %p235 = scmp.eq.s32.totalorder %s21, 0
      %p236 = por %p234, %p235
      %p237 = scmp.le.s32.totalorder 1, %s15
      %p238 = scmp.lt.s32.totalorder %s15, 3
      %p239 = pnand %p237, %p238
      %p240 = pneg %p239
      // Predicated region
      $region9: #{child_sum_tree_lstm_level.1} parent=5 // pred_check
        _
      $region10: #{child_sum_tree_lstm_level.1} parent=5 // pred_check_branch
        %242 = sbr.rel (%p239) target = $region12
      $region11: #{child_sum_tree_lstm_level.1} parent=5 // pred_region
        %s243 = ssub.s32 %s15, 1
        // Predicated region
        $region13: #{child_sum_tree_lstm_level.1} parent=11 // pred_check
          %p244 = pneg %p114
        $region14: #{child_sum_tree_lstm_level.1} parent=11 // pred_check_branch
          %246 = sbr.rel (%p244) target = $region16
        $region15: #{child_sum_tree_lstm_level.1} parent=11 // pred_region
          _
        $region16: #{child_sum_tree_lstm_level.1} parent=11 // pred_fallthru
          _
        // Predicated region
        $region17: #{child_sum_tree_lstm_level.1} parent=11 // pred_check
          %p247 = pneg %p135
        $region18: #{child_sum_tree_lstm_level.1} parent=11 // pred_check_branch
          %249 = sbr.rel (%p247) target = $region20
        $region19: #{child_sum_tree_lstm_level.1} parent=11 // pred_region
          _
        $region20: #{child_sum_tree_lstm_level.1} parent=11 // pred_fallthru
          _
        // Predicated region
        $region21: #{child_sum_tree_lstm_level.1} parent=11 // pred_check
          %p250 = pneg %p156
        $region22: #{child_sum_tree_lstm_level.1} parent=11 // pred_check_branch
          %252 = sbr.rel (%p250) target = $region24
        $region23: #{child_sum_tree_lstm_level.1} parent=11 // pred_region
          _
        $region24: #{child_sum_tree_lstm_level.1} parent=11 // pred_fallthru
          _
        // Predicated region
        $region25: #{child_sum_tree_lstm_level.1} parent=11 // pred_check
          %p253 = pneg %p177
        $region26: #{child_sum_tree_lstm_level.1} parent=11 // pred_check_branch
          %255 = sbr.rel (%p253) target = $region28
        $region27: #{child_sum_tree_lstm_level.1} parent=11 // pred_region
          _
        $region28: #{child_sum_tree_lstm_level.1} parent=11 // pred_fallthru
          _
      $region12: #{child_sum_tree_lstm_level.1} parent=5 // pred_fallthru
        _
      %p256 = scmp.lt.s32.totalorder %s15, 2
      // Predicated region
      $region29: #{child_sum_tree_lstm_level.1} parent=5 // pred_check
        %p257 = pneg %p256
      $region30: #{child_sum_tree_lstm_level.1} parent=5 // pred_check_branch
        %259 = sbr.rel (%p257) target = $region32
      $region31: #{child_sum_tree_lstm_level.1} parent=5 // pred_region
        // Predicated region
        $region33: #{child_sum_tree_lstm_level.1} parent=31 // pred_check
          %p260 = pneg %p35
        $region34: #{child_sum_tree_lstm_level.1} parent=31 // pred_check_branch
          %262 = sbr.rel (%p260) target = $region36
        $region35: #{child_sum_tree_lstm_level.1} parent=31 // pred_region
          %s263 = smul.u32 16, %s15
          %p264 = scmp.lt.s32.totalorder %s263, 31
          %s265 = scalar_select %p264, %s263, 31
          %s266 = smul.addr %s265, 4
          %s267 = scalar_lea.vmem %s0, %s266
          %s268 = smul.u32 16, %s15
        $region36: #{child_sum_tree_lstm_level.1} parent=31 // pred_fallthru
          _
        // Predicated region
        $region37: #{child_sum_tree_lstm_level.1} parent=31 // pred_check
          %p269 = pneg %p61
        $region38: #{child_sum_tree_lstm_level.1} parent=31 // pred_check_branch
          %271 = sbr.rel (%p269) target = $region40
        $region39: #{child_sum_tree_lstm_level.1} parent=31 // pred_region
          %s272 = sand.u32 %s51, 1
          %s273 = sand.u32 %s51, 1
          %s274 = smul.addr %s273, 256
          %s275 = scalar_lea.vmem [#allocation2], %s274
          %s276 = smul.u32 16, %s15
          %s277 = smul.addr %s276, 4
          %s278 = scalar_lea.vmem %s1, %s277
          // Predicated region
          $region41: #{child_sum_tree_lstm_level.1} parent=39 // pred_check
            _
          $region42: #{child_sum_tree_lstm_level.1} parent=39 // pred_check_branch
            %280 = sbr.rel (0) target = $region44
          $region43: #{child_sum_tree_lstm_level.1} parent=39 // pred_region
            // Predicated region
            $region45: #{child_sum_tree_lstm_level.1} parent=43 // pred_check
              _
            $region46: #{child_sum_tree_lstm_level.1} parent=43 // pred_check_branch
              %282 = sbr.rel target = $region48
            $region47: #{child_sum_tree_lstm_level.1} parent=43 // pred_region
              // Predicated region
              $region60: #{child_sum_tree_lstm_level.1} parent=47 // pred_check
                _
              $region61: #{child_sum_tree_lstm_level.1} parent=47 // pred_check_branch
                %423 = sbr.rel (0) target = $region63
              $region62: #{child_sum_tree_lstm_level.1} parent=47 // pred_region
                loop: start=0, step=1, limit=1
                $region64: #{child_sum_tree_lstm_level.1} parent=62 // loop_pre_header
                  _
                $region65: #{child_sum_tree_lstm_level.1} parent=62 // loop_header
                  %s425 = sphi 0, %s429
                  %p426 = scmp.ge.s32.totalorder %s425, 1
                  %s430 = sphi %s278, %s278
                  %s431 = sphi %s275, %s275
                $region66: #{child_sum_tree_lstm_level.1} parent=62 // loop_header_branch
                  %428 = sbr.rel (%p426) target = $region70
                $region67: #{child_sum_tree_lstm_level.1} parent=62 // loop_body
                  _
                $region68: #{child_sum_tree_lstm_level.1} parent=62 // loop_footer
                  %s429 = sadd.s32 1, %s425
                $region69: #{child_sum_tree_lstm_level.1} parent=62 // loop_footer_branch
                  %424 = sbr.rel target = $region65
                $region70: #{child_sum_tree_lstm_level.1} parent=62 // loop_exit
                  _
                loop: start=0, step=1, limit=1
                $region71: #{child_sum_tree_lstm_level.1} parent=62 // loop_pre_header
                  _
                $region72: #{child_sum_tree_lstm_level.1} parent=62 // loop_header
                  %s434 = sphi 0, %s438
                  %p435 = scmp.ge.s32.totalorder %s434, 1
                  %s439 = sphi %s278, %s278
                  %s440 = sphi %s275, %s275
                $region73: #{child_sum_tree_lstm_level.1} parent=62 // loop_header_branch
                  %437 = sbr.rel (%p435) target = $region77
                $region74: #{child_sum_tree_lstm_level.1} parent=62 // loop_body
                  %v441 = vld [vmem:[%s439] sm:$0xf]
                  %442 = vst [vmem:[%s440] sm:$0xf] %v441
                  %v443 = vld [vmem:[%s439 + $0x4] sm:$0xf]
                  %444 = vst [vmem:[%s440 + $0x4] sm:$0xf] %v443
                  %v445 = vld [vmem:[%s439 + $0x8] sm:$0xf]
                  %446 = vst [vmem:[%s440 + $0x8] sm:$0xf] %v445
                  %v447 = vld [vmem:[%s439 + $0xc] sm:$0xf]
                  %448 = vst [vmem:[%s440 + $0xc] sm:$0xf] %v447
                  %v449 = vld [vmem:[%s439 + $0x10] sm:$0xf]
                  %450 = vst [vmem:[%s440 + $0x10] sm:$0xf] %v449
                  %v451 = vld [vmem:[%s439 + $0x14] sm:$0xf]
                  %452 = vst [vmem:[%s440 + $0x14] sm:$0xf] %v451
                  %v453 = vld [vmem:[%s439 + $0x18] sm:$0xf]
                  %454 = vst [vmem:[%s440 + $0x18] sm:$0xf] %v453
                  %v455 = vld [vmem:[%s439 + $0x1c] sm:$0xf]
                  %456 = vst [vmem:[%s440 + $0x1c] sm:$0xf] %v455
                  %v457 = vld [vmem:[%s439 + $0x20] sm:$0xf]
                  %458 = vst [vmem:[%s440 + $0x20] sm:$0xf] %v457
                  %v459 = vld [vmem:[%s439 + $0x24] sm:$0xf]
                  %460 = vst [vmem:[%s440 + $0x24] sm:$0xf] %v459
                  %v461 = vld [vmem:[%s439 + $0x28] sm:$0xf]
                  %462 = vst [vmem:[%s440 + $0x28] sm:$0xf] %v461
                  %v463 = vld [vmem:[%s439 + $0x2c] sm:$0xf]
                  %464 = vst [vmem:[%s440 + $0x2c] sm:$0xf] %v463
                  %v465 = vld [vmem:[%s439 + $0x30] sm:$0xf]
                  %466 = vst [vmem:[%s440 + $0x30] sm:$0xf] %v465
                  %v467 = vld [vmem:[%s439 + $0x34] sm:$0xf]
                  %468 = vst [vmem:[%s440 + $0x34] sm:$0xf] %v467
                  %v469 = vld [vmem:[%s439 + $0x38] sm:$0xf]
                  %470 = vst [vmem:[%s440 + $0x38] sm:$0xf] %v469
                  %v471 = vld [vmem:[%s439 + $0x3c] sm:$0xf]
                  %472 = vst [vmem:[%s440 + $0x3c] sm:$0xf] %v471
                  %v473 = vld [vmem:[%s439 + $0x80] sm:$0xf]
                  %474 = vst [vmem:[%s440 + $0x40] sm:$0xf] %v473
                  %v475 = vld [vmem:[%s439 + $0x84] sm:$0xf]
                  %476 = vst [vmem:[%s440 + $0x44] sm:$0xf] %v475
                  %v477 = vld [vmem:[%s439 + $0x88] sm:$0xf]
                  %478 = vst [vmem:[%s440 + $0x48] sm:$0xf] %v477
                  %v479 = vld [vmem:[%s439 + $0x8c] sm:$0xf]
                  %480 = vst [vmem:[%s440 + $0x4c] sm:$0xf] %v479
                  %v481 = vld [vmem:[%s439 + $0x90] sm:$0xf]
                  %482 = vst [vmem:[%s440 + $0x50] sm:$0xf] %v481
                  %v483 = vld [vmem:[%s439 + $0x94] sm:$0xf]
                  %484 = vst [vmem:[%s440 + $0x54] sm:$0xf] %v483
                  %v485 = vld [vmem:[%s439 + $0x98] sm:$0xf]
                  %486 = vst [vmem:[%s440 + $0x58] sm:$0xf] %v485
                  %v487 = vld [vmem:[%s439 + $0x9c] sm:$0xf]
                  %488 = vst [vmem:[%s440 + $0x5c] sm:$0xf] %v487
                  %v489 = vld [vmem:[%s439 + $0xa0] sm:$0xf]
                  %490 = vst [vmem:[%s440 + $0x60] sm:$0xf] %v489
                  %v491 = vld [vmem:[%s439 + $0xa4] sm:$0xf]
                  %492 = vst [vmem:[%s440 + $0x64] sm:$0xf] %v491
                  %v493 = vld [vmem:[%s439 + $0xa8] sm:$0xf]
                  %494 = vst [vmem:[%s440 + $0x68] sm:$0xf] %v493
                  %v495 = vld [vmem:[%s439 + $0xac] sm:$0xf]
                  %496 = vst [vmem:[%s440 + $0x6c] sm:$0xf] %v495
                  %v497 = vld [vmem:[%s439 + $0xb0] sm:$0xf]
                  %498 = vst [vmem:[%s440 + $0x70] sm:$0xf] %v497
                  %v499 = vld [vmem:[%s439 + $0xb4] sm:$0xf]
                  %500 = vst [vmem:[%s440 + $0x74] sm:$0xf] %v499
                  %v501 = vld [vmem:[%s439 + $0xb8] sm:$0xf]
                  %502 = vst [vmem:[%s440 + $0x78] sm:$0xf] %v501
                  %v503 = vld [vmem:[%s439 + $0xbc] sm:$0xf]
                  %504 = vst [vmem:[%s440 + $0x7c] sm:$0xf] %v503
                  %v505 = vld [vmem:[%s439 + $0x100] sm:$0xf]
                  %506 = vst [vmem:[%s440 + $0x80] sm:$0xf] %v505
                  %v507 = vld [vmem:[%s439 + $0x104] sm:$0xf]
                  %508 = vst [vmem:[%s440 + $0x84] sm:$0xf] %v507
                  %v509 = vld [vmem:[%s439 + $0x108] sm:$0xf]
                  %510 = vst [vmem:[%s440 + $0x88] sm:$0xf] %v509
                  %v511 = vld [vmem:[%s439 + $0x10c] sm:$0xf]
                  %512 = vst [vmem:[%s440 + $0x8c] sm:$0xf] %v511
                  %v513 = vld [vmem:[%s439 + $0x110] sm:$0xf]
                  %514 = vst [vmem:[%s440 + $0x90] sm:$0xf] %v513
                  %v515 = vld [vmem:[%s439 + $0x114] sm:$0xf]
                  %516 = vst [vmem:[%s440 + $0x94] sm:$0xf] %v515
                  %v517 = vld [vmem:[%s439 + $0x118] sm:$0xf]
                  %518 = vst [vmem:[%s440 + $0x98] sm:$0xf] %v517
                  %v519 = vld [vmem:[%s439 + $0x11c] sm:$0xf]
                  %520 = vst [vmem:[%s440 + $0x9c] sm:$0xf] %v519
                  %v521 = vld [vmem:[%s439 + $0x120] sm:$0xf]
                  %522 = vst [vmem:[%s440 + $0xa0] sm:$0xf] %v521
                  %v523 = vld [vmem:[%s439 + $0x124] sm:$0xf]
                  %524 = vst [vmem:[%s440 + $0xa4] sm:$0xf] %v523
                  %v525 = vld [vmem:[%s439 + $0x128] sm:$0xf]
                  %526 = vst [vmem:[%s440 + $0xa8] sm:$0xf] %v525
                  %v527 = vld [vmem:[%s439 + $0x12c] sm:$0xf]
                  %528 = vst [vmem:[%s440 + $0xac] sm:$0xf] %v527
                  %v529 = vld [vmem:[%s439 + $0x130] sm:$0xf]
                  %530 = vst [vmem:[%s440 + $0xb0] sm:$0xf] %v529
                  %v531 = vld [vmem:[%s439 + $0x134] sm:$0xf]
                  %532 = vst [vmem:[%s440 + $0xb4] sm:$0xf] %v531
                  %v533 = vld [vmem:[%s439 + $0x138] sm:$0xf]
                  %534 = vst [vmem:[%s440 + $0xb8] sm:$0xf] %v533
                  %v535 = vld [vmem:[%s439 + $0x13c] sm:$0xf]
                  %536 = vst [vmem:[%s440 + $0xbc] sm:$0xf] %v535
                  %v537 = vld [vmem:[%s439 + $0x180] sm:$0xf]
                  %538 = vst [vmem:[%s440 + $0xc0] sm:$0xf] %v537
                  %v539 = vld [vmem:[%s439 + $0x184] sm:$0xf]
                  %540 = vst [vmem:[%s440 + $0xc4] sm:$0xf] %v539
                  %v541 = vld [vmem:[%s439 + $0x188] sm:$0xf]
                  %542 = vst [vmem:[%s440 + $0xc8] sm:$0xf] %v541
                  %v543 = vld [vmem:[%s439 + $0x18c] sm:$0xf]
                  %544 = vst [vmem:[%s440 + $0xcc] sm:$0xf] %v543
                  %v545 = vld [vmem:[%s439 + $0x190] sm:$0xf]
                  %546 = vst [vmem:[%s440 + $0xd0] sm:$0xf] %v545
                  %v547 = vld [vmem:[%s439 + $0x194] sm:$0xf]
                  %548 = vst [vmem:[%s440 + $0xd4] sm:$0xf] %v547
                  %v549 = vld [vmem:[%s439 + $0x198] sm:$0xf]
                  %550 = vst [vmem:[%s440 + $0xd8] sm:$0xf] %v549
                  %v551 = vld [vmem:[%s439 + $0x19c] sm:$0xf]
                  %552 = vst [vmem:[%s440 + $0xdc] sm:$0xf] %v551
                  %v553 = vld [vmem:[%s439 + $0x1a0] sm:$0xf]
                  %554 = vst [vmem:[%s440 + $0xe0] sm:$0xf] %v553
                  %v555 = vld [vmem:[%s439 + $0x1a4] sm:$0xf]
                  %556 = vst [vmem:[%s440 + $0xe4] sm:$0xf] %v555
                  %v557 = vld [vmem:[%s439 + $0x1a8] sm:$0xf]
                  %558 = vst [vmem:[%s440 + $0xe8] sm:$0xf] %v557
                  %v559 = vld [vmem:[%s439 + $0x1ac] sm:$0xf]
                  %560 = vst [vmem:[%s440 + $0xec] sm:$0xf] %v559
                  %v561 = vld [vmem:[%s439 + $0x1b0] sm:$0xf]
                  %562 = vst [vmem:[%s440 + $0xf0] sm:$0xf] %v561
                  %v563 = vld [vmem:[%s439 + $0x1b4] sm:$0xf]
                  %564 = vst [vmem:[%s440 + $0xf4] sm:$0xf] %v563
                  %v565 = vld [vmem:[%s439 + $0x1b8] sm:$0xf]
                  %566 = vst [vmem:[%s440 + $0xf8] sm:$0xf] %v565
                  %v567 = vld [vmem:[%s439 + $0x1bc] sm:$0xf]
                  %568 = vst [vmem:[%s440 + $0xfc] sm:$0xf] %v567
                $region75: #{child_sum_tree_lstm_level.1} parent=62 // loop_footer
                  %s438 = sadd.s32 1, %s434
                $region76: #{child_sum_tree_lstm_level.1} parent=62 // loop_footer_branch
                  %433 = sbr.rel target = $region72
                $region77: #{child_sum_tree_lstm_level.1} parent=62 // loop_exit
                  _
              $region63: #{child_sum_tree_lstm_level.1} parent=47 // pred_fallthru
                _
            $region48: #{child_sum_tree_lstm_level.1} parent=43 // pred_fallthru
              _
            // Predicated region
            $region49: #{child_sum_tree_lstm_level.1} parent=43 // pred_check
              _
            $region50: #{child_sum_tree_lstm_level.1} parent=43 // pred_check_branch
              %284 = sbr.rel (0) target = $region52
            $region51: #{child_sum_tree_lstm_level.1} parent=43 // pred_region
              loop: start=0, step=1, limit=1
              $region53: #{child_sum_tree_lstm_level.1} parent=51 // loop_pre_header
                _
              $region54: #{child_sum_tree_lstm_level.1} parent=51 // loop_header
                %s287 = sphi 0, %s291
                %p288 = scmp.ge.s32.totalorder %s287, 1
                %s292 = sphi %s278, %s278
                %s293 = sphi %s275, %s275
              $region55: #{child_sum_tree_lstm_level.1} parent=51 // loop_header_branch
                %290 = sbr.rel (%p288) target = $region59
              $region56: #{child_sum_tree_lstm_level.1} parent=51 // loop_body
                %v294 = vld [vmem:[%s292] sm:$0xf]
                %295 = vst [vmem:[%s293] sm:$0xf] %v294
                %v296 = vld [vmem:[%s292 + $0x4] sm:$0xf]
                %297 = vst [vmem:[%s293 + $0x4] sm:$0xf] %v296
                %v298 = vld [vmem:[%s292 + $0x8] sm:$0xf]
                %299 = vst [vmem:[%s293 + $0x8] sm:$0xf] %v298
                %v300 = vld [vmem:[%s292 + $0xc] sm:$0xf]
                %301 = vst [vmem:[%s293 + $0xc] sm:$0xf] %v300
                %v302 = vld [vmem:[%s292 + $0x10] sm:$0xf]
                %303 = vst [vmem:[%s293 + $0x10] sm:$0xf] %v302
                %v304 = vld [vmem:[%s292 + $0x14] sm:$0xf]
                %305 = vst [vmem:[%s293 + $0x14] sm:$0xf] %v304
                %v306 = vld [vmem:[%s292 + $0x18] sm:$0xf]
                %307 = vst [vmem:[%s293 + $0x18] sm:$0xf] %v306
                %v308 = vld [vmem:[%s292 + $0x1c] sm:$0xf]
                %309 = vst [vmem:[%s293 + $0x1c] sm:$0xf] %v308
                %v310 = vld [vmem:[%s292 + $0x20] sm:$0xf]
                %311 = vst [vmem:[%s293 + $0x20] sm:$0xf] %v310
                %v312 = vld [vmem:[%s292 + $0x24] sm:$0xf]
                %313 = vst [vmem:[%s293 + $0x24] sm:$0xf] %v312
                %v314 = vld [vmem:[%s292 + $0x28] sm:$0xf]
                %315 = vst [vmem:[%s293 + $0x28] sm:$0xf] %v314
                %v316 = vld [vmem:[%s292 + $0x2c] sm:$0xf]
                %317 = vst [vmem:[%s293 + $0x2c] sm:$0xf] %v316
                %v318 = vld [vmem:[%s292 + $0x30] sm:$0xf]
                %319 = vst [vmem:[%s293 + $0x30] sm:$0xf] %v318
                %v320 = vld [vmem:[%s292 + $0x34] sm:$0xf]
                %321 = vst [vmem:[%s293 + $0x34] sm:$0xf] %v320
                %v322 = vld [vmem:[%s292 + $0x38] sm:$0xf]
                %323 = vst [vmem:[%s293 + $0x38] sm:$0xf] %v322
                %v324 = vld [vmem:[%s292 + $0x3c] sm:$0xf]
                %325 = vst [vmem:[%s293 + $0x3c] sm:$0xf] %v324
                %v326 = vld [vmem:[%s292 + $0x80] sm:$0xf]
                %327 = vst [vmem:[%s293 + $0x40] sm:$0xf] %v326
                %v328 = vld [vmem:[%s292 + $0x84] sm:$0xf]
                %329 = vst [vmem:[%s293 + $0x44] sm:$0xf] %v328
                %v330 = vld [vmem:[%s292 + $0x88] sm:$0xf]
                %331 = vst [vmem:[%s293 + $0x48] sm:$0xf] %v330
                %v332 = vld [vmem:[%s292 + $0x8c] sm:$0xf]
                %333 = vst [vmem:[%s293 + $0x4c] sm:$0xf] %v332
                %v334 = vld [vmem:[%s292 + $0x90] sm:$0xf]
                %335 = vst [vmem:[%s293 + $0x50] sm:$0xf] %v334
                %v336 = vld [vmem:[%s292 + $0x94] sm:$0xf]
                %337 = vst [vmem:[%s293 + $0x54] sm:$0xf] %v336
                %v338 = vld [vmem:[%s292 + $0x98] sm:$0xf]
                %339 = vst [vmem:[%s293 + $0x58] sm:$0xf] %v338
                %v340 = vld [vmem:[%s292 + $0x9c] sm:$0xf]
                %341 = vst [vmem:[%s293 + $0x5c] sm:$0xf] %v340
                %v342 = vld [vmem:[%s292 + $0xa0] sm:$0xf]
                %343 = vst [vmem:[%s293 + $0x60] sm:$0xf] %v342
                %v344 = vld [vmem:[%s292 + $0xa4] sm:$0xf]
                %345 = vst [vmem:[%s293 + $0x64] sm:$0xf] %v344
                %v346 = vld [vmem:[%s292 + $0xa8] sm:$0xf]
                %347 = vst [vmem:[%s293 + $0x68] sm:$0xf] %v346
                %v348 = vld [vmem:[%s292 + $0xac] sm:$0xf]
                %349 = vst [vmem:[%s293 + $0x6c] sm:$0xf] %v348
                %v350 = vld [vmem:[%s292 + $0xb0] sm:$0xf]
                %351 = vst [vmem:[%s293 + $0x70] sm:$0xf] %v350
                %v352 = vld [vmem:[%s292 + $0xb4] sm:$0xf]
                %353 = vst [vmem:[%s293 + $0x74] sm:$0xf] %v352
                %v354 = vld [vmem:[%s292 + $0xb8] sm:$0xf]
                %355 = vst [vmem:[%s293 + $0x78] sm:$0xf] %v354
                %v356 = vld [vmem:[%s292 + $0xbc] sm:$0xf]
                %357 = vst [vmem:[%s293 + $0x7c] sm:$0xf] %v356
                %v358 = vld [vmem:[%s292 + $0x100] sm:$0xf]
                %359 = vst [vmem:[%s293 + $0x80] sm:$0xf] %v358
                %v360 = vld [vmem:[%s292 + $0x104] sm:$0xf]
                %361 = vst [vmem:[%s293 + $0x84] sm:$0xf] %v360
                %v362 = vld [vmem:[%s292 + $0x108] sm:$0xf]
                %363 = vst [vmem:[%s293 + $0x88] sm:$0xf] %v362
                %v364 = vld [vmem:[%s292 + $0x10c] sm:$0xf]
                %365 = vst [vmem:[%s293 + $0x8c] sm:$0xf] %v364
                %v366 = vld [vmem:[%s292 + $0x110] sm:$0xf]
                %367 = vst [vmem:[%s293 + $0x90] sm:$0xf] %v366
                %v368 = vld [vmem:[%s292 + $0x114] sm:$0xf]
                %369 = vst [vmem:[%s293 + $0x94] sm:$0xf] %v368
                %v370 = vld [vmem:[%s292 + $0x118] sm:$0xf]
                %371 = vst [vmem:[%s293 + $0x98] sm:$0xf] %v370
                %v372 = vld [vmem:[%s292 + $0x11c] sm:$0xf]
                %373 = vst [vmem:[%s293 + $0x9c] sm:$0xf] %v372
                %v374 = vld [vmem:[%s292 + $0x120] sm:$0xf]
                %375 = vst [vmem:[%s293 + $0xa0] sm:$0xf] %v374
                %v376 = vld [vmem:[%s292 + $0x124] sm:$0xf]
                %377 = vst [vmem:[%s293 + $0xa4] sm:$0xf] %v376
                %v378 = vld [vmem:[%s292 + $0x128] sm:$0xf]
                %379 = vst [vmem:[%s293 + $0xa8] sm:$0xf] %v378
                %v380 = vld [vmem:[%s292 + $0x12c] sm:$0xf]
                %381 = vst [vmem:[%s293 + $0xac] sm:$0xf] %v380
                %v382 = vld [vmem:[%s292 + $0x130] sm:$0xf]
                %383 = vst [vmem:[%s293 + $0xb0] sm:$0xf] %v382
                %v384 = vld [vmem:[%s292 + $0x134] sm:$0xf]
                %385 = vst [vmem:[%s293 + $0xb4] sm:$0xf] %v384
                %v386 = vld [vmem:[%s292 + $0x138] sm:$0xf]
                %387 = vst [vmem:[%s293 + $0xb8] sm:$0xf] %v386
                %v388 = vld [vmem:[%s292 + $0x13c] sm:$0xf]
                %389 = vst [vmem:[%s293 + $0xbc] sm:$0xf] %v388
                %v390 = vld [vmem:[%s292 + $0x180] sm:$0xf]
                %391 = vst [vmem:[%s293 + $0xc0] sm:$0xf] %v390
                %v392 = vld [vmem:[%s292 + $0x184] sm:$0xf]
                %393 = vst [vmem:[%s293 + $0xc4] sm:$0xf] %v392
                %v394 = vld [vmem:[%s292 + $0x188] sm:$0xf]
                %395 = vst [vmem:[%s293 + $0xc8] sm:$0xf] %v394
                %v396 = vld [vmem:[%s292 + $0x18c] sm:$0xf]
                %397 = vst [vmem:[%s293 + $0xcc] sm:$0xf] %v396
                %v398 = vld [vmem:[%s292 + $0x190] sm:$0xf]
                %399 = vst [vmem:[%s293 + $0xd0] sm:$0xf] %v398
                %v400 = vld [vmem:[%s292 + $0x194] sm:$0xf]
                %401 = vst [vmem:[%s293 + $0xd4] sm:$0xf] %v400
                %v402 = vld [vmem:[%s292 + $0x198] sm:$0xf]
                %403 = vst [vmem:[%s293 + $0xd8] sm:$0xf] %v402
                %v404 = vld [vmem:[%s292 + $0x19c] sm:$0xf]
                %405 = vst [vmem:[%s293 + $0xdc] sm:$0xf] %v404
                %v406 = vld [vmem:[%s292 + $0x1a0] sm:$0xf]
                %407 = vst [vmem:[%s293 + $0xe0] sm:$0xf] %v406
                %v408 = vld [vmem:[%s292 + $0x1a4] sm:$0xf]
                %409 = vst [vmem:[%s293 + $0xe4] sm:$0xf] %v408
                %v410 = vld [vmem:[%s292 + $0x1a8] sm:$0xf]
                %411 = vst [vmem:[%s293 + $0xe8] sm:$0xf] %v410
                %v412 = vld [vmem:[%s292 + $0x1ac] sm:$0xf]
                %413 = vst [vmem:[%s293 + $0xec] sm:$0xf] %v412
                %v414 = vld [vmem:[%s292 + $0x1b0] sm:$0xf]
                %415 = vst [vmem:[%s293 + $0xf0] sm:$0xf] %v414
                %v416 = vld [vmem:[%s292 + $0x1b4] sm:$0xf]
                %417 = vst [vmem:[%s293 + $0xf4] sm:$0xf] %v416
                %v418 = vld [vmem:[%s292 + $0x1b8] sm:$0xf]
                %419 = vst [vmem:[%s293 + $0xf8] sm:$0xf] %v418
                %v420 = vld [vmem:[%s292 + $0x1bc] sm:$0xf]
                %421 = vst [vmem:[%s293 + $0xfc] sm:$0xf] %v420
              $region57: #{child_sum_tree_lstm_level.1} parent=51 // loop_footer
                %s291 = sadd.s32 1, %s287
              $region58: #{child_sum_tree_lstm_level.1} parent=51 // loop_footer_branch
                %286 = sbr.rel target = $region54
              $region59: #{child_sum_tree_lstm_level.1} parent=51 // loop_exit
                _
            $region52: #{child_sum_tree_lstm_level.1} parent=43 // pred_fallthru
              _
          $region44: #{child_sum_tree_lstm_level.1} parent=39 // pred_fallthru
            _
          %569 = vnop
        $region40: #{child_sum_tree_lstm_level.1} parent=31 // pred_fallthru
          _
        // Predicated region
        $region78: #{child_sum_tree_lstm_level.1} parent=31 // pred_check
          %p570 = pneg %p87
        $region79: #{child_sum_tree_lstm_level.1} parent=31 // pred_check_branch
          %572 = sbr.rel (%p570) target = $region81
        $region80: #{child_sum_tree_lstm_level.1} parent=31 // pred_region
          %s573 = sand.u32 %s77, 1
          %s574 = sand.u32 %s77, 1
          %s575 = smul.addr %s574, 256
          %s576 = scalar_lea.vmem [#allocation3], %s575
          %s577 = smul.u32 16, %s15
          %s578 = smul.addr %s577, 4
          %s579 = scalar_lea.vmem %s2, %s578
          // Predicated region
          $region82: #{child_sum_tree_lstm_level.1} parent=80 // pred_check
            _
          $region83: #{child_sum_tree_lstm_level.1} parent=80 // pred_check_branch
            %581 = sbr.rel (0) target = $region85
          $region84: #{child_sum_tree_lstm_level.1} parent=80 // pred_region
            // Predicated region
            $region86: #{child_sum_tree_lstm_level.1} parent=84 // pred_check
              _
            $region87: #{child_sum_tree_lstm_level.1} parent=84 // pred_check_branch
              %583 = sbr.rel target = $region89
            $region88: #{child_sum_tree_lstm_level.1} parent=84 // pred_region
              // Predicated region
              $region101: #{child_sum_tree_lstm_level.1} parent=88 // pred_check
                _
              $region102: #{child_sum_tree_lstm_level.1} parent=88 // pred_check_branch
                %724 = sbr.rel (0) target = $region104
              $region103: #{child_sum_tree_lstm_level.1} parent=88 // pred_region
                loop: start=0, step=1, limit=1
                $region105: #{child_sum_tree_lstm_level.1} parent=103 // loop_pre_header
                  _
                $region106: #{child_sum_tree_lstm_level.1} parent=103 // loop_header
                  %s726 = sphi 0, %s730
                  %p727 = scmp.ge.s32.totalorder %s726, 1
                  %s731 = sphi %s579, %s579
                  %s732 = sphi %s576, %s576
                $region107: #{child_sum_tree_lstm_level.1} parent=103 // loop_header_branch
                  %729 = sbr.rel (%p727) target = $region111
                $region108: #{child_sum_tree_lstm_level.1} parent=103 // loop_body
                  _
                $region109: #{child_sum_tree_lstm_level.1} parent=103 // loop_footer
                  %s730 = sadd.s32 1, %s726
                $region110: #{child_sum_tree_lstm_level.1} parent=103 // loop_footer_branch
                  %725 = sbr.rel target = $region106
                $region111: #{child_sum_tree_lstm_level.1} parent=103 // loop_exit
                  _
                loop: start=0, step=1, limit=1
                $region112: #{child_sum_tree_lstm_level.1} parent=103 // loop_pre_header
                  _
                $region113: #{child_sum_tree_lstm_level.1} parent=103 // loop_header
                  %s735 = sphi 0, %s739
                  %p736 = scmp.ge.s32.totalorder %s735, 1
                  %s740 = sphi %s579, %s579
                  %s741 = sphi %s576, %s576
                $region114: #{child_sum_tree_lstm_level.1} parent=103 // loop_header_branch
                  %738 = sbr.rel (%p736) target = $region118
                $region115: #{child_sum_tree_lstm_level.1} parent=103 // loop_body
                  %v742 = vld [vmem:[%s740] sm:$0xf]
                  %743 = vst [vmem:[%s741] sm:$0xf] %v742
                  %v744 = vld [vmem:[%s740 + $0x4] sm:$0xf]
                  %745 = vst [vmem:[%s741 + $0x4] sm:$0xf] %v744
                  %v746 = vld [vmem:[%s740 + $0x8] sm:$0xf]
                  %747 = vst [vmem:[%s741 + $0x8] sm:$0xf] %v746
                  %v748 = vld [vmem:[%s740 + $0xc] sm:$0xf]
                  %749 = vst [vmem:[%s741 + $0xc] sm:$0xf] %v748
                  %v750 = vld [vmem:[%s740 + $0x10] sm:$0xf]
                  %751 = vst [vmem:[%s741 + $0x10] sm:$0xf] %v750
                  %v752 = vld [vmem:[%s740 + $0x14] sm:$0xf]
                  %753 = vst [vmem:[%s741 + $0x14] sm:$0xf] %v752
                  %v754 = vld [vmem:[%s740 + $0x18] sm:$0xf]
                  %755 = vst [vmem:[%s741 + $0x18] sm:$0xf] %v754
                  %v756 = vld [vmem:[%s740 + $0x1c] sm:$0xf]
                  %757 = vst [vmem:[%s741 + $0x1c] sm:$0xf] %v756
                  %v758 = vld [vmem:[%s740 + $0x20] sm:$0xf]
                  %759 = vst [vmem:[%s741 + $0x20] sm:$0xf] %v758
                  %v760 = vld [vmem:[%s740 + $0x24] sm:$0xf]
                  %761 = vst [vmem:[%s741 + $0x24] sm:$0xf] %v760
                  %v762 = vld [vmem:[%s740 + $0x28] sm:$0xf]
                  %763 = vst [vmem:[%s741 + $0x28] sm:$0xf] %v762
                  %v764 = vld [vmem:[%s740 + $0x2c] sm:$0xf]
                  %765 = vst [vmem:[%s741 + $0x2c] sm:$0xf] %v764
                  %v766 = vld [vmem:[%s740 + $0x30] sm:$0xf]
                  %767 = vst [vmem:[%s741 + $0x30] sm:$0xf] %v766
                  %v768 = vld [vmem:[%s740 + $0x34] sm:$0xf]
                  %769 = vst [vmem:[%s741 + $0x34] sm:$0xf] %v768
                  %v770 = vld [vmem:[%s740 + $0x38] sm:$0xf]
                  %771 = vst [vmem:[%s741 + $0x38] sm:$0xf] %v770
                  %v772 = vld [vmem:[%s740 + $0x3c] sm:$0xf]
                  %773 = vst [vmem:[%s741 + $0x3c] sm:$0xf] %v772
                  %v774 = vld [vmem:[%s740 + $0x80] sm:$0xf]
                  %775 = vst [vmem:[%s741 + $0x40] sm:$0xf] %v774
                  %v776 = vld [vmem:[%s740 + $0x84] sm:$0xf]
                  %777 = vst [vmem:[%s741 + $0x44] sm:$0xf] %v776
                  %v778 = vld [vmem:[%s740 + $0x88] sm:$0xf]
                  %779 = vst [vmem:[%s741 + $0x48] sm:$0xf] %v778
                  %v780 = vld [vmem:[%s740 + $0x8c] sm:$0xf]
                  %781 = vst [vmem:[%s741 + $0x4c] sm:$0xf] %v780
                  %v782 = vld [vmem:[%s740 + $0x90] sm:$0xf]
                  %783 = vst [vmem:[%s741 + $0x50] sm:$0xf] %v782
                  %v784 = vld [vmem:[%s740 + $0x94] sm:$0xf]
                  %785 = vst [vmem:[%s741 + $0x54] sm:$0xf] %v784
                  %v786 = vld [vmem:[%s740 + $0x98] sm:$0xf]
                  %787 = vst [vmem:[%s741 + $0x58] sm:$0xf] %v786
                  %v788 = vld [vmem:[%s740 + $0x9c] sm:$0xf]
                  %789 = vst [vmem:[%s741 + $0x5c] sm:$0xf] %v788
                  %v790 = vld [vmem:[%s740 + $0xa0] sm:$0xf]
                  %791 = vst [vmem:[%s741 + $0x60] sm:$0xf] %v790
                  %v792 = vld [vmem:[%s740 + $0xa4] sm:$0xf]
                  %793 = vst [vmem:[%s741 + $0x64] sm:$0xf] %v792
                  %v794 = vld [vmem:[%s740 + $0xa8] sm:$0xf]
                  %795 = vst [vmem:[%s741 + $0x68] sm:$0xf] %v794
                  %v796 = vld [vmem:[%s740 + $0xac] sm:$0xf]
                  %797 = vst [vmem:[%s741 + $0x6c] sm:$0xf] %v796
                  %v798 = vld [vmem:[%s740 + $0xb0] sm:$0xf]
                  %799 = vst [vmem:[%s741 + $0x70] sm:$0xf] %v798
                  %v800 = vld [vmem:[%s740 + $0xb4] sm:$0xf]
                  %801 = vst [vmem:[%s741 + $0x74] sm:$0xf] %v800
                  %v802 = vld [vmem:[%s740 + $0xb8] sm:$0xf]
                  %803 = vst [vmem:[%s741 + $0x78] sm:$0xf] %v802
                  %v804 = vld [vmem:[%s740 + $0xbc] sm:$0xf]
                  %805 = vst [vmem:[%s741 + $0x7c] sm:$0xf] %v804
                  %v806 = vld [vmem:[%s740 + $0x100] sm:$0xf]
                  %807 = vst [vmem:[%s741 + $0x80] sm:$0xf] %v806
                  %v808 = vld [vmem:[%s740 + $0x104] sm:$0xf]
                  %809 = vst [vmem:[%s741 + $0x84] sm:$0xf] %v808
                  %v810 = vld [vmem:[%s740 + $0x108] sm:$0xf]
                  %811 = vst [vmem:[%s741 + $0x88] sm:$0xf] %v810
                  %v812 = vld [vmem:[%s740 + $0x10c] sm:$0xf]
                  %813 = vst [vmem:[%s741 + $0x8c] sm:$0xf] %v812
                  %v814 = vld [vmem:[%s740 + $0x110] sm:$0xf]
                  %815 = vst [vmem:[%s741 + $0x90] sm:$0xf] %v814
                  %v816 = vld [vmem:[%s740 + $0x114] sm:$0xf]
                  %817 = vst [vmem:[%s741 + $0x94] sm:$0xf] %v816
                  %v818 = vld [vmem:[%s740 + $0x118] sm:$0xf]
                  %819 = vst [vmem:[%s741 + $0x98] sm:$0xf] %v818
                  %v820 = vld [vmem:[%s740 + $0x11c] sm:$0xf]
                  %821 = vst [vmem:[%s741 + $0x9c] sm:$0xf] %v820
                  %v822 = vld [vmem:[%s740 + $0x120] sm:$0xf]
                  %823 = vst [vmem:[%s741 + $0xa0] sm:$0xf] %v822
                  %v824 = vld [vmem:[%s740 + $0x124] sm:$0xf]
                  %825 = vst [vmem:[%s741 + $0xa4] sm:$0xf] %v824
                  %v826 = vld [vmem:[%s740 + $0x128] sm:$0xf]
                  %827 = vst [vmem:[%s741 + $0xa8] sm:$0xf] %v826
                  %v828 = vld [vmem:[%s740 + $0x12c] sm:$0xf]
                  %829 = vst [vmem:[%s741 + $0xac] sm:$0xf] %v828
                  %v830 = vld [vmem:[%s740 + $0x130] sm:$0xf]
                  %831 = vst [vmem:[%s741 + $0xb0] sm:$0xf] %v830
                  %v832 = vld [vmem:[%s740 + $0x134] sm:$0xf]
                  %833 = vst [vmem:[%s741 + $0xb4] sm:$0xf] %v832
                  %v834 = vld [vmem:[%s740 + $0x138] sm:$0xf]
                  %835 = vst [vmem:[%s741 + $0xb8] sm:$0xf] %v834
                  %v836 = vld [vmem:[%s740 + $0x13c] sm:$0xf]
                  %837 = vst [vmem:[%s741 + $0xbc] sm:$0xf] %v836
                  %v838 = vld [vmem:[%s740 + $0x180] sm:$0xf]
                  %839 = vst [vmem:[%s741 + $0xc0] sm:$0xf] %v838
                  %v840 = vld [vmem:[%s740 + $0x184] sm:$0xf]
                  %841 = vst [vmem:[%s741 + $0xc4] sm:$0xf] %v840
                  %v842 = vld [vmem:[%s740 + $0x188] sm:$0xf]
                  %843 = vst [vmem:[%s741 + $0xc8] sm:$0xf] %v842
                  %v844 = vld [vmem:[%s740 + $0x18c] sm:$0xf]
                  %845 = vst [vmem:[%s741 + $0xcc] sm:$0xf] %v844
                  %v846 = vld [vmem:[%s740 + $0x190] sm:$0xf]
                  %847 = vst [vmem:[%s741 + $0xd0] sm:$0xf] %v846
                  %v848 = vld [vmem:[%s740 + $0x194] sm:$0xf]
                  %849 = vst [vmem:[%s741 + $0xd4] sm:$0xf] %v848
                  %v850 = vld [vmem:[%s740 + $0x198] sm:$0xf]
                  %851 = vst [vmem:[%s741 + $0xd8] sm:$0xf] %v850
                  %v852 = vld [vmem:[%s740 + $0x19c] sm:$0xf]
                  %853 = vst [vmem:[%s741 + $0xdc] sm:$0xf] %v852
                  %v854 = vld [vmem:[%s740 + $0x1a0] sm:$0xf]
                  %855 = vst [vmem:[%s741 + $0xe0] sm:$0xf] %v854
                  %v856 = vld [vmem:[%s740 + $0x1a4] sm:$0xf]
                  %857 = vst [vmem:[%s741 + $0xe4] sm:$0xf] %v856
                  %v858 = vld [vmem:[%s740 + $0x1a8] sm:$0xf]
                  %859 = vst [vmem:[%s741 + $0xe8] sm:$0xf] %v858
                  %v860 = vld [vmem:[%s740 + $0x1ac] sm:$0xf]
                  %861 = vst [vmem:[%s741 + $0xec] sm:$0xf] %v860
                  %v862 = vld [vmem:[%s740 + $0x1b0] sm:$0xf]
                  %863 = vst [vmem:[%s741 + $0xf0] sm:$0xf] %v862
                  %v864 = vld [vmem:[%s740 + $0x1b4] sm:$0xf]
                  %865 = vst [vmem:[%s741 + $0xf4] sm:$0xf] %v864
                  %v866 = vld [vmem:[%s740 + $0x1b8] sm:$0xf]
                  %867 = vst [vmem:[%s741 + $0xf8] sm:$0xf] %v866
                  %v868 = vld [vmem:[%s740 + $0x1bc] sm:$0xf]
                  %869 = vst [vmem:[%s741 + $0xfc] sm:$0xf] %v868
                $region116: #{child_sum_tree_lstm_level.1} parent=103 // loop_footer
                  %s739 = sadd.s32 1, %s735
                $region117: #{child_sum_tree_lstm_level.1} parent=103 // loop_footer_branch
                  %734 = sbr.rel target = $region113
                $region118: #{child_sum_tree_lstm_level.1} parent=103 // loop_exit
                  _
              $region104: #{child_sum_tree_lstm_level.1} parent=88 // pred_fallthru
                _
            $region89: #{child_sum_tree_lstm_level.1} parent=84 // pred_fallthru
              _
            // Predicated region
            $region90: #{child_sum_tree_lstm_level.1} parent=84 // pred_check
              _
            $region91: #{child_sum_tree_lstm_level.1} parent=84 // pred_check_branch
              %585 = sbr.rel (0) target = $region93
            $region92: #{child_sum_tree_lstm_level.1} parent=84 // pred_region
              loop: start=0, step=1, limit=1
              $region94: #{child_sum_tree_lstm_level.1} parent=92 // loop_pre_header
                _
              $region95: #{child_sum_tree_lstm_level.1} parent=92 // loop_header
                %s588 = sphi 0, %s592
                %p589 = scmp.ge.s32.totalorder %s588, 1
                %s593 = sphi %s579, %s579
                %s594 = sphi %s576, %s576
              $region96: #{child_sum_tree_lstm_level.1} parent=92 // loop_header_branch
                %591 = sbr.rel (%p589) target = $region100
              $region97: #{child_sum_tree_lstm_level.1} parent=92 // loop_body
                %v595 = vld [vmem:[%s593] sm:$0xf]
                %596 = vst [vmem:[%s594] sm:$0xf] %v595
                %v597 = vld [vmem:[%s593 + $0x4] sm:$0xf]
                %598 = vst [vmem:[%s594 + $0x4] sm:$0xf] %v597
                %v599 = vld [vmem:[%s593 + $0x8] sm:$0xf]
                %600 = vst [vmem:[%s594 + $0x8] sm:$0xf] %v599
                %v601 = vld [vmem:[%s593 + $0xc] sm:$0xf]
                %602 = vst [vmem:[%s594 + $0xc] sm:$0xf] %v601
                %v603 = vld [vmem:[%s593 + $0x10] sm:$0xf]
                %604 = vst [vmem:[%s594 + $0x10] sm:$0xf] %v603
                %v605 = vld [vmem:[%s593 + $0x14] sm:$0xf]
                %606 = vst [vmem:[%s594 + $0x14] sm:$0xf] %v605
                %v607 = vld [vmem:[%s593 + $0x18] sm:$0xf]
                %608 = vst [vmem:[%s594 + $0x18] sm:$0xf] %v607
                %v609 = vld [vmem:[%s593 + $0x1c] sm:$0xf]
                %610 = vst [vmem:[%s594 + $0x1c] sm:$0xf] %v609
                %v611 = vld [vmem:[%s593 + $0x20] sm:$0xf]
                %612 = vst [vmem:[%s594 + $0x20] sm:$0xf] %v611
                %v613 = vld [vmem:[%s593 + $0x24] sm:$0xf]
                %614 = vst [vmem:[%s594 + $0x24] sm:$0xf] %v613
                %v615 = vld [vmem:[%s593 + $0x28] sm:$0xf]
                %616 = vst [vmem:[%s594 + $0x28] sm:$0xf] %v615
                %v617 = vld [vmem:[%s593 + $0x2c] sm:$0xf]
                %618 = vst [vmem:[%s594 + $0x2c] sm:$0xf] %v617
                %v619 = vld [vmem:[%s593 + $0x30] sm:$0xf]
                %620 = vst [vmem:[%s594 + $0x30] sm:$0xf] %v619
                %v621 = vld [vmem:[%s593 + $0x34] sm:$0xf]
                %622 = vst [vmem:[%s594 + $0x34] sm:$0xf] %v621
                %v623 = vld [vmem:[%s593 + $0x38] sm:$0xf]
                %624 = vst [vmem:[%s594 + $0x38] sm:$0xf] %v623
                %v625 = vld [vmem:[%s593 + $0x3c] sm:$0xf]
                %626 = vst [vmem:[%s594 + $0x3c] sm:$0xf] %v625
                %v627 = vld [vmem:[%s593 + $0x80] sm:$0xf]
                %628 = vst [vmem:[%s594 + $0x40] sm:$0xf] %v627
                %v629 = vld [vmem:[%s593 + $0x84] sm:$0xf]
                %630 = vst [vmem:[%s594 + $0x44] sm:$0xf] %v629
                %v631 = vld [vmem:[%s593 + $0x88] sm:$0xf]
                %632 = vst [vmem:[%s594 + $0x48] sm:$0xf] %v631
                %v633 = vld [vmem:[%s593 + $0x8c] sm:$0xf]
                %634 = vst [vmem:[%s594 + $0x4c] sm:$0xf] %v633
                %v635 = vld [vmem:[%s593 + $0x90] sm:$0xf]
                %636 = vst [vmem:[%s594 + $0x50] sm:$0xf] %v635
                %v637 = vld [vmem:[%s593 + $0x94] sm:$0xf]
                %638 = vst [vmem:[%s594 + $0x54] sm:$0xf] %v637
                %v639 = vld [vmem:[%s593 + $0x98] sm:$0xf]
                %640 = vst [vmem:[%s594 + $0x58] sm:$0xf] %v639
                %v641 = vld [vmem:[%s593 + $0x9c] sm:$0xf]
                %642 = vst [vmem:[%s594 + $0x5c] sm:$0xf] %v641
                %v643 = vld [vmem:[%s593 + $0xa0] sm:$0xf]
                %644 = vst [vmem:[%s594 + $0x60] sm:$0xf] %v643
                %v645 = vld [vmem:[%s593 + $0xa4] sm:$0xf]
                %646 = vst [vmem:[%s594 + $0x64] sm:$0xf] %v645
                %v647 = vld [vmem:[%s593 + $0xa8] sm:$0xf]
                %648 = vst [vmem:[%s594 + $0x68] sm:$0xf] %v647
                %v649 = vld [vmem:[%s593 + $0xac] sm:$0xf]
                %650 = vst [vmem:[%s594 + $0x6c] sm:$0xf] %v649
                %v651 = vld [vmem:[%s593 + $0xb0] sm:$0xf]
                %652 = vst [vmem:[%s594 + $0x70] sm:$0xf] %v651
                %v653 = vld [vmem:[%s593 + $0xb4] sm:$0xf]
                %654 = vst [vmem:[%s594 + $0x74] sm:$0xf] %v653
                %v655 = vld [vmem:[%s593 + $0xb8] sm:$0xf]
                %656 = vst [vmem:[%s594 + $0x78] sm:$0xf] %v655
                %v657 = vld [vmem:[%s593 + $0xbc] sm:$0xf]
                %658 = vst [vmem:[%s594 + $0x7c] sm:$0xf] %v657
                %v659 = vld [vmem:[%s593 + $0x100] sm:$0xf]
                %660 = vst [vmem:[%s594 + $0x80] sm:$0xf] %v659
                %v661 = vld [vmem:[%s593 + $0x104] sm:$0xf]
                %662 = vst [vmem:[%s594 + $0x84] sm:$0xf] %v661
                %v663 = vld [vmem:[%s593 + $0x108] sm:$0xf]
                %664 = vst [vmem:[%s594 + $0x88] sm:$0xf] %v663
                %v665 = vld [vmem:[%s593 + $0x10c] sm:$0xf]
                %666 = vst [vmem:[%s594 + $0x8c] sm:$0xf] %v665
                %v667 = vld [vmem:[%s593 + $0x110] sm:$0xf]
                %668 = vst [vmem:[%s594 + $0x90] sm:$0xf] %v667
                %v669 = vld [vmem:[%s593 + $0x114] sm:$0xf]
                %670 = vst [vmem:[%s594 + $0x94] sm:$0xf] %v669
                %v671 = vld [vmem:[%s593 + $0x118] sm:$0xf]
                %672 = vst [vmem:[%s594 + $0x98] sm:$0xf] %v671
                %v673 = vld [vmem:[%s593 + $0x11c] sm:$0xf]
                %674 = vst [vmem:[%s594 + $0x9c] sm:$0xf] %v673
                %v675 = vld [vmem:[%s593 + $0x120] sm:$0xf]
                %676 = vst [vmem:[%s594 + $0xa0] sm:$0xf] %v675
                %v677 = vld [vmem:[%s593 + $0x124] sm:$0xf]
                %678 = vst [vmem:[%s594 + $0xa4] sm:$0xf] %v677
                %v679 = vld [vmem:[%s593 + $0x128] sm:$0xf]
                %680 = vst [vmem:[%s594 + $0xa8] sm:$0xf] %v679
                %v681 = vld [vmem:[%s593 + $0x12c] sm:$0xf]
                %682 = vst [vmem:[%s594 + $0xac] sm:$0xf] %v681
                %v683 = vld [vmem:[%s593 + $0x130] sm:$0xf]
                %684 = vst [vmem:[%s594 + $0xb0] sm:$0xf] %v683
                %v685 = vld [vmem:[%s593 + $0x134] sm:$0xf]
                %686 = vst [vmem:[%s594 + $0xb4] sm:$0xf] %v685
                %v687 = vld [vmem:[%s593 + $0x138] sm:$0xf]
                %688 = vst [vmem:[%s594 + $0xb8] sm:$0xf] %v687
                %v689 = vld [vmem:[%s593 + $0x13c] sm:$0xf]
                %690 = vst [vmem:[%s594 + $0xbc] sm:$0xf] %v689
                %v691 = vld [vmem:[%s593 + $0x180] sm:$0xf]
                %692 = vst [vmem:[%s594 + $0xc0] sm:$0xf] %v691
                %v693 = vld [vmem:[%s593 + $0x184] sm:$0xf]
                %694 = vst [vmem:[%s594 + $0xc4] sm:$0xf] %v693
                %v695 = vld [vmem:[%s593 + $0x188] sm:$0xf]
                %696 = vst [vmem:[%s594 + $0xc8] sm:$0xf] %v695
                %v697 = vld [vmem:[%s593 + $0x18c] sm:$0xf]
                %698 = vst [vmem:[%s594 + $0xcc] sm:$0xf] %v697
                %v699 = vld [vmem:[%s593 + $0x190] sm:$0xf]
                %700 = vst [vmem:[%s594 + $0xd0] sm:$0xf] %v699
                %v701 = vld [vmem:[%s593 + $0x194] sm:$0xf]
                %702 = vst [vmem:[%s594 + $0xd4] sm:$0xf] %v701
                %v703 = vld [vmem:[%s593 + $0x198] sm:$0xf]
                %704 = vst [vmem:[%s594 + $0xd8] sm:$0xf] %v703
                %v705 = vld [vmem:[%s593 + $0x19c] sm:$0xf]
                %706 = vst [vmem:[%s594 + $0xdc] sm:$0xf] %v705
                %v707 = vld [vmem:[%s593 + $0x1a0] sm:$0xf]
                %708 = vst [vmem:[%s594 + $0xe0] sm:$0xf] %v707
                %v709 = vld [vmem:[%s593 + $0x1a4] sm:$0xf]
                %710 = vst [vmem:[%s594 + $0xe4] sm:$0xf] %v709
                %v711 = vld [vmem:[%s593 + $0x1a8] sm:$0xf]
                %712 = vst [vmem:[%s594 + $0xe8] sm:$0xf] %v711
                %v713 = vld [vmem:[%s593 + $0x1ac] sm:$0xf]
                %714 = vst [vmem:[%s594 + $0xec] sm:$0xf] %v713
                %v715 = vld [vmem:[%s593 + $0x1b0] sm:$0xf]
                %716 = vst [vmem:[%s594 + $0xf0] sm:$0xf] %v715
                %v717 = vld [vmem:[%s593 + $0x1b4] sm:$0xf]
                %718 = vst [vmem:[%s594 + $0xf4] sm:$0xf] %v717
                %v719 = vld [vmem:[%s593 + $0x1b8] sm:$0xf]
                %720 = vst [vmem:[%s594 + $0xf8] sm:$0xf] %v719
                %v721 = vld [vmem:[%s593 + $0x1bc] sm:$0xf]
                %722 = vst [vmem:[%s594 + $0xfc] sm:$0xf] %v721
              $region98: #{child_sum_tree_lstm_level.1} parent=92 // loop_footer
                %s592 = sadd.s32 1, %s588
              $region99: #{child_sum_tree_lstm_level.1} parent=92 // loop_footer_branch
                %587 = sbr.rel target = $region95
              $region100: #{child_sum_tree_lstm_level.1} parent=92 // loop_exit
                _
            $region93: #{child_sum_tree_lstm_level.1} parent=84 // pred_fallthru
              _
          $region85: #{child_sum_tree_lstm_level.1} parent=80 // pred_fallthru
            _
          %870 = vnop
        $region81: #{child_sum_tree_lstm_level.1} parent=31 // pred_fallthru
          _
      $region32: #{child_sum_tree_lstm_level.1} parent=5 // pred_fallthru
        _
      %p871 = scmp.le.s32.totalorder 1, %s15
      %p872 = scmp.lt.s32.totalorder %s15, 3
      %p873 = pnand %p871, %p872
      %p874 = pneg %p873
      // Predicated region
      $region119: #{child_sum_tree_lstm_level.1} parent=5 // pred_check
        _
      $region120: #{child_sum_tree_lstm_level.1} parent=5 // pred_check_branch
        %876 = sbr.rel (%p873) target = $region122
      $region121: #{child_sum_tree_lstm_level.1} parent=5 // pred_region
        %s877 = ssub.s32 %s15, 1
        %s878 = sand.u32 %s54, 1
        %s879 = sand.u32 %s54, 1
        %s880 = smul.addr %s879, 256
        %s881 = scalar_lea.vmem [#allocation2], %s880
        // Predicated region
        $region123: #{child_sum_tree_lstm_level.1} parent=121 // pred_check
          %p882 = pneg %p67
        $region124: #{child_sum_tree_lstm_level.1} parent=121 // pred_check_branch
          %884 = sbr.rel (%p882) target = $region126
        $region125: #{child_sum_tree_lstm_level.1} parent=121 // pred_region
          _
        $region126: #{child_sum_tree_lstm_level.1} parent=121 // pred_fallthru
          _
        %s885 = sand.u32 %s80, 1
        %s886 = sand.u32 %s80, 1
        %s887 = smul.addr %s886, 256
        %s888 = scalar_lea.vmem [#allocation3], %s887
        // Predicated region
        $region127: #{child_sum_tree_lstm_level.1} parent=121 // pred_check
          %p889 = pneg %p93
        $region128: #{child_sum_tree_lstm_level.1} parent=121 // pred_check_branch
          %891 = sbr.rel (%p889) target = $region130
        $region129: #{child_sum_tree_lstm_level.1} parent=121 // pred_region
          _
        $region130: #{child_sum_tree_lstm_level.1} parent=121 // pred_fallthru
          _
        %s892 = smul.u32 16, %s20
        %p893 = scmp.lt.s32.totalorder %s892, 31
        %s894 = scalar_select %p893, %s892, 31
        %s895 = smul.addr %s894, 4
        %s896 = scalar_lea.vmem %s0, %s895
        %p897 = pneg %p41
        %p898 = pneg %p38
        %s899 = sand.u32 %s54, 1
        %s900 = sand.u32 %s54, 1
        %s901 = smul.addr %s900, 256
        %s902 = scalar_lea.vmem [#allocation2], %s901
        %p903 = pneg %p67
        %p904 = pneg %p64
        %s905 = sand.u32 %s80, 1
        %s906 = sand.u32 %s80, 1
        %s907 = smul.addr %s906, 256
        %s908 = scalar_lea.vmem [#allocation3], %s907
        %p909 = pneg %p93
        %p910 = pneg %p90
        %p911 = pneg %p114
        %p912 = pneg %p111
        %p913 = pneg %p135
        %p914 = pneg %p132
        %p915 = pneg %p156
        %p916 = pneg %p153
        %p917 = pneg %p177
        %p918 = pneg %p174
        %p919 = pneg %p203
        %p920 = pneg %p200
        %s921 = smul.u32 16, %s20
        %p922 = scmp.lt.s32.totalorder %s921, 31
        %s923 = scalar_select %p922, %s921, 31
        %s924 = smul.addr %s923, 8
        %s925 = scalar_lea.vmem %s7, %s924
        %p926 = pneg %p229
        %p927 = pneg %p226
        %s928 = smul.u32 16, %s20
        %p929 = scmp.lt.s32.totalorder %s928, 31
        %s930 = scalar_select %p929, %s928, 31
        %s931 = smul.addr %s930, 8
        %s932 = scalar_lea.vmem %s8, %s931
        %s933 = smul.u32 16, %s20
        %p934 = scmp.lt.s32.totalorder %s933, 31
        %s935 = scalar_select %p934, %s933, 31
        %s936 = smul.addr %s935, 4
        %s937 = scalar_lea.vmem %s0, %s936
        %s938 = smul.u32 16, %s20
        %s939 = smul.u32 16, %s20
        %s940 = smul.u32 16, %s20
        %s941 = smul.u32 16, %s20
        %p942 = scmp.lt.s32.totalorder %s941, 31
        %s943 = scalar_select %p942, %s941, 31
        %s944 = smul.addr %s943, 8
        %s945 = scalar_lea.vmem %s7, %s944
        %s946 = smul.u32 16, %s20
        %s947 = smul.u32 16, %s20
        %p948 = scmp.lt.s32.totalorder %s947, 31
        %s949 = scalar_select %p948, %s947, 31
        %s950 = smul.addr %s949, 8
        %s951 = scalar_lea.vmem %s8, %s950
        %s952 = smul.u32 16, %s20
        %v954 = vld [vmem:[%s937] sm:$0xf]
        %v955 = vld [vmem:[%s937 + $0x4] sm:$0xf]
        %v956 = vld [vmem:[%s937 + $0x8] sm:$0xf]
        %v957 = vld [vmem:[%s937 + $0xc] sm:$0xf]
        %v958 = vld [vmem:[%s937 + $0x10] sm:$0xf]
        %v959 = vld [vmem:[%s937 + $0x14] sm:$0xf]
        %v960 = vld [vmem:[%s937 + $0x18] sm:$0xf]
        %v961 = vld [vmem:[%s937 + $0x1c] sm:$0xf]
        %v962 = vld [vmem:[%s937 + $0x20] sm:$0xf]
        %v963 = vld [vmem:[%s937 + $0x24] sm:$0xf]
        %v964 = vld [vmem:[%s937 + $0x28] sm:$0xf]
        %v965 = vld [vmem:[%s937 + $0x2c] sm:$0xf]
        %v966 = vld [vmem:[%s937 + $0x30] sm:$0xf]
        %v967 = vld [vmem:[%s937 + $0x34] sm:$0xf]
        %v968 = vld [vmem:[%s937 + $0x38] sm:$0xf]
        %v969 = vld [vmem:[%s937 + $0x3c] sm:$0xf]
        %v970 = vld [vmem:[%s3] sm:$0xff]
        %v971 = vld [vmem:[%s3 + $0x8] sm:$0xff]
        %v972 = vld [vmem:[%s3 + $0x10] sm:$0xff]
        %v973 = vld [vmem:[%s3 + $0x18] sm:$0xff]
        %v974 = vld [vmem:[%s3 + $0x20] sm:$0xff]
        %v975 = vld [vmem:[%s3 + $0x28] sm:$0xff]
        %v976 = vld [vmem:[%s3 + $0x30] sm:$0xff]
        %v977 = vld [vmem:[%s3 + $0x38] sm:$0xff]
        %v978 = vld [vmem:[%s3 + $0x40] sm:$0xff]
        %v979 = vld [vmem:[%s3 + $0x48] sm:$0xff]
        %v980 = vld [vmem:[%s3 + $0x50] sm:$0xff]
        %v981 = vld [vmem:[%s3 + $0x58] sm:$0xff]
        %v982 = vld [vmem:[%s3 + $0x60] sm:$0xff]
        %v983 = vld [vmem:[%s3 + $0x68] sm:$0xff]
        %v984 = vld [vmem:[%s3 + $0x70] sm:$0xff]
        %v985 = vld [vmem:[%s3 + $0x78] sm:$0xff]
        %v986 = vld [vmem:[%s3 + $0x80] sm:$0xff]
        %v987 = vld [vmem:[%s3 + $0x88] sm:$0xff]
        %v988 = vld [vmem:[%s3 + $0x90] sm:$0xff]
        %v989 = vld [vmem:[%s3 + $0x98] sm:$0xff]
        %v990 = vld [vmem:[%s3 + $0xa0] sm:$0xff]
        %v991 = vld [vmem:[%s3 + $0xa8] sm:$0xff]
        %v992 = vld [vmem:[%s3 + $0xb0] sm:$0xff]
        %v993 = vld [vmem:[%s3 + $0xb8] sm:$0xff]
        %v994 = vld [vmem:[%s3 + $0xc0] sm:$0xff]
        %v995 = vld [vmem:[%s3 + $0xc8] sm:$0xff]
        %v996 = vld [vmem:[%s3 + $0xd0] sm:$0xff]
        %v997 = vld [vmem:[%s3 + $0xd8] sm:$0xff]
        %v998 = vld [vmem:[%s3 + $0xe0] sm:$0xff]
        %v999 = vld [vmem:[%s3 + $0xe8] sm:$0xff]
        %v1000 = vld [vmem:[%s3 + $0xf0] sm:$0xff]
        %v1001 = vld [vmem:[%s3 + $0xf8] sm:$0xff]
        %v1002 = vld [vmem:[%s6] sm:$0xf]
        %v1004 = vlaneseq
        %v1005 = vshrl.u32 %v1004, 7
        %v1006 = vsub.s32 0, %v1005
        %v1007 = vrot.slane %v1002, %v1006
        %v1008 = vlaneseq
        %v1009 = vshrl.u32 %v1008, 7
        %v1010 = vsub.s32 1, %v1009
        %v1011 = vrot.slane %v1002, %v1010
        %v1012 = vlaneseq
        %v1013 = vshrl.u32 %v1012, 7
        %v1014 = vsub.s32 2, %v1013
        %v1015 = vrot.slane %v1002, %v1014
        %v1016 = vlaneseq
        %v1017 = vshrl.u32 %v1016, 7
        %v1018 = vsub.s32 3, %v1017
        %v1019 = vrot.slane %v1002, %v1018
        %v1040 = vunpack.c.l.b16 %v954
        %v1041 = vunpack.c.l.b16 %v955
        %v1042 = vunpack.c.l.b16 %v956
        %v1043 = vunpack.c.l.b16 %v957
        %v1044 = vunpack.c.l.b16 %v958
        %v1045 = vunpack.c.l.b16 %v959
        %v1046 = vunpack.c.l.b16 %v960
        %v1047 = vunpack.c.l.b16 %v961
        %v1048 = vunpack.c.l.b16 %v962
        %v1049 = vunpack.c.l.b16 %v963
        %v1050 = vunpack.c.l.b16 %v964
        %v1051 = vunpack.c.l.b16 %v965
        %v1052 = vunpack.c.l.b16 %v966
        %v1053 = vunpack.c.l.b16 %v967
        %v1054 = vunpack.c.l.b16 %v968
        %v1055 = vunpack.c.l.b16 %v969
        %v1056 = vpack.c.b16 %v1041, %v1040
        %v1057 = vpack.c.b16 %v1043, %v1042
        %v1058 = vpack.c.b16 %v1045, %v1044
        %v1059 = vpack.c.b16 %v1047, %v1046
        %v1060 = vpack.c.b16 %v1049, %v1048
        %v1061 = vpack.c.b16 %v1051, %v1050
        %v1062 = vpack.c.b16 %v1053, %v1052
        %v1063 = vpack.c.b16 %v1055, %v1054
        %v1104 = vunpack.c.l.b16 %v970
        %v1105 = vunpack.c.h.b16 %v970
        %v1106 = vunpack.c.l.b16 %v971
        %v1107 = vunpack.c.h.b16 %v971
        %v1108 = vunpack.c.l.b16 %v972
        %v1109 = vunpack.c.h.b16 %v972
        %v1110 = vunpack.c.l.b16 %v973
        %v1111 = vunpack.c.h.b16 %v973
        %v1112 = vunpack.c.l.b16 %v974
        %v1113 = vunpack.c.h.b16 %v974
        %v1114 = vunpack.c.l.b16 %v975
        %v1115 = vunpack.c.h.b16 %v975
        %v1116 = vunpack.c.l.b16 %v976
        %v1117 = vunpack.c.h.b16 %v976
        %v1118 = vunpack.c.l.b16 %v977
        %v1119 = vunpack.c.h.b16 %v977
        %v1120 = vunpack.c.l.b16 %v978
        %v1121 = vunpack.c.h.b16 %v978
        %v1122 = vunpack.c.l.b16 %v979
        %v1123 = vunpack.c.h.b16 %v979
        %v1124 = vunpack.c.l.b16 %v980
        %v1125 = vunpack.c.h.b16 %v980
        %v1126 = vunpack.c.l.b16 %v981
        %v1127 = vunpack.c.h.b16 %v981
        %v1128 = vunpack.c.l.b16 %v982
        %v1129 = vunpack.c.h.b16 %v982
        %v1130 = vunpack.c.l.b16 %v983
        %v1131 = vunpack.c.h.b16 %v983
        %v1132 = vunpack.c.l.b16 %v984
        %v1133 = vunpack.c.h.b16 %v984
        %v1134 = vunpack.c.l.b16 %v985
        %v1135 = vunpack.c.h.b16 %v985
        %v1136 = vunpack.c.l.b16 %v986
        %v1137 = vunpack.c.h.b16 %v986
        %v1138 = vunpack.c.l.b16 %v987
        %v1139 = vunpack.c.h.b16 %v987
        %v1140 = vunpack.c.l.b16 %v988
        %v1141 = vunpack.c.h.b16 %v988
        %v1142 = vunpack.c.l.b16 %v989
        %v1143 = vunpack.c.h.b16 %v989
        %v1144 = vunpack.c.l.b16 %v990
        %v1145 = vunpack.c.h.b16 %v990
        %v1146 = vunpack.c.l.b16 %v991
        %v1147 = vunpack.c.h.b16 %v991
        %v1148 = vunpack.c.l.b16 %v992
        %v1149 = vunpack.c.h.b16 %v992
        %v1150 = vunpack.c.l.b16 %v993
        %v1151 = vunpack.c.h.b16 %v993
        %v1152 = vunpack.c.l.b16 %v994
        %v1153 = vunpack.c.h.b16 %v994
        %v1154 = vunpack.c.l.b16 %v995
        %v1155 = vunpack.c.h.b16 %v995
        %v1156 = vunpack.c.l.b16 %v996
        %v1157 = vunpack.c.h.b16 %v996
        %v1158 = vunpack.c.l.b16 %v997
        %v1159 = vunpack.c.h.b16 %v997
        %v1160 = vunpack.c.l.b16 %v998
        %v1161 = vunpack.c.h.b16 %v998
        %v1162 = vunpack.c.l.b16 %v999
        %v1163 = vunpack.c.h.b16 %v999
        %v1164 = vunpack.c.l.b16 %v1000
        %v1165 = vunpack.c.h.b16 %v1000
        %v1166 = vunpack.c.l.b16 %v1001
        %v1167 = vunpack.c.h.b16 %v1001
        %v1168 = vpack.c.b16 %v1108, %v1104
        %v1169 = vpack.c.b16 %v1109, %v1105
        %v1170 = vpack.c.b16 %v1110, %v1106
        %v1171 = vpack.c.b16 %v1111, %v1107
        %v1172 = vpack.c.b16 %v1116, %v1112
        %v1173 = vpack.c.b16 %v1117, %v1113
        %v1174 = vpack.c.b16 %v1118, %v1114
        %v1175 = vpack.c.b16 %v1119, %v1115
        %v1176 = vpack.c.b16 %v1124, %v1120
        %v1177 = vpack.c.b16 %v1125, %v1121
        %v1178 = vpack.c.b16 %v1126, %v1122
        %v1179 = vpack.c.b16 %v1127, %v1123
        %v1180 = vpack.c.b16 %v1132, %v1128
        %v1181 = vpack.c.b16 %v1133, %v1129
        %v1182 = vpack.c.b16 %v1134, %v1130
        %v1183 = vpack.c.b16 %v1135, %v1131
        %v1184 = vpack.c.b16 %v1140, %v1136
        %v1185 = vpack.c.b16 %v1141, %v1137
        %v1186 = vpack.c.b16 %v1142, %v1138
        %v1187 = vpack.c.b16 %v1143, %v1139
        %v1188 = vpack.c.b16 %v1148, %v1144
        %v1189 = vpack.c.b16 %v1149, %v1145
        %v1190 = vpack.c.b16 %v1150, %v1146
        %v1191 = vpack.c.b16 %v1151, %v1147
        %v1192 = vpack.c.b16 %v1156, %v1152
        %v1193 = vpack.c.b16 %v1157, %v1153
        %v1194 = vpack.c.b16 %v1158, %v1154
        %v1195 = vpack.c.b16 %v1159, %v1155
        %v1196 = vpack.c.b16 %v1164, %v1160
        %v1197 = vpack.c.b16 %v1165, %v1161
        %v1198 = vpack.c.b16 %v1166, %v1162
        %v1199 = vpack.c.b16 %v1167, %v1163
        %1232 = vmatprep.subr.bf16.mxu0 %v1169
        %1233 = vmatpush1.bf16.msra.mxu0 %v1168
        %1234 = vmatprep.subr.bf16.mxu0 %v1173
        %1235 = vmatpush1.bf16.msra.mxu0 %v1172
        %1236 = vmatprep.subr.bf16.mxu0 %v1177
        %1237 = vmatpush1.bf16.msra.mxu0 %v1176
        %1238 = vmatprep.subr.bf16.mxu0 %v1181
        %1239 = vmatpush1.bf16.msra.mxu0 %v1180
        %1240 = vmatprep.subr.bf16.mxu0 %v1185
        %1241 = vmatpush1.bf16.msra.mxu0 %v1184
        %1242 = vmatprep.subr.bf16.mxu0 %v1189
        %1243 = vmatpush1.bf16.msra.mxu0 %v1188
        %1244 = vmatprep.subr.bf16.mxu0 %v1193
        %1245 = vmatpush1.bf16.msra.mxu0 %v1192
        %1246 = vmatprep.subr.bf16.mxu0 %v1197
        %1247 = vmatpush1.bf16.msra.mxu0 %v1196
        %1248 = vmatprep.subr.bf16.mxu0 0
        %1249 = vmatpush1.bf16.msra.mxu0 0
        %1250 = vmatprep.subr.bf16.mxu0 0
        %1251 = vmatpush1.bf16.msra.mxu0 0
        %1252 = vmatprep.subr.bf16.mxu0 0
        %1253 = vmatpush1.bf16.msra.mxu0 0
        %1254 = vmatprep.subr.bf16.mxu0 0
        %1255 = vmatpush1.bf16.msra.mxu0 0
        %1256 = vmatprep.subr.bf16.mxu0 0
        %1257 = vmatpush1.bf16.msra.mxu0 0
        %1258 = vmatprep.subr.bf16.mxu0 0
        %1259 = vmatpush1.bf16.msra.mxu0 0
        %1260 = vmatprep.subr.bf16.mxu0 0
        %1261 = vmatpush1.bf16.msra.mxu0 0
        %1262 = vmatprep.subr.bf16.mxu0 0
        %1263 = vmatpush1.bf16.msra.mxu0 0
        %1264 = vmatprep.mubr.bf16.mxu0 0
        %1265 = vmatmul.mubr.bf16.gmra.mrb[0].mxu0 %v1056
        %v1266 = vpop.f32.mrb[0].mxu0
        %v1267 = vadd.f32 %v1007, %v1266
        %v1268 = vpop.f32.mrb[0].mxu0
        %v1269 = vadd.f32 %v1011, %v1268
        %v1270 = vpop.f32.mrb[0].mxu0
        %v1271 = vadd.f32 %v1007, %v1270
        %v1272 = vpop.f32.mrb[0].mxu0
        %v1273 = vadd.f32 %v1011, %v1272
        %1274 = vmatprep.mubr.bf16.mxu0 0
        %1275 = vmatmul.mubr.bf16.gmra.mrb[0].mxu0 %v1057
        %v1276 = vpop.f32.mrb[0].mxu0
        %v1277 = vadd.f32 %v1007, %v1276
        %v1278 = vpop.f32.mrb[0].mxu0
        %v1279 = vadd.f32 %v1011, %v1278
        %v1280 = vpop.f32.mrb[0].mxu0
        %v1281 = vadd.f32 %v1007, %v1280
        %v1282 = vpop.f32.mrb[0].mxu0
        %v1283 = vadd.f32 %v1011, %v1282
        %1284 = vmatprep.mubr.bf16.mxu0 0
        %1285 = vmatmul.mubr.bf16.gmra.mrb[0].mxu0 %v1058
        %v1286 = vpop.f32.mrb[0].mxu0
        %v1287 = vadd.f32 %v1007, %v1286
        %v1288 = vpop.f32.mrb[0].mxu0
        %v1289 = vadd.f32 %v1011, %v1288
        %v1290 = vpop.f32.mrb[0].mxu0
        %v1291 = vadd.f32 %v1007, %v1290
        %v1292 = vpop.f32.mrb[0].mxu0
        %v1293 = vadd.f32 %v1011, %v1292
        %1294 = vmatprep.mubr.bf16.mxu0 0
        %1295 = vmatmul.mubr.bf16.gmra.mrb[0].mxu0 %v1059
        %v1296 = vpop.f32.mrb[0].mxu0
        %v1297 = vadd.f32 %v1007, %v1296
        %v1298 = vpop.f32.mrb[0].mxu0
        %v1299 = vadd.f32 %v1011, %v1298
        %v1300 = vpop.f32.mrb[0].mxu0
        %v1301 = vadd.f32 %v1007, %v1300
        %v1302 = vpop.f32.mrb[0].mxu0
        %v1303 = vadd.f32 %v1011, %v1302
        %1304 = vmatprep.mubr.bf16.mxu0 0
        %1305 = vmatmul.mubr.bf16.gmra.mrb[0].mxu0 %v1060
        %v1306 = vpop.f32.mrb[0].mxu0
        %v1307 = vadd.f32 %v1007, %v1306
        %v1308 = vpop.f32.mrb[0].mxu0
        %v1309 = vadd.f32 %v1011, %v1308
        %v1310 = vpop.f32.mrb[0].mxu0
        %v1311 = vadd.f32 %v1007, %v1310
        %v1312 = vpop.f32.mrb[0].mxu0
        %v1313 = vadd.f32 %v1011, %v1312
        %1314 = vmatprep.mubr.bf16.mxu0 0
        %1315 = vmatmul.mubr.bf16.gmra.mrb[0].mxu0 %v1061
        %v1316 = vpop.f32.mrb[0].mxu0
        %v1317 = vadd.f32 %v1007, %v1316
        %v1318 = vpop.f32.mrb[0].mxu0
        %v1319 = vadd.f32 %v1011, %v1318
        %v1320 = vpop.f32.mrb[0].mxu0
        %v1321 = vadd.f32 %v1007, %v1320
        %v1322 = vpop.f32.mrb[0].mxu0
        %v1323 = vadd.f32 %v1011, %v1322
        %1324 = vmatprep.mubr.bf16.mxu0 0
        %1325 = vmatmul.mubr.bf16.gmra.mrb[0].mxu0 %v1062
        %v1326 = vpop.f32.mrb[0].mxu0
        %v1327 = vadd.f32 %v1007, %v1326
        %v1328 = vpop.f32.mrb[0].mxu0
        %v1329 = vadd.f32 %v1011, %v1328
        %v1330 = vpop.f32.mrb[0].mxu0
        %v1331 = vadd.f32 %v1007, %v1330
        %v1332 = vpop.f32.mrb[0].mxu0
        %v1333 = vadd.f32 %v1011, %v1332
        %1334 = vmatprep.mubr.bf16.mxu0 0
        %1335 = vmatmul.mubr.bf16.gmra.mrb[0].mxu0 %v1063
        %v1336 = vpop.f32.mrb[0].mxu0
        %v1337 = vadd.f32 %v1007, %v1336
        %v1338 = vpop.f32.mrb[0].mxu0
        %v1339 = vadd.f32 %v1011, %v1338
        %v1340 = vpop.f32.mrb[0].mxu0
        %v1341 = vadd.f32 %v1007, %v1340
        %v1342 = vpop.f32.mrb[0].mxu0
        %v1343 = vadd.f32 %v1011, %v1342
        %1344 = vdwg.mxu0
        %1345 = vmatprep.subr.bf16.mxu0 %v1171
        %1346 = vmatpush1.bf16.msra.mxu0 %v1170
        %1347 = vmatprep.subr.bf16.mxu0 %v1175
        %1348 = vmatpush1.bf16.msra.mxu0 %v1174
        %1349 = vmatprep.subr.bf16.mxu0 %v1179
        %1350 = vmatpush1.bf16.msra.mxu0 %v1178
        %1351 = vmatprep.subr.bf16.mxu0 %v1183
        %1352 = vmatpush1.bf16.msra.mxu0 %v1182
        %1353 = vmatprep.subr.bf16.mxu0 %v1187
        %1354 = vmatpush1.bf16.msra.mxu0 %v1186
        %1355 = vmatprep.subr.bf16.mxu0 %v1191
        %1356 = vmatpush1.bf16.msra.mxu0 %v1190
        %1357 = vmatprep.subr.bf16.mxu0 %v1195
        %1358 = vmatpush1.bf16.msra.mxu0 %v1194
        %1359 = vmatprep.subr.bf16.mxu0 %v1199
        %1360 = vmatpush1.bf16.msra.mxu0 %v1198
        %1361 = vmatprep.subr.bf16.mxu0 0
        %1362 = vmatpush1.bf16.msra.mxu0 0
        %1363 = vmatprep.subr.bf16.mxu0 0
        %1364 = vmatpush1.bf16.msra.mxu0 0
        %1365 = vmatprep.subr.bf16.mxu0 0
        %1366 = vmatpush1.bf16.msra.mxu0 0
        %1367 = vmatprep.subr.bf16.mxu0 0
        %1368 = vmatpush1.bf16.msra.mxu0 0
        %1369 = vmatprep.subr.bf16.mxu0 0
        %1370 = vmatpush1.bf16.msra.mxu0 0
        %1371 = vmatprep.subr.bf16.mxu0 0
        %1372 = vmatpush1.bf16.msra.mxu0 0
        %1373 = vmatprep.subr.bf16.mxu0 0
        %1374 = vmatpush1.bf16.msra.mxu0 0
        %1375 = vmatprep.subr.bf16.mxu0 0
        %1376 = vmatpush1.bf16.msra.mxu0 0
        %1377 = vmatprep.mubr.bf16.mxu0 0
        %1378 = vmatmul.mubr.bf16.gmra.mrb[0].mxu0 %v1056
        %v1379 = vpop.f32.mrb[0].mxu0
        %v1380 = vadd.f32 %v1015, %v1379
        %v1381 = vpop.f32.mrb[0].mxu0
        %v1382 = vadd.f32 %v1019, %v1381
        %v1383 = vpop.f32.mrb[0].mxu0
        %v1384 = vadd.f32 %v1015, %v1383
        %v1385 = vpop.f32.mrb[0].mxu0
        %v1386 = vadd.f32 %v1019, %v1385
        %1387 = vmatprep.mubr.bf16.mxu0 0
        %1388 = vmatmul.mubr.bf16.gmra.mrb[0].mxu0 %v1057
        %v1389 = vpop.f32.mrb[0].mxu0
        %v1390 = vadd.f32 %v1015, %v1389
        %v1391 = vpop.f32.mrb[0].mxu0
        %v1392 = vadd.f32 %v1019, %v1391
        %v1393 = vpop.f32.mrb[0].mxu0
        %v1394 = vadd.f32 %v1015, %v1393
        %v1395 = vpop.f32.mrb[0].mxu0
        %v1396 = vadd.f32 %v1019, %v1395
        %1397 = vmatprep.mubr.bf16.mxu0 0
        %1398 = vmatmul.mubr.bf16.gmra.mrb[0].mxu0 %v1058
        %v1399 = vpop.f32.mrb[0].mxu0
        %v1400 = vadd.f32 %v1015, %v1399
        %v1401 = vpop.f32.mrb[0].mxu0
        %v1402 = vadd.f32 %v1019, %v1401
        %v1403 = vpop.f32.mrb[0].mxu0
        %v1404 = vadd.f32 %v1015, %v1403
        %v1405 = vpop.f32.mrb[0].mxu0
        %v1406 = vadd.f32 %v1019, %v1405
        %1407 = vmatprep.mubr.bf16.mxu0 0
        %1408 = vmatmul.mubr.bf16.gmra.mrb[0].mxu0 %v1059
        %v1409 = vpop.f32.mrb[0].mxu0
        %v1410 = vadd.f32 %v1015, %v1409
        %v1411 = vpop.f32.mrb[0].mxu0
        %v1412 = vadd.f32 %v1019, %v1411
        %v1413 = vpop.f32.mrb[0].mxu0
        %v1414 = vadd.f32 %v1015, %v1413
        %v1415 = vpop.f32.mrb[0].mxu0
        %v1416 = vadd.f32 %v1019, %v1415
        %1417 = vmatprep.mubr.bf16.mxu0 0
        %1418 = vmatmul.mubr.bf16.gmra.mrb[0].mxu0 %v1060
        %v1419 = vpop.f32.mrb[0].mxu0
        %v1420 = vadd.f32 %v1015, %v1419
        %v1421 = vpop.f32.mrb[0].mxu0
        %v1422 = vadd.f32 %v1019, %v1421
        %v1423 = vpop.f32.mrb[0].mxu0
        %v1424 = vadd.f32 %v1015, %v1423
        %v1425 = vpop.f32.mrb[0].mxu0
        %v1426 = vadd.f32 %v1019, %v1425
        %1427 = vmatprep.mubr.bf16.mxu0 0
        %1428 = vmatmul.mubr.bf16.gmra.mrb[0].mxu0 %v1061
        %v1429 = vpop.f32.mrb[0].mxu0
        %v1430 = vadd.f32 %v1015, %v1429
        %v1431 = vpop.f32.mrb[0].mxu0
        %v1432 = vadd.f32 %v1019, %v1431
        %v1433 = vpop.f32.mrb[0].mxu0
        %v1434 = vadd.f32 %v1015, %v1433
        %v1435 = vpop.f32.mrb[0].mxu0
        %v1436 = vadd.f32 %v1019, %v1435
        %1437 = vmatprep.mubr.bf16.mxu0 0
        %1438 = vmatmul.mubr.bf16.gmra.mrb[0].mxu0 %v1062
        %v1439 = vpop.f32.mrb[0].mxu0
        %v1440 = vadd.f32 %v1015, %v1439
        %v1441 = vpop.f32.mrb[0].mxu0
        %v1442 = vadd.f32 %v1019, %v1441
        %v1443 = vpop.f32.mrb[0].mxu0
        %v1444 = vadd.f32 %v1015, %v1443
        %v1445 = vpop.f32.mrb[0].mxu0
        %v1446 = vadd.f32 %v1019, %v1445
        %1447 = vmatprep.mubr.bf16.mxu0 0
        %1448 = vmatmul.mubr.bf16.gmra.mrb[0].mxu0 %v1063
        %v1449 = vpop.f32.mrb[0].mxu0
        %v1450 = vadd.f32 %v1015, %v1449
        %v1451 = vpop.f32.mrb[0].mxu0
        %v1452 = vadd.f32 %v1019, %v1451
        %v1453 = vpop.f32.mrb[0].mxu0
        %v1454 = vadd.f32 %v1015, %v1453
        %v1455 = vpop.f32.mrb[0].mxu0
        %v1456 = vadd.f32 %v1019, %v1455
        %1457 = vdwg.mxu0
        %v1458 = vld [vmem:[%s881] sm:$0xf]
        %v1459 = vld [vmem:[%s881 + $0x4] sm:$0xf]
        %v1460 = vld [vmem:[%s881 + $0x8] sm:$0xf]
        %v1461 = vld [vmem:[%s881 + $0xc] sm:$0xf]
        %v1462 = vld [vmem:[%s881 + $0x10] sm:$0xf]
        %v1463 = vld [vmem:[%s881 + $0x14] sm:$0xf]
        %v1464 = vld [vmem:[%s881 + $0x18] sm:$0xf]
        %v1465 = vld [vmem:[%s881 + $0x1c] sm:$0xf]
        %v1466 = vld [vmem:[%s881 + $0x20] sm:$0xf]
        %v1467 = vld [vmem:[%s881 + $0x24] sm:$0xf]
        %v1468 = vld [vmem:[%s881 + $0x28] sm:$0xf]
        %v1469 = vld [vmem:[%s881 + $0x2c] sm:$0xf]
        %v1470 = vld [vmem:[%s881 + $0x30] sm:$0xf]
        %v1471 = vld [vmem:[%s881 + $0x34] sm:$0xf]
        %v1472 = vld [vmem:[%s881 + $0x38] sm:$0xf]
        %v1473 = vld [vmem:[%s881 + $0x3c] sm:$0xf]
        %v1474 = vunpack.c.l.bf16 %v1458
        %v1475 = vunpack.c.l.bf16 %v1459
        %v1476 = vunpack.c.l.bf16 %v1460
        %v1477 = vunpack.c.l.bf16 %v1461
        %v1478 = vunpack.c.l.bf16 %v1462
        %v1479 = vunpack.c.l.bf16 %v1463
        %v1480 = vunpack.c.l.bf16 %v1464
        %v1481 = vunpack.c.l.bf16 %v1465
        %v1482 = vunpack.c.l.bf16 %v1466
        %v1483 = vunpack.c.l.bf16 %v1467
        %v1484 = vunpack.c.l.bf16 %v1468
        %v1485 = vunpack.c.l.bf16 %v1469
        %v1486 = vunpack.c.l.bf16 %v1470
        %v1487 = vunpack.c.l.bf16 %v1471
        %v1488 = vunpack.c.l.bf16 %v1472
        %v1489 = vunpack.c.l.bf16 %v1473
        %s1490 = scalar_lea.vmem %s881, 64 [#allocation2]
        %v1491 = vld [vmem:[%s1490] sm:$0xf]
        %v1492 = vld [vmem:[%s1490 + $0x4] sm:$0xf]
        %v1493 = vld [vmem:[%s1490 + $0x8] sm:$0xf]
        %v1494 = vld [vmem:[%s1490 + $0xc] sm:$0xf]
        %v1495 = vld [vmem:[%s1490 + $0x10] sm:$0xf]
        %v1496 = vld [vmem:[%s1490 + $0x14] sm:$0xf]
        %v1497 = vld [vmem:[%s1490 + $0x18] sm:$0xf]
        %v1498 = vld [vmem:[%s1490 + $0x1c] sm:$0xf]
        %v1499 = vld [vmem:[%s1490 + $0x20] sm:$0xf]
        %v1500 = vld [vmem:[%s1490 + $0x24] sm:$0xf]
        %v1501 = vld [vmem:[%s1490 + $0x28] sm:$0xf]
        %v1502 = vld [vmem:[%s1490 + $0x2c] sm:$0xf]
        %v1503 = vld [vmem:[%s1490 + $0x30] sm:$0xf]
        %v1504 = vld [vmem:[%s1490 + $0x34] sm:$0xf]
        %v1505 = vld [vmem:[%s1490 + $0x38] sm:$0xf]
        %v1506 = vld [vmem:[%s1490 + $0x3c] sm:$0xf]
        %v1507 = vunpack.c.l.bf16 %v1491
        %v1508 = vunpack.c.l.bf16 %v1492
        %v1509 = vunpack.c.l.bf16 %v1493
        %v1510 = vunpack.c.l.bf16 %v1494
        %v1511 = vunpack.c.l.bf16 %v1495
        %v1512 = vunpack.c.l.bf16 %v1496
        %v1513 = vunpack.c.l.bf16 %v1497
        %v1514 = vunpack.c.l.bf16 %v1498
        %v1515 = vunpack.c.l.bf16 %v1499
        %v1516 = vunpack.c.l.bf16 %v1500
        %v1517 = vunpack.c.l.bf16 %v1501
        %v1518 = vunpack.c.l.bf16 %v1502
        %v1519 = vunpack.c.l.bf16 %v1503
        %v1520 = vunpack.c.l.bf16 %v1504
        %v1521 = vunpack.c.l.bf16 %v1505
        %v1522 = vunpack.c.l.bf16 %v1506
        %v1523 = vadd.f32 %v1474, %v1507
        %v1524 = vadd.f32 %v1475, %v1508
        %v1525 = vadd.f32 %v1476, %v1509
        %v1526 = vadd.f32 %v1477, %v1510
        %v1527 = vadd.f32 %v1478, %v1511
        %v1528 = vadd.f32 %v1479, %v1512
        %v1529 = vadd.f32 %v1480, %v1513
        %v1530 = vadd.f32 %v1481, %v1514
        %v1531 = vadd.f32 %v1482, %v1515
        %v1532 = vadd.f32 %v1483, %v1516
        %v1533 = vadd.f32 %v1484, %v1517
        %v1534 = vadd.f32 %v1485, %v1518
        %v1535 = vadd.f32 %v1486, %v1519
        %v1536 = vadd.f32 %v1487, %v1520
        %v1537 = vadd.f32 %v1488, %v1521
        %v1538 = vadd.f32 %v1489, %v1522
        %s1539 = scalar_lea.vmem %s881, 128 [#allocation2]
        %v1540 = vld [vmem:[%s1539] sm:$0xf]
        %v1541 = vld [vmem:[%s1539 + $0x4] sm:$0xf]
        %v1542 = vld [vmem:[%s1539 + $0x8] sm:$0xf]
        %v1543 = vld [vmem:[%s1539 + $0xc] sm:$0xf]
        %v1544 = vld [vmem:[%s1539 + $0x10] sm:$0xf]
        %v1545 = vld [vmem:[%s1539 + $0x14] sm:$0xf]
        %v1546 = vld [vmem:[%s1539 + $0x18] sm:$0xf]
        %v1547 = vld [vmem:[%s1539 + $0x1c] sm:$0xf]
        %v1548 = vld [vmem:[%s1539 + $0x20] sm:$0xf]
        %v1549 = vld [vmem:[%s1539 + $0x24] sm:$0xf]
        %v1550 = vld [vmem:[%s1539 + $0x28] sm:$0xf]
        %v1551 = vld [vmem:[%s1539 + $0x2c] sm:$0xf]
        %v1552 = vld [vmem:[%s1539 + $0x30] sm:$0xf]
        %v1553 = vld [vmem:[%s1539 + $0x34] sm:$0xf]
        %v1554 = vld [vmem:[%s1539 + $0x38] sm:$0xf]
        %v1555 = vld [vmem:[%s1539 + $0x3c] sm:$0xf]
        %v1556 = vunpack.c.l.bf16 %v1540
        %v1557 = vunpack.c.l.bf16 %v1541
        %v1558 = vunpack.c.l.bf16 %v1542
        %v1559 = vunpack.c.l.bf16 %v1543
        %v1560 = vunpack.c.l.bf16 %v1544
        %v1561 = vunpack.c.l.bf16 %v1545
        %v1562 = vunpack.c.l.bf16 %v1546
        %v1563 = vunpack.c.l.bf16 %v1547
        %v1564 = vunpack.c.l.bf16 %v1548
        %v1565 = vunpack.c.l.bf16 %v1549
        %v1566 = vunpack.c.l.bf16 %v1550
        %v1567 = vunpack.c.l.bf16 %v1551
        %v1568 = vunpack.c.l.bf16 %v1552
        %v1569 = vunpack.c.l.bf16 %v1553
        %v1570 = vunpack.c.l.bf16 %v1554
        %v1571 = vunpack.c.l.bf16 %v1555
        %v1572 = vadd.f32 %v1523, %v1556
        %v1573 = vadd.f32 %v1524, %v1557
        %v1574 = vadd.f32 %v1525, %v1558
        %v1575 = vadd.f32 %v1526, %v1559
        %v1576 = vadd.f32 %v1527, %v1560
        %v1577 = vadd.f32 %v1528, %v1561
        %v1578 = vadd.f32 %v1529, %v1562
        %v1579 = vadd.f32 %v1530, %v1563
        %v1580 = vadd.f32 %v1531, %v1564
        %v1581 = vadd.f32 %v1532, %v1565
        %v1582 = vadd.f32 %v1533, %v1566
        %v1583 = vadd.f32 %v1534, %v1567
        %v1584 = vadd.f32 %v1535, %v1568
        %v1585 = vadd.f32 %v1536, %v1569
        %v1586 = vadd.f32 %v1537, %v1570
        %v1587 = vadd.f32 %v1538, %v1571
        %s1588 = scalar_lea.vmem %s881, 192 [#allocation2]
        %v1589 = vld [vmem:[%s1588] sm:$0xf]
        %v1590 = vld [vmem:[%s1588 + $0x4] sm:$0xf]
        %v1591 = vld [vmem:[%s1588 + $0x8] sm:$0xf]
        %v1592 = vld [vmem:[%s1588 + $0xc] sm:$0xf]
        %v1593 = vld [vmem:[%s1588 + $0x10] sm:$0xf]
        %v1594 = vld [vmem:[%s1588 + $0x14] sm:$0xf]
        %v1595 = vld [vmem:[%s1588 + $0x18] sm:$0xf]
        %v1596 = vld [vmem:[%s1588 + $0x1c] sm:$0xf]
        %v1597 = vld [vmem:[%s1588 + $0x20] sm:$0xf]
        %v1598 = vld [vmem:[%s1588 + $0x24] sm:$0xf]
        %v1599 = vld [vmem:[%s1588 + $0x28] sm:$0xf]
        %v1600 = vld [vmem:[%s1588 + $0x2c] sm:$0xf]
        %v1601 = vld [vmem:[%s1588 + $0x30] sm:$0xf]
        %v1602 = vld [vmem:[%s1588 + $0x34] sm:$0xf]
        %v1603 = vld [vmem:[%s1588 + $0x38] sm:$0xf]
        %v1604 = vld [vmem:[%s1588 + $0x3c] sm:$0xf]
        %v1605 = vunpack.c.l.bf16 %v1589
        %v1606 = vunpack.c.l.bf16 %v1590
        %v1607 = vunpack.c.l.bf16 %v1591
        %v1608 = vunpack.c.l.bf16 %v1592
        %v1609 = vunpack.c.l.bf16 %v1593
        %v1610 = vunpack.c.l.bf16 %v1594
        %v1611 = vunpack.c.l.bf16 %v1595
        %v1612 = vunpack.c.l.bf16 %v1596
        %v1613 = vunpack.c.l.bf16 %v1597
        %v1614 = vunpack.c.l.bf16 %v1598
        %v1615 = vunpack.c.l.bf16 %v1599
        %v1616 = vunpack.c.l.bf16 %v1600
        %v1617 = vunpack.c.l.bf16 %v1601
        %v1618 = vunpack.c.l.bf16 %v1602
        %v1619 = vunpack.c.l.bf16 %v1603
        %v1620 = vunpack.c.l.bf16 %v1604
        %v1621 = vadd.f32 %v1572, %v1605
        %v1622 = vadd.f32 %v1573, %v1606
        %v1623 = vadd.f32 %v1574, %v1607
        %v1624 = vadd.f32 %v1575, %v1608
        %v1625 = vadd.f32 %v1576, %v1609
        %v1626 = vadd.f32 %v1577, %v1610
        %v1627 = vadd.f32 %v1578, %v1611
        %v1628 = vadd.f32 %v1579, %v1612
        %v1629 = vadd.f32 %v1580, %v1613
        %v1630 = vadd.f32 %v1581, %v1614
        %v1631 = vadd.f32 %v1582, %v1615
        %v1632 = vadd.f32 %v1583, %v1616
        %v1633 = vadd.f32 %v1584, %v1617
        %v1634 = vadd.f32 %v1585, %v1618
        %v1635 = vadd.f32 %v1586, %v1619
        %v1636 = vadd.f32 %v1587, %v1620
        %v1637 = vpack.c.bf16 %v1622, %v1621
        %v1638 = vpack.c.bf16 %v1624, %v1623
        %v1639 = vpack.c.bf16 %v1626, %v1625
        %v1640 = vpack.c.bf16 %v1628, %v1627
        %v1641 = vpack.c.bf16 %v1630, %v1629
        %v1642 = vpack.c.bf16 %v1632, %v1631
        %v1643 = vpack.c.bf16 %v1634, %v1633
        %v1644 = vpack.c.bf16 %v1636, %v1635
        %v1645 = vld [vmem:[%s4] sm:$0xff]
        %v1646 = vld [vmem:[%s4 + $0x8] sm:$0xf]
        %v1647 = vld [vmem:[%s4 + $0xc] sm:$0xff]
        %v1648 = vld [vmem:[%s4 + $0x14] sm:$0xf]
        %v1649 = vld [vmem:[%s4 + $0x18] sm:$0xff]
        %v1650 = vld [vmem:[%s4 + $0x20] sm:$0xf]
        %v1651 = vld [vmem:[%s4 + $0x24] sm:$0xff]
        %v1652 = vld [vmem:[%s4 + $0x2c] sm:$0xf]
        %v1653 = vld [vmem:[%s4 + $0x30] sm:$0xff]
        %v1654 = vld [vmem:[%s4 + $0x38] sm:$0xf]
        %v1655 = vld [vmem:[%s4 + $0x3c] sm:$0xff]
        %v1656 = vld [vmem:[%s4 + $0x44] sm:$0xf]
        %v1657 = vld [vmem:[%s4 + $0x48] sm:$0xff]
        %v1658 = vld [vmem:[%s4 + $0x50] sm:$0xf]
        %v1659 = vld [vmem:[%s4 + $0x54] sm:$0xff]
        %v1660 = vld [vmem:[%s4 + $0x5c] sm:$0xf]
        %v1661 = vld [vmem:[%s4 + $0x60] sm:$0xff]
        %v1662 = vld [vmem:[%s4 + $0x68] sm:$0xf]
        %v1663 = vld [vmem:[%s4 + $0x6c] sm:$0xff]
        %v1664 = vld [vmem:[%s4 + $0x74] sm:$0xf]
        %v1665 = vld [vmem:[%s4 + $0x78] sm:$0xff]
        %v1666 = vld [vmem:[%s4 + $0x80] sm:$0xf]
        %v1667 = vld [vmem:[%s4 + $0x84] sm:$0xff]
        %v1668 = vld [vmem:[%s4 + $0x8c] sm:$0xf]
        %v1669 = vld [vmem:[%s4 + $0x90] sm:$0xff]
        %v1670 = vld [vmem:[%s4 + $0x98] sm:$0xf]
        %v1671 = vld [vmem:[%s4 + $0x9c] sm:$0xff]
        %v1672 = vld [vmem:[%s4 + $0xa4] sm:$0xf]
        %v1673 = vld [vmem:[%s4 + $0xa8] sm:$0xff]
        %v1674 = vld [vmem:[%s4 + $0xb0] sm:$0xf]
        %v1675 = vld [vmem:[%s4 + $0xb4] sm:$0xff]
        %v1676 = vld [vmem:[%s4 + $0xbc] sm:$0xf]
        %v1709 = vunpack.c.l.b16 %v1645
        %v1710 = vunpack.c.h.b16 %v1645
        %v1711 = vunpack.c.l.b16 %v1646
        %v1712 = vunpack.c.l.b16 %v1647
        %v1713 = vunpack.c.h.b16 %v1647
        %v1714 = vunpack.c.l.b16 %v1648
        %v1715 = vunpack.c.l.b16 %v1649
        %v1716 = vunpack.c.h.b16 %v1649
        %v1717 = vunpack.c.l.b16 %v1650
        %v1718 = vunpack.c.l.b16 %v1651
        %v1719 = vunpack.c.h.b16 %v1651
        %v1720 = vunpack.c.l.b16 %v1652
        %v1721 = vunpack.c.l.b16 %v1653
        %v1722 = vunpack.c.h.b16 %v1653
        %v1723 = vunpack.c.l.b16 %v1654
        %v1724 = vunpack.c.l.b16 %v1655
        %v1725 = vunpack.c.h.b16 %v1655
        %v1726 = vunpack.c.l.b16 %v1656
        %v1727 = vunpack.c.l.b16 %v1657
        %v1728 = vunpack.c.h.b16 %v1657
        %v1729 = vunpack.c.l.b16 %v1658
        %v1730 = vunpack.c.l.b16 %v1659
        %v1731 = vunpack.c.h.b16 %v1659
        %v1732 = vunpack.c.l.b16 %v1660
        %v1733 = vunpack.c.l.b16 %v1661
        %v1734 = vunpack.c.h.b16 %v1661
        %v1735 = vunpack.c.l.b16 %v1662
        %v1736 = vunpack.c.l.b16 %v1663
        %v1737 = vunpack.c.h.b16 %v1663
        %v1738 = vunpack.c.l.b16 %v1664
        %v1739 = vunpack.c.l.b16 %v1665
        %v1740 = vunpack.c.h.b16 %v1665
        %v1741 = vunpack.c.l.b16 %v1666
        %v1742 = vunpack.c.l.b16 %v1667
        %v1743 = vunpack.c.h.b16 %v1667
        %v1744 = vunpack.c.l.b16 %v1668
        %v1745 = vunpack.c.l.b16 %v1669
        %v1746 = vunpack.c.h.b16 %v1669
        %v1747 = vunpack.c.l.b16 %v1670
        %v1748 = vunpack.c.l.b16 %v1671
        %v1749 = vunpack.c.h.b16 %v1671
        %v1750 = vunpack.c.l.b16 %v1672
        %v1751 = vunpack.c.l.b16 %v1673
        %v1752 = vunpack.c.h.b16 %v1673
        %v1753 = vunpack.c.l.b16 %v1674
        %v1754 = vunpack.c.l.b16 %v1675
        %v1755 = vunpack.c.h.b16 %v1675
        %v1756 = vunpack.c.l.b16 %v1676
        %v1757 = vpack.c.b16 %v1712, %v1709
        %v1758 = vpack.c.b16 %v1713, %v1710
        %v1759 = vpack.c.b16 %v1714, %v1711
        %v1760 = vpack.c.b16 %v1718, %v1715
        %v1761 = vpack.c.b16 %v1719, %v1716
        %v1762 = vpack.c.b16 %v1720, %v1717
        %v1763 = vpack.c.b16 %v1724, %v1721
        %v1764 = vpack.c.b16 %v1725, %v1722
        %v1765 = vpack.c.b16 %v1726, %v1723
        %v1766 = vpack.c.b16 %v1730, %v1727
        %v1767 = vpack.c.b16 %v1731, %v1728
        %v1768 = vpack.c.b16 %v1732, %v1729
        %v1769 = vpack.c.b16 %v1736, %v1733
        %v1770 = vpack.c.b16 %v1737, %v1734
        %v1771 = vpack.c.b16 %v1738, %v1735
        %v1772 = vpack.c.b16 %v1742, %v1739
        %v1773 = vpack.c.b16 %v1743, %v1740
        %v1774 = vpack.c.b16 %v1744, %v1741
        %v1775 = vpack.c.b16 %v1748, %v1745
        %v1776 = vpack.c.b16 %v1749, %v1746
        %v1777 = vpack.c.b16 %v1750, %v1747
        %v1778 = vpack.c.b16 %v1754, %v1751
        %v1779 = vpack.c.b16 %v1755, %v1752
        %v1780 = vpack.c.b16 %v1756, %v1753
        %1805 = vmatprep.subr.bf16.mxu0 %v1758
        %1806 = vmatpush1.bf16.msra.mxu0 %v1757
        %1807 = vmatprep.subr.bf16.mxu0 %v1761
        %1808 = vmatpush1.bf16.msra.mxu0 %v1760
        %1809 = vmatprep.subr.bf16.mxu0 %v1764
        %1810 = vmatpush1.bf16.msra.mxu0 %v1763
        %1811 = vmatprep.subr.bf16.mxu0 %v1767
        %1812 = vmatpush1.bf16.msra.mxu0 %v1766
        %1813 = vmatprep.subr.bf16.mxu0 %v1770
        %1814 = vmatpush1.bf16.msra.mxu0 %v1769
        %1815 = vmatprep.subr.bf16.mxu0 %v1773
        %1816 = vmatpush1.bf16.msra.mxu0 %v1772
        %1817 = vmatprep.subr.bf16.mxu0 %v1776
        %1818 = vmatpush1.bf16.msra.mxu0 %v1775
        %1819 = vmatprep.subr.bf16.mxu0 %v1779
        %1820 = vmatpush1.bf16.msra.mxu0 %v1778
        %1821 = vmatprep.subr.bf16.mxu0 0
        %1822 = vmatpush1.bf16.msra.mxu0 0
        %1823 = vmatprep.subr.bf16.mxu0 0
        %1824 = vmatpush1.bf16.msra.mxu0 0
        %1825 = vmatprep.subr.bf16.mxu0 0
        %1826 = vmatpush1.bf16.msra.mxu0 0
        %1827 = vmatprep.subr.bf16.mxu0 0
        %1828 = vmatpush1.bf16.msra.mxu0 0
        %1829 = vmatprep.subr.bf16.mxu0 0
        %1830 = vmatpush1.bf16.msra.mxu0 0
        %1831 = vmatprep.subr.bf16.mxu0 0
        %1832 = vmatpush1.bf16.msra.mxu0 0
        %1833 = vmatprep.subr.bf16.mxu0 0
        %1834 = vmatpush1.bf16.msra.mxu0 0
        %1835 = vmatprep.subr.bf16.mxu0 0
        %1836 = vmatpush1.bf16.msra.mxu0 0
        %1837 = vmatprep.mubr.bf16.mxu0 0
        %1838 = vmatmul.mubr.bf16.gmra.mrb[0].mxu0 %v1637
        %v1839 = vpop.f32.mrb[0].mxu0
        %v1840 = vadd.f32 0.0, %v1839
        %v1841 = vpop.f32.mrb[0].mxu0
        %v1842 = vadd.f32 0.0, %v1841
        %v1843 = vpop.f32.mrb[0].mxu0
        %v1844 = vadd.f32 0.0, %v1843
        %v1845 = vpop.f32.mrb[0].mxu0
        %v1846 = vadd.f32 0.0, %v1845
        %1847 = vmatprep.mubr.bf16.mxu0 0
        %1848 = vmatmul.mubr.bf16.gmra.mrb[0].mxu0 %v1638
        %v1849 = vpop.f32.mrb[0].mxu0
        %v1850 = vadd.f32 0.0, %v1849
        %v1851 = vpop.f32.mrb[0].mxu0
        %v1852 = vadd.f32 0.0, %v1851
        %v1853 = vpop.f32.mrb[0].mxu0
        %v1854 = vadd.f32 0.0, %v1853
        %v1855 = vpop.f32.mrb[0].mxu0
        %v1856 = vadd.f32 0.0, %v1855
        %1857 = vmatprep.mubr.bf16.mxu0 0
        %1858 = vmatmul.mubr.bf16.gmra.mrb[0].mxu0 %v1639
        %v1859 = vpop.f32.mrb[0].mxu0
        %v1860 = vadd.f32 0.0, %v1859
        %v1861 = vpop.f32.mrb[0].mxu0
        %v1862 = vadd.f32 0.0, %v1861
        %v1863 = vpop.f32.mrb[0].mxu0
        %v1864 = vadd.f32 0.0, %v1863
        %v1865 = vpop.f32.mrb[0].mxu0
        %v1866 = vadd.f32 0.0, %v1865
        %1867 = vmatprep.mubr.bf16.mxu0 0
        %1868 = vmatmul.mubr.bf16.gmra.mrb[0].mxu0 %v1640
        %v1869 = vpop.f32.mrb[0].mxu0
        %v1870 = vadd.f32 0.0, %v1869
        %v1871 = vpop.f32.mrb[0].mxu0
        %v1872 = vadd.f32 0.0, %v1871
        %v1873 = vpop.f32.mrb[0].mxu0
        %v1874 = vadd.f32 0.0, %v1873
        %v1875 = vpop.f32.mrb[0].mxu0
        %v1876 = vadd.f32 0.0, %v1875
        %1877 = vmatprep.mubr.bf16.mxu0 0
        %1878 = vmatmul.mubr.bf16.gmra.mrb[0].mxu0 %v1641
        %v1879 = vpop.f32.mrb[0].mxu0
        %v1880 = vadd.f32 0.0, %v1879
        %v1881 = vpop.f32.mrb[0].mxu0
        %v1882 = vadd.f32 0.0, %v1881
        %v1883 = vpop.f32.mrb[0].mxu0
        %v1884 = vadd.f32 0.0, %v1883
        %v1885 = vpop.f32.mrb[0].mxu0
        %v1886 = vadd.f32 0.0, %v1885
        %1887 = vmatprep.mubr.bf16.mxu0 0
        %1888 = vmatmul.mubr.bf16.gmra.mrb[0].mxu0 %v1642
        %v1889 = vpop.f32.mrb[0].mxu0
        %v1890 = vadd.f32 0.0, %v1889
        %v1891 = vpop.f32.mrb[0].mxu0
        %v1892 = vadd.f32 0.0, %v1891
        %v1893 = vpop.f32.mrb[0].mxu0
        %v1894 = vadd.f32 0.0, %v1893
        %v1895 = vpop.f32.mrb[0].mxu0
        %v1896 = vadd.f32 0.0, %v1895
        %1897 = vmatprep.mubr.bf16.mxu0 0
        %1898 = vmatmul.mubr.bf16.gmra.mrb[0].mxu0 %v1643
        %v1899 = vpop.f32.mrb[0].mxu0
        %v1900 = vadd.f32 0.0, %v1899
        %v1901 = vpop.f32.mrb[0].mxu0
        %v1902 = vadd.f32 0.0, %v1901
        %v1903 = vpop.f32.mrb[0].mxu0
        %v1904 = vadd.f32 0.0, %v1903
        %v1905 = vpop.f32.mrb[0].mxu0
        %v1906 = vadd.f32 0.0, %v1905
        %1907 = vmatprep.mubr.bf16.mxu0 0
        %1908 = vmatmul.mubr.bf16.gmra.mrb[0].mxu0 %v1644
        %v1909 = vpop.f32.mrb[0].mxu0
        %v1910 = vadd.f32 0.0, %v1909
        %v1911 = vpop.f32.mrb[0].mxu0
        %v1912 = vadd.f32 0.0, %v1911
        %v1913 = vpop.f32.mrb[0].mxu0
        %v1914 = vadd.f32 0.0, %v1913
        %v1915 = vpop.f32.mrb[0].mxu0
        %v1916 = vadd.f32 0.0, %v1915
        %1917 = vdwg.mxu0
        %1918 = vmatprep.subr.bf16.mxu0 0
        %1919 = vmatpush1.bf16.msra.mxu0 %v1759
        %1920 = vmatprep.subr.bf16.mxu0 0
        %1921 = vmatpush1.bf16.msra.mxu0 %v1762
        %1922 = vmatprep.subr.bf16.mxu0 0
        %1923 = vmatpush1.bf16.msra.mxu0 %v1765
        %1924 = vmatprep.subr.bf16.mxu0 0
        %1925 = vmatpush1.bf16.msra.mxu0 %v1768
        %1926 = vmatprep.subr.bf16.mxu0 0
        %1927 = vmatpush1.bf16.msra.mxu0 %v1771
        %1928 = vmatprep.subr.bf16.mxu0 0
        %1929 = vmatpush1.bf16.msra.mxu0 %v1774
        %1930 = vmatprep.subr.bf16.mxu0 0
        %1931 = vmatpush1.bf16.msra.mxu0 %v1777
        %1932 = vmatprep.subr.bf16.mxu0 0
        %1933 = vmatpush1.bf16.msra.mxu0 %v1780
        %1934 = vmatprep.subr.bf16.mxu0 0
        %1935 = vmatpush1.bf16.msra.mxu0 0
        %1936 = vmatprep.subr.bf16.mxu0 0
        %1937 = vmatpush1.bf16.msra.mxu0 0
        %1938 = vmatprep.subr.bf16.mxu0 0
        %1939 = vmatpush1.bf16.msra.mxu0 0
        %1940 = vmatprep.subr.bf16.mxu0 0
        %1941 = vmatpush1.bf16.msra.mxu0 0
        %1942 = vmatprep.subr.bf16.mxu0 0
        %1943 = vmatpush1.bf16.msra.mxu0 0
        %1944 = vmatprep.subr.bf16.mxu0 0
        %1945 = vmatpush1.bf16.msra.mxu0 0
        %1946 = vmatprep.subr.bf16.mxu0 0
        %1947 = vmatpush1.bf16.msra.mxu0 0
        %1948 = vmatprep.subr.bf16.mxu0 0
        %1949 = vmatpush1.bf16.msra.mxu0 0
        %1950 = vmatprep.mubr.bf16.mxu0 0
        %1951 = vmatmul.mubr.bf16.gmra.mrb[0].mxu0 %v1637
        %v1952 = vpop.f32.mrb[0].mxu0
        %v1953 = vadd.f32 0.0, %v1952
        %v1954 = vpop.f32.mrb[0].mxu0
        %v1955 = vpop.f32.mrb[0].mxu0
        %v1956 = vadd.f32 0.0, %v1955
        %v1957 = vpop.f32.mrb[0].mxu0
        %1958 = vmatprep.mubr.bf16.mxu0 0
        %1959 = vmatmul.mubr.bf16.gmra.mrb[0].mxu0 %v1638
        %v1960 = vpop.f32.mrb[0].mxu0
        %v1961 = vadd.f32 0.0, %v1960
        %v1962 = vpop.f32.mrb[0].mxu0
        %v1963 = vpop.f32.mrb[0].mxu0
        %v1964 = vadd.f32 0.0, %v1963
        %v1965 = vpop.f32.mrb[0].mxu0
        %1966 = vmatprep.mubr.bf16.mxu0 0
        %1967 = vmatmul.mubr.bf16.gmra.mrb[0].mxu0 %v1639
        %v1968 = vpop.f32.mrb[0].mxu0
        %v1969 = vadd.f32 0.0, %v1968
        %v1970 = vpop.f32.mrb[0].mxu0
        %v1971 = vpop.f32.mrb[0].mxu0
        %v1972 = vadd.f32 0.0, %v1971
        %v1973 = vpop.f32.mrb[0].mxu0
        %1974 = vmatprep.mubr.bf16.mxu0 0
        %1975 = vmatmul.mubr.bf16.gmra.mrb[0].mxu0 %v1640
        %v1976 = vpop.f32.mrb[0].mxu0
        %v1977 = vadd.f32 0.0, %v1976
        %v1978 = vpop.f32.mrb[0].mxu0
        %v1979 = vpop.f32.mrb[0].mxu0
        %v1980 = vadd.f32 0.0, %v1979
        %v1981 = vpop.f32.mrb[0].mxu0
        %1982 = vmatprep.mubr.bf16.mxu0 0
        %1983 = vmatmul.mubr.bf16.gmra.mrb[0].mxu0 %v1641
        %v1984 = vpop.f32.mrb[0].mxu0
        %v1985 = vadd.f32 0.0, %v1984
        %v1986 = vpop.f32.mrb[0].mxu0
        %v1987 = vpop.f32.mrb[0].mxu0
        %v1988 = vadd.f32 0.0, %v1987
        %v1989 = vpop.f32.mrb[0].mxu0
        %1990 = vmatprep.mubr.bf16.mxu0 0
        %1991 = vmatmul.mubr.bf16.gmra.mrb[0].mxu0 %v1642
        %v1992 = vpop.f32.mrb[0].mxu0
        %v1993 = vadd.f32 0.0, %v1992
        %v1994 = vpop.f32.mrb[0].mxu0
        %v1995 = vpop.f32.mrb[0].mxu0
        %v1996 = vadd.f32 0.0, %v1995
        %v1997 = vpop.f32.mrb[0].mxu0
        %1998 = vmatprep.mubr.bf16.mxu0 0
        %1999 = vmatmul.mubr.bf16.gmra.mrb[0].mxu0 %v1643
        %v2000 = vpop.f32.mrb[0].mxu0
        %v2001 = vadd.f32 0.0, %v2000
        %v2002 = vpop.f32.mrb[0].mxu0
        %v2003 = vpop.f32.mrb[0].mxu0
        %v2004 = vadd.f32 0.0, %v2003
        %v2005 = vpop.f32.mrb[0].mxu0
        %2006 = vmatprep.mubr.bf16.mxu0 0
        %2007 = vmatmul.mubr.bf16.gmra.mrb[0].mxu0 %v1644
        %v2008 = vpop.f32.mrb[0].mxu0
        %v2009 = vadd.f32 0.0, %v2008
        %v2010 = vpop.f32.mrb[0].mxu0
        %v2011 = vpop.f32.mrb[0].mxu0
        %v2012 = vadd.f32 0.0, %v2011
        %v2013 = vpop.f32.mrb[0].mxu0
        %2014 = vdwg.mxu0
        %v2015 = vadd.f32 %v1267, %v1840
        %v2016 = vadd.f32 %v1271, %v1844
        %v2017 = vadd.f32 %v1277, %v1850
        %v2018 = vadd.f32 %v1281, %v1854
        %v2019 = vadd.f32 %v1287, %v1860
        %v2020 = vadd.f32 %v1291, %v1864
        %v2021 = vadd.f32 %v1297, %v1870
        %v2022 = vadd.f32 %v1301, %v1874
        %v2023 = vadd.f32 %v1307, %v1880
        %v2024 = vadd.f32 %v1311, %v1884
        %v2025 = vadd.f32 %v1317, %v1890
        %v2026 = vadd.f32 %v1321, %v1894
        %v2027 = vadd.f32 %v1327, %v1900
        %v2028 = vadd.f32 %v1331, %v1904
        %v2029 = vadd.f32 %v1337, %v1910
        %v2030 = vadd.f32 %v1341, %v1914
        %v2031 = vxor.u32 %v2015, 2147483648
        %v2032 = vxor.u32 %v2016, 2147483648
        %v2033 = vxor.u32 %v2017, 2147483648
        %v2034 = vxor.u32 %v2018, 2147483648
        %v2035 = vxor.u32 %v2019, 2147483648
        %v2036 = vxor.u32 %v2020, 2147483648
        %v2037 = vxor.u32 %v2021, 2147483648
        %v2038 = vxor.u32 %v2022, 2147483648
        %v2039 = vxor.u32 %v2023, 2147483648
        %v2040 = vxor.u32 %v2024, 2147483648
        %v2041 = vxor.u32 %v2025, 2147483648
        %v2042 = vxor.u32 %v2026, 2147483648
        %v2043 = vxor.u32 %v2027, 2147483648
        %v2044 = vxor.u32 %v2028, 2147483648
        %v2045 = vxor.u32 %v2029, 2147483648
        %v2046 = vxor.u32 %v2030, 2147483648
        %v2047 = vmul.f32 %v2031, 1.442695
        %v2048 = vpow.pop %v2047
        %v2049 = vmul.f32 %v2032, 1.442695
        %v2050 = vpow.pop %v2049
        %v2051 = vmul.f32 %v2033, 1.442695
        %v2052 = vpow.pop %v2051
        %v2053 = vmul.f32 %v2034, 1.442695
        %v2054 = vpow.pop %v2053
        %v2055 = vmul.f32 %v2035, 1.442695
        %v2056 = vpow.pop %v2055
        %v2057 = vmul.f32 %v2036, 1.442695
        %v2058 = vpow.pop %v2057
        %v2059 = vmul.f32 %v2037, 1.442695
        %v2060 = vpow.pop %v2059
        %v2061 = vmul.f32 %v2038, 1.442695
        %v2062 = vpow.pop %v2061
        %v2063 = vmul.f32 %v2039, 1.442695
        %v2064 = vpow.pop %v2063
        %v2065 = vmul.f32 %v2040, 1.442695
        %v2066 = vpow.pop %v2065
        %v2067 = vmul.f32 %v2041, 1.442695
        %v2068 = vpow.pop %v2067
        %v2069 = vmul.f32 %v2042, 1.442695
        %v2070 = vpow.pop %v2069
        %v2071 = vmul.f32 %v2043, 1.442695
        %v2072 = vpow.pop %v2071
        %v2073 = vmul.f32 %v2044, 1.442695
        %v2074 = vpow.pop %v2073
        %v2075 = vmul.f32 %v2045, 1.442695
        %v2076 = vpow.pop %v2075
        %v2077 = vmul.f32 %v2046, 1.442695
        %v2078 = vpow.pop %v2077
        %v2079 = vadd.f32 %v2048, 1.0
        %v2080 = vadd.f32 %v2050, 1.0
        %v2081 = vadd.f32 %v2052, 1.0
        %v2082 = vadd.f32 %v2054, 1.0
        %v2083 = vadd.f32 %v2056, 1.0
        %v2084 = vadd.f32 %v2058, 1.0
        %v2085 = vadd.f32 %v2060, 1.0
        %v2086 = vadd.f32 %v2062, 1.0
        %v2087 = vadd.f32 %v2064, 1.0
        %v2088 = vadd.f32 %v2066, 1.0
        %v2089 = vadd.f32 %v2068, 1.0
        %v2090 = vadd.f32 %v2070, 1.0
        %v2091 = vadd.f32 %v2072, 1.0
        %v2092 = vadd.f32 %v2074, 1.0
        %v2093 = vadd.f32 %v2076, 1.0
        %v2094 = vadd.f32 %v2078, 1.0
        %v2095 = vrcp.pop %v2079
        %v2096 = vmul.f32 1.0, %v2095
        %v2097 = vrcp.pop %v2080
        %v2098 = vmul.f32 1.0, %v2097
        %v2099 = vrcp.pop %v2081
        %v2100 = vmul.f32 1.0, %v2099
        %v2101 = vrcp.pop %v2082
        %v2102 = vmul.f32 1.0, %v2101
        %v2103 = vrcp.pop %v2083
        %v2104 = vmul.f32 1.0, %v2103
        %v2105 = vrcp.pop %v2084
        %v2106 = vmul.f32 1.0, %v2105
        %v2107 = vrcp.pop %v2085
        %v2108 = vmul.f32 1.0, %v2107
        %v2109 = vrcp.pop %v2086
        %v2110 = vmul.f32 1.0, %v2109
        %v2111 = vrcp.pop %v2087
        %v2112 = vmul.f32 1.0, %v2111
        %v2113 = vrcp.pop %v2088
        %v2114 = vmul.f32 1.0, %v2113
        %v2115 = vrcp.pop %v2089
        %v2116 = vmul.f32 1.0, %v2115
        %v2117 = vrcp.pop %v2090
        %v2118 = vmul.f32 1.0, %v2117
        %v2119 = vrcp.pop %v2091
        %v2120 = vmul.f32 1.0, %v2119
        %v2121 = vrcp.pop %v2092
        %v2122 = vmul.f32 1.0, %v2121
        %v2123 = vrcp.pop %v2093
        %v2124 = vmul.f32 1.0, %v2123
        %v2125 = vrcp.pop %v2094
        %v2126 = vmul.f32 1.0, %v2125
        %v2127 = vadd.f32 %v1269, %v1842
        %v2128 = vadd.f32 %v1273, %v1846
        %v2129 = vadd.f32 %v1279, %v1852
        %v2130 = vadd.f32 %v1283, %v1856
        %v2131 = vadd.f32 %v1289, %v1862
        %v2132 = vadd.f32 %v1293, %v1866
        %v2133 = vadd.f32 %v1299, %v1872
        %v2134 = vadd.f32 %v1303, %v1876
        %v2135 = vadd.f32 %v1309, %v1882
        %v2136 = vadd.f32 %v1313, %v1886
        %v2137 = vadd.f32 %v1319, %v1892
        %v2138 = vadd.f32 %v1323, %v1896
        %v2139 = vadd.f32 %v1329, %v1902
        %v2140 = vadd.f32 %v1333, %v1906
        %v2141 = vadd.f32 %v1339, %v1912
        %v2142 = vadd.f32 %v1343, %v1916
        %v2143 = vxor.u32 %v2127, 2147483648
        %v2144 = vxor.u32 %v2128, 2147483648
        %v2145 = vxor.u32 %v2129, 2147483648
        %v2146 = vxor.u32 %v2130, 2147483648
        %v2147 = vxor.u32 %v2131, 2147483648
        %v2148 = vxor.u32 %v2132, 2147483648
        %v2149 = vxor.u32 %v2133, 2147483648
        %v2150 = vxor.u32 %v2134, 2147483648
        %v2151 = vxor.u32 %v2135, 2147483648
        %v2152 = vxor.u32 %v2136, 2147483648
        %v2153 = vxor.u32 %v2137, 2147483648
        %v2154 = vxor.u32 %v2138, 2147483648
        %v2155 = vxor.u32 %v2139, 2147483648
        %v2156 = vxor.u32 %v2140, 2147483648
        %v2157 = vxor.u32 %v2141, 2147483648
        %v2158 = vxor.u32 %v2142, 2147483648
        %v2159 = vmul.f32 %v2143, 1.442695
        %v2160 = vpow.pop %v2159
        %v2161 = vmul.f32 %v2144, 1.442695
        %v2162 = vpow.pop %v2161
        %v2163 = vmul.f32 %v2145, 1.442695
        %v2164 = vpow.pop %v2163
        %v2165 = vmul.f32 %v2146, 1.442695
        %v2166 = vpow.pop %v2165
        %v2167 = vmul.f32 %v2147, 1.442695
        %v2168 = vpow.pop %v2167
        %v2169 = vmul.f32 %v2148, 1.442695
        %v2170 = vpow.pop %v2169
        %v2171 = vmul.f32 %v2149, 1.442695
        %v2172 = vpow.pop %v2171
        %v2173 = vmul.f32 %v2150, 1.442695
        %v2174 = vpow.pop %v2173
        %v2175 = vmul.f32 %v2151, 1.442695
        %v2176 = vpow.pop %v2175
        %v2177 = vmul.f32 %v2152, 1.442695
        %v2178 = vpow.pop %v2177
        %v2179 = vmul.f32 %v2153, 1.442695
        %v2180 = vpow.pop %v2179
        %v2181 = vmul.f32 %v2154, 1.442695
        %v2182 = vpow.pop %v2181
        %v2183 = vmul.f32 %v2155, 1.442695
        %v2184 = vpow.pop %v2183
        %v2185 = vmul.f32 %v2156, 1.442695
        %v2186 = vpow.pop %v2185
        %v2187 = vmul.f32 %v2157, 1.442695
        %v2188 = vpow.pop %v2187
        %v2189 = vmul.f32 %v2158, 1.442695
        %v2190 = vpow.pop %v2189
        %v2191 = vadd.f32 %v2160, 1.0
        %v2192 = vadd.f32 %v2162, 1.0
        %v2193 = vadd.f32 %v2164, 1.0
        %v2194 = vadd.f32 %v2166, 1.0
        %v2195 = vadd.f32 %v2168, 1.0
        %v2196 = vadd.f32 %v2170, 1.0
        %v2197 = vadd.f32 %v2172, 1.0
        %v2198 = vadd.f32 %v2174, 1.0
        %v2199 = vadd.f32 %v2176, 1.0
        %v2200 = vadd.f32 %v2178, 1.0
        %v2201 = vadd.f32 %v2180, 1.0
        %v2202 = vadd.f32 %v2182, 1.0
        %v2203 = vadd.f32 %v2184, 1.0
        %v2204 = vadd.f32 %v2186, 1.0
        %v2205 = vadd.f32 %v2188, 1.0
        %v2206 = vadd.f32 %v2190, 1.0
        %v2207 = vrcp.pop %v2191
        %v2208 = vmul.f32 1.0, %v2207
        %v2209 = vrcp.pop %v2192
        %v2210 = vmul.f32 1.0, %v2209
        %v2211 = vrcp.pop %v2193
        %v2212 = vmul.f32 1.0, %v2211
        %v2213 = vrcp.pop %v2194
        %v2214 = vmul.f32 1.0, %v2213
        %v2215 = vrcp.pop %v2195
        %v2216 = vmul.f32 1.0, %v2215
        %v2217 = vrcp.pop %v2196
        %v2218 = vmul.f32 1.0, %v2217
        %v2219 = vrcp.pop %v2197
        %v2220 = vmul.f32 1.0, %v2219
        %v2221 = vrcp.pop %v2198
        %v2222 = vmul.f32 1.0, %v2221
        %v2223 = vrcp.pop %v2199
        %v2224 = vmul.f32 1.0, %v2223
        %v2225 = vrcp.pop %v2200
        %v2226 = vmul.f32 1.0, %v2225
        %v2227 = vrcp.pop %v2201
        %v2228 = vmul.f32 1.0, %v2227
        %v2229 = vrcp.pop %v2202
        %v2230 = vmul.f32 1.0, %v2229
        %v2231 = vrcp.pop %v2203
        %v2232 = vmul.f32 1.0, %v2231
        %v2233 = vrcp.pop %v2204
        %v2234 = vmul.f32 1.0, %v2233
        %v2235 = vrcp.pop %v2205
        %v2236 = vmul.f32 1.0, %v2235
        %v2237 = vrcp.pop %v2206
        %v2238 = vmul.f32 1.0, %v2237
        %v2239 = vadd.f32 %v1380, %v1953
        %v2240 = vadd.f32 %v1384, %v1956
        %v2241 = vadd.f32 %v1390, %v1961
        %v2242 = vadd.f32 %v1394, %v1964
        %v2243 = vadd.f32 %v1400, %v1969
        %v2244 = vadd.f32 %v1404, %v1972
        %v2245 = vadd.f32 %v1410, %v1977
        %v2246 = vadd.f32 %v1414, %v1980
        %v2247 = vadd.f32 %v1420, %v1985
        %v2248 = vadd.f32 %v1424, %v1988
        %v2249 = vadd.f32 %v1430, %v1993
        %v2250 = vadd.f32 %v1434, %v1996
        %v2251 = vadd.f32 %v1440, %v2001
        %v2252 = vadd.f32 %v1444, %v2004
        %v2253 = vadd.f32 %v1450, %v2009
        %v2254 = vadd.f32 %v1454, %v2012
        %v2255 = vtanh.pop %v2239
        %v2256 = vtanh.pop %v2240
        %v2257 = vtanh.pop %v2241
        %v2258 = vtanh.pop %v2242
        %v2259 = vtanh.pop %v2243
        %v2260 = vtanh.pop %v2244
        %v2261 = vtanh.pop %v2245
        %v2262 = vtanh.pop %v2246
        %v2263 = vtanh.pop %v2247
        %v2264 = vtanh.pop %v2248
        %v2265 = vtanh.pop %v2249
        %v2266 = vtanh.pop %v2250
        %v2267 = vtanh.pop %v2251
        %v2268 = vtanh.pop %v2252
        %v2269 = vtanh.pop %v2253
        %v2270 = vtanh.pop %v2254
        %v2271 = vld [vmem:[%s881] sm:$0xf]
        %v2272 = vld [vmem:[%s881 + $0x4] sm:$0xf]
        %v2273 = vld [vmem:[%s881 + $0x8] sm:$0xf]
        %v2274 = vld [vmem:[%s881 + $0xc] sm:$0xf]
        %v2275 = vld [vmem:[%s881 + $0x10] sm:$0xf]
        %v2276 = vld [vmem:[%s881 + $0x14] sm:$0xf]
        %v2277 = vld [vmem:[%s881 + $0x18] sm:$0xf]
        %v2278 = vld [vmem:[%s881 + $0x1c] sm:$0xf]
        %v2279 = vld [vmem:[%s881 + $0x20] sm:$0xf]
        %v2280 = vld [vmem:[%s881 + $0x24] sm:$0xf]
        %v2281 = vld [vmem:[%s881 + $0x28] sm:$0xf]
        %v2282 = vld [vmem:[%s881 + $0x2c] sm:$0xf]
        %v2283 = vld [vmem:[%s881 + $0x30] sm:$0xf]
        %v2284 = vld [vmem:[%s881 + $0x34] sm:$0xf]
        %v2285 = vld [vmem:[%s881 + $0x38] sm:$0xf]
        %v2286 = vld [vmem:[%s881 + $0x3c] sm:$0xf]
        %v2287 = vld [vmem:[%s881 + $0x40] sm:$0xf]
        %v2288 = vld [vmem:[%s881 + $0x44] sm:$0xf]
        %v2289 = vld [vmem:[%s881 + $0x48] sm:$0xf]
        %v2290 = vld [vmem:[%s881 + $0x4c] sm:$0xf]
        %v2291 = vld [vmem:[%s881 + $0x50] sm:$0xf]
        %v2292 = vld [vmem:[%s881 + $0x54] sm:$0xf]
        %v2293 = vld [vmem:[%s881 + $0x58] sm:$0xf]
        %v2294 = vld [vmem:[%s881 + $0x5c] sm:$0xf]
        %v2295 = vld [vmem:[%s881 + $0x60] sm:$0xf]
        %v2296 = vld [vmem:[%s881 + $0x64] sm:$0xf]
        %v2297 = vld [vmem:[%s881 + $0x68] sm:$0xf]
        %v2298 = vld [vmem:[%s881 + $0x6c] sm:$0xf]
        %v2299 = vld [vmem:[%s881 + $0x70] sm:$0xf]
        %v2300 = vld [vmem:[%s881 + $0x74] sm:$0xf]
        %v2301 = vld [vmem:[%s881 + $0x78] sm:$0xf]
        %v2302 = vld [vmem:[%s881 + $0x7c] sm:$0xf]
        %v2303 = vld [vmem:[%s881 + $0x80] sm:$0xf]
        %v2304 = vld [vmem:[%s881 + $0x84] sm:$0xf]
        %v2305 = vld [vmem:[%s881 + $0x88] sm:$0xf]
        %v2306 = vld [vmem:[%s881 + $0x8c] sm:$0xf]
        %v2307 = vld [vmem:[%s881 + $0x90] sm:$0xf]
        %v2308 = vld [vmem:[%s881 + $0x94] sm:$0xf]
        %v2309 = vld [vmem:[%s881 + $0x98] sm:$0xf]
        %v2310 = vld [vmem:[%s881 + $0x9c] sm:$0xf]
        %v2311 = vld [vmem:[%s881 + $0xa0] sm:$0xf]
        %v2312 = vld [vmem:[%s881 + $0xa4] sm:$0xf]
        %v2313 = vld [vmem:[%s881 + $0xa8] sm:$0xf]
        %v2314 = vld [vmem:[%s881 + $0xac] sm:$0xf]
        %v2315 = vld [vmem:[%s881 + $0xb0] sm:$0xf]
        %v2316 = vld [vmem:[%s881 + $0xb4] sm:$0xf]
        %v2317 = vld [vmem:[%s881 + $0xb8] sm:$0xf]
        %v2318 = vld [vmem:[%s881 + $0xbc] sm:$0xf]
        %v2319 = vld [vmem:[%s881 + $0xc0] sm:$0xf]
        %v2320 = vld [vmem:[%s881 + $0xc4] sm:$0xf]
        %v2321 = vld [vmem:[%s881 + $0xc8] sm:$0xf]
        %v2322 = vld [vmem:[%s881 + $0xcc] sm:$0xf]
        %v2323 = vld [vmem:[%s881 + $0xd0] sm:$0xf]
        %v2324 = vld [vmem:[%s881 + $0xd4] sm:$0xf]
        %v2325 = vld [vmem:[%s881 + $0xd8] sm:$0xf]
        %v2326 = vld [vmem:[%s881 + $0xdc] sm:$0xf]
        %v2327 = vld [vmem:[%s881 + $0xe0] sm:$0xf]
        %v2328 = vld [vmem:[%s881 + $0xe4] sm:$0xf]
        %v2329 = vld [vmem:[%s881 + $0xe8] sm:$0xf]
        %v2330 = vld [vmem:[%s881 + $0xec] sm:$0xf]
        %v2331 = vld [vmem:[%s881 + $0xf0] sm:$0xf]
        %v2332 = vld [vmem:[%s881 + $0xf4] sm:$0xf]
        %v2333 = vld [vmem:[%s881 + $0xf8] sm:$0xf]
        %v2334 = vld [vmem:[%s881 + $0xfc] sm:$0xf]
        %v2335 = vld [vmem:[%s5] sm:$0xf]
        %v2336 = vld [vmem:[%s5 + $0x4] sm:$0xf]
        %v2337 = vld [vmem:[%s5 + $0x8] sm:$0xf]
        %v2338 = vld [vmem:[%s5 + $0xc] sm:$0xf]
        %v2339 = vld [vmem:[%s5 + $0x10] sm:$0xf]
        %v2340 = vld [vmem:[%s5 + $0x14] sm:$0xf]
        %v2341 = vld [vmem:[%s5 + $0x18] sm:$0xf]
        %v2342 = vld [vmem:[%s5 + $0x1c] sm:$0xf]
        %v2343 = vld [vmem:[%s5 + $0x20] sm:$0xf]
        %v2344 = vld [vmem:[%s5 + $0x24] sm:$0xf]
        %v2345 = vld [vmem:[%s5 + $0x28] sm:$0xf]
        %v2346 = vld [vmem:[%s5 + $0x2c] sm:$0xf]
        %v2347 = vld [vmem:[%s5 + $0x30] sm:$0xf]
        %v2348 = vld [vmem:[%s5 + $0x34] sm:$0xf]
        %v2349 = vld [vmem:[%s5 + $0x38] sm:$0xf]
        %v2350 = vld [vmem:[%s5 + $0x3c] sm:$0xf]
        %v2415 = vunpack.c.l.b16 %v2271
        %v2416 = vunpack.c.l.b16 %v2272
        %v2417 = vunpack.c.l.b16 %v2273
        %v2418 = vunpack.c.l.b16 %v2274
        %v2419 = vunpack.c.l.b16 %v2275
        %v2420 = vunpack.c.l.b16 %v2276
        %v2421 = vunpack.c.l.b16 %v2277
        %v2422 = vunpack.c.l.b16 %v2278
        %v2423 = vunpack.c.l.b16 %v2279
        %v2424 = vunpack.c.l.b16 %v2280
        %v2425 = vunpack.c.l.b16 %v2281
        %v2426 = vunpack.c.l.b16 %v2282
        %v2427 = vunpack.c.l.b16 %v2283
        %v2428 = vunpack.c.l.b16 %v2284
        %v2429 = vunpack.c.l.b16 %v2285
        %v2430 = vunpack.c.l.b16 %v2286
        %v2431 = vunpack.c.l.b16 %v2287
        %v2432 = vunpack.c.l.b16 %v2288
        %v2433 = vunpack.c.l.b16 %v2289
        %v2434 = vunpack.c.l.b16 %v2290
        %v2435 = vunpack.c.l.b16 %v2291
        %v2436 = vunpack.c.l.b16 %v2292
        %v2437 = vunpack.c.l.b16 %v2293
        %v2438 = vunpack.c.l.b16 %v2294
        %v2439 = vunpack.c.l.b16 %v2295
        %v2440 = vunpack.c.l.b16 %v2296
        %v2441 = vunpack.c.l.b16 %v2297
        %v2442 = vunpack.c.l.b16 %v2298
        %v2443 = vunpack.c.l.b16 %v2299
        %v2444 = vunpack.c.l.b16 %v2300
        %v2445 = vunpack.c.l.b16 %v2301
        %v2446 = vunpack.c.l.b16 %v2302
        %v2447 = vunpack.c.l.b16 %v2303
        %v2448 = vunpack.c.l.b16 %v2304
        %v2449 = vunpack.c.l.b16 %v2305
        %v2450 = vunpack.c.l.b16 %v2306
        %v2451 = vunpack.c.l.b16 %v2307
        %v2452 = vunpack.c.l.b16 %v2308
        %v2453 = vunpack.c.l.b16 %v2309
        %v2454 = vunpack.c.l.b16 %v2310
        %v2455 = vunpack.c.l.b16 %v2311
        %v2456 = vunpack.c.l.b16 %v2312
        %v2457 = vunpack.c.l.b16 %v2313
        %v2458 = vunpack.c.l.b16 %v2314
        %v2459 = vunpack.c.l.b16 %v2315
        %v2460 = vunpack.c.l.b16 %v2316
        %v2461 = vunpack.c.l.b16 %v2317
        %v2462 = vunpack.c.l.b16 %v2318
        %v2463 = vunpack.c.l.b16 %v2319
        %v2464 = vunpack.c.l.b16 %v2320
        %v2465 = vunpack.c.l.b16 %v2321
        %v2466 = vunpack.c.l.b16 %v2322
        %v2467 = vunpack.c.l.b16 %v2323
        %v2468 = vunpack.c.l.b16 %v2324
        %v2469 = vunpack.c.l.b16 %v2325
        %v2470 = vunpack.c.l.b16 %v2326
        %v2471 = vunpack.c.l.b16 %v2327
        %v2472 = vunpack.c.l.b16 %v2328
        %v2473 = vunpack.c.l.b16 %v2329
        %v2474 = vunpack.c.l.b16 %v2330
        %v2475 = vunpack.c.l.b16 %v2331
        %v2476 = vunpack.c.l.b16 %v2332
        %v2477 = vunpack.c.l.b16 %v2333
        %v2478 = vunpack.c.l.b16 %v2334
        %v2479 = vpack.c.b16 %v2416, %v2415
        %v2480 = vpack.c.b16 %v2418, %v2417
        %v2481 = vpack.c.b16 %v2420, %v2419
        %v2482 = vpack.c.b16 %v2422, %v2421
        %v2483 = vpack.c.b16 %v2424, %v2423
        %v2484 = vpack.c.b16 %v2426, %v2425
        %v2485 = vpack.c.b16 %v2428, %v2427
        %v2486 = vpack.c.b16 %v2430, %v2429
        %v2487 = vpack.c.b16 %v2432, %v2431
        %v2488 = vpack.c.b16 %v2434, %v2433
        %v2489 = vpack.c.b16 %v2436, %v2435
        %v2490 = vpack.c.b16 %v2438, %v2437
        %v2491 = vpack.c.b16 %v2440, %v2439
        %v2492 = vpack.c.b16 %v2442, %v2441
        %v2493 = vpack.c.b16 %v2444, %v2443
        %v2494 = vpack.c.b16 %v2446, %v2445
        %v2495 = vpack.c.b16 %v2448, %v2447
        %v2496 = vpack.c.b16 %v2450, %v2449
        %v2497 = vpack.c.b16 %v2452, %v2451
        %v2498 = vpack.c.b16 %v2454, %v2453
        %v2499 = vpack.c.b16 %v2456, %v2455
        %v2500 = vpack.c.b16 %v2458, %v2457
        %v2501 = vpack.c.b16 %v2460, %v2459
        %v2502 = vpack.c.b16 %v2462, %v2461
        %v2503 = vpack.c.b16 %v2464, %v2463
        %v2504 = vpack.c.b16 %v2466, %v2465
        %v2505 = vpack.c.b16 %v2468, %v2467
        %v2506 = vpack.c.b16 %v2470, %v2469
        %v2507 = vpack.c.b16 %v2472, %v2471
        %v2508 = vpack.c.b16 %v2474, %v2473
        %v2509 = vpack.c.b16 %v2476, %v2475
        %v2510 = vpack.c.b16 %v2478, %v2477
        %v2559 = vunpack.c.l.b16 %v2335
        %v2560 = vunpack.c.l.b16 %v2336
        %v2561 = vunpack.c.l.b16 %v2337
        %v2562 = vunpack.c.l.b16 %v2338
        %v2563 = vunpack.c.l.b16 %v2339
        %v2564 = vunpack.c.l.b16 %v2340
        %v2565 = vunpack.c.l.b16 %v2341
        %v2566 = vunpack.c.l.b16 %v2342
        %v2567 = vunpack.c.l.b16 %v2343
        %v2568 = vunpack.c.l.b16 %v2344
        %v2569 = vunpack.c.l.b16 %v2345
        %v2570 = vunpack.c.l.b16 %v2346
        %v2571 = vunpack.c.l.b16 %v2347
        %v2572 = vunpack.c.l.b16 %v2348
        %v2573 = vunpack.c.l.b16 %v2349
        %v2574 = vunpack.c.l.b16 %v2350
        %v2575 = vpack.c.b16 %v2560, %v2559
        %v2576 = vpack.c.b16 %v2562, %v2561
        %v2577 = vpack.c.b16 %v2564, %v2563
        %v2578 = vpack.c.b16 %v2566, %v2565
        %v2579 = vpack.c.b16 %v2568, %v2567
        %v2580 = vpack.c.b16 %v2570, %v2569
        %v2581 = vpack.c.b16 %v2572, %v2571
        %v2582 = vpack.c.b16 %v2574, %v2573
        %2591 = vmatprep.subr.bf16.mxu0 0
        %2592 = vmatpush1.bf16.msra.mxu0 %v2575
        %2593 = vmatprep.subr.bf16.mxu0 0
        %2594 = vmatpush1.bf16.msra.mxu0 %v2576
        %2595 = vmatprep.subr.bf16.mxu0 0
        %2596 = vmatpush1.bf16.msra.mxu0 %v2577
        %2597 = vmatprep.subr.bf16.mxu0 0
        %2598 = vmatpush1.bf16.msra.mxu0 %v2578
        %2599 = vmatprep.subr.bf16.mxu0 0
        %2600 = vmatpush1.bf16.msra.mxu0 %v2579
        %2601 = vmatprep.subr.bf16.mxu0 0
        %2602 = vmatpush1.bf16.msra.mxu0 %v2580
        %2603 = vmatprep.subr.bf16.mxu0 0
        %2604 = vmatpush1.bf16.msra.mxu0 %v2581
        %2605 = vmatprep.subr.bf16.mxu0 0
        %2606 = vmatpush1.bf16.msra.mxu0 %v2582
        %2607 = vmatprep.subr.bf16.mxu0 0
        %2608 = vmatpush1.bf16.msra.mxu0 0
        %2609 = vmatprep.subr.bf16.mxu0 0
        %2610 = vmatpush1.bf16.msra.mxu0 0
        %2611 = vmatprep.subr.bf16.mxu0 0
        %2612 = vmatpush1.bf16.msra.mxu0 0
        %2613 = vmatprep.subr.bf16.mxu0 0
        %2614 = vmatpush1.bf16.msra.mxu0 0
        %2615 = vmatprep.subr.bf16.mxu0 0
        %2616 = vmatpush1.bf16.msra.mxu0 0
        %2617 = vmatprep.subr.bf16.mxu0 0
        %2618 = vmatpush1.bf16.msra.mxu0 0
        %2619 = vmatprep.subr.bf16.mxu0 0
        %2620 = vmatpush1.bf16.msra.mxu0 0
        %2621 = vmatprep.subr.bf16.mxu0 0
        %2622 = vmatpush1.bf16.msra.mxu0 0
        %2623 = vmatprep.mubr.bf16.mxu0 0
        %2624 = vmatmul.mubr.bf16.gmra.mrb[0].mxu0 %v2479
        %v2625 = vpop.f32.mrb[0].mxu0
        %v2626 = vadd.f32 0.0, %v2625
        %v2627 = vpop.f32.mrb[0].mxu0
        %v2628 = vpop.f32.mrb[0].mxu0
        %v2629 = vadd.f32 0.0, %v2628
        %v2630 = vpop.f32.mrb[0].mxu0
        %2631 = vmatprep.mubr.bf16.mxu0 0
        %2632 = vmatmul.mubr.bf16.gmra.mrb[0].mxu0 %v2480
        %v2633 = vpop.f32.mrb[0].mxu0
        %v2634 = vadd.f32 0.0, %v2633
        %v2635 = vpop.f32.mrb[0].mxu0
        %v2636 = vpop.f32.mrb[0].mxu0
        %v2637 = vadd.f32 0.0, %v2636
        %v2638 = vpop.f32.mrb[0].mxu0
        %2639 = vmatprep.mubr.bf16.mxu0 0
        %2640 = vmatmul.mubr.bf16.gmra.mrb[0].mxu0 %v2481
        %v2641 = vpop.f32.mrb[0].mxu0
        %v2642 = vadd.f32 0.0, %v2641
        %v2643 = vpop.f32.mrb[0].mxu0
        %v2644 = vpop.f32.mrb[0].mxu0
        %v2645 = vadd.f32 0.0, %v2644
        %v2646 = vpop.f32.mrb[0].mxu0
        %2647 = vmatprep.mubr.bf16.mxu0 0
        %2648 = vmatmul.mubr.bf16.gmra.mrb[0].mxu0 %v2482
        %v2649 = vpop.f32.mrb[0].mxu0
        %v2650 = vadd.f32 0.0, %v2649
        %v2651 = vpop.f32.mrb[0].mxu0
        %v2652 = vpop.f32.mrb[0].mxu0
        %v2653 = vadd.f32 0.0, %v2652
        %v2654 = vpop.f32.mrb[0].mxu0
        %2655 = vmatprep.mubr.bf16.mxu0 0
        %2656 = vmatmul.mubr.bf16.gmra.mrb[0].mxu0 %v2483
        %v2657 = vpop.f32.mrb[0].mxu0
        %v2658 = vadd.f32 0.0, %v2657
        %v2659 = vpop.f32.mrb[0].mxu0
        %v2660 = vpop.f32.mrb[0].mxu0
        %v2661 = vadd.f32 0.0, %v2660
        %v2662 = vpop.f32.mrb[0].mxu0
        %2663 = vmatprep.mubr.bf16.mxu0 0
        %2664 = vmatmul.mubr.bf16.gmra.mrb[0].mxu0 %v2484
        %v2665 = vpop.f32.mrb[0].mxu0
        %v2666 = vadd.f32 0.0, %v2665
        %v2667 = vpop.f32.mrb[0].mxu0
        %v2668 = vpop.f32.mrb[0].mxu0
        %v2669 = vadd.f32 0.0, %v2668
        %v2670 = vpop.f32.mrb[0].mxu0
        %2671 = vmatprep.mubr.bf16.mxu0 0
        %2672 = vmatmul.mubr.bf16.gmra.mrb[0].mxu0 %v2485
        %v2673 = vpop.f32.mrb[0].mxu0
        %v2674 = vadd.f32 0.0, %v2673
        %v2675 = vpop.f32.mrb[0].mxu0
        %v2676 = vpop.f32.mrb[0].mxu0
        %v2677 = vadd.f32 0.0, %v2676
        %v2678 = vpop.f32.mrb[0].mxu0
        %2679 = vmatprep.mubr.bf16.mxu0 0
        %2680 = vmatmul.mubr.bf16.gmra.mrb[0].mxu0 %v2486
        %v2681 = vpop.f32.mrb[0].mxu0
        %v2682 = vadd.f32 0.0, %v2681
        %v2683 = vpop.f32.mrb[0].mxu0
        %v2684 = vpop.f32.mrb[0].mxu0
        %v2685 = vadd.f32 0.0, %v2684
        %v2686 = vpop.f32.mrb[0].mxu0
        %2687 = vmatprep.mubr.bf16.mxu0 0
        %2688 = vmatmul.mubr.bf16.gmra.mrb[0].mxu0 %v2487
        %v2689 = vpop.f32.mrb[0].mxu0
        %v2690 = vadd.f32 0.0, %v2689
        %v2691 = vpop.f32.mrb[0].mxu0
        %v2692 = vpop.f32.mrb[0].mxu0
        %v2693 = vadd.f32 0.0, %v2692
        %v2694 = vpop.f32.mrb[0].mxu0
        %2695 = vmatprep.mubr.bf16.mxu0 0
        %2696 = vmatmul.mubr.bf16.gmra.mrb[0].mxu0 %v2488
        %v2697 = vpop.f32.mrb[0].mxu0
        %v2698 = vadd.f32 0.0, %v2697
        %v2699 = vpop.f32.mrb[0].mxu0
        %v2700 = vpop.f32.mrb[0].mxu0
        %v2701 = vadd.f32 0.0, %v2700
        %v2702 = vpop.f32.mrb[0].mxu0
        %2703 = vmatprep.mubr.bf16.mxu0 0
        %2704 = vmatmul.mubr.bf16.gmra.mrb[0].mxu0 %v2489
        %v2705 = vpop.f32.mrb[0].mxu0
        %v2706 = vadd.f32 0.0, %v2705
        %v2707 = vpop.f32.mrb[0].mxu0
        %v2708 = vpop.f32.mrb[0].mxu0
        %v2709 = vadd.f32 0.0, %v2708
        %v2710 = vpop.f32.mrb[0].mxu0
        %2711 = vmatprep.mubr.bf16.mxu0 0
        %2712 = vmatmul.mubr.bf16.gmra.mrb[0].mxu0 %v2490
        %v2713 = vpop.f32.mrb[0].mxu0
        %v2714 = vadd.f32 0.0, %v2713
        %v2715 = vpop.f32.mrb[0].mxu0
        %v2716 = vpop.f32.mrb[0].mxu0
        %v2717 = vadd.f32 0.0, %v2716
        %v2718 = vpop.f32.mrb[0].mxu0
        %2719 = vmatprep.mubr.bf16.mxu0 0
        %2720 = vmatmul.mubr.bf16.gmra.mrb[0].mxu0 %v2491
        %v2721 = vpop.f32.mrb[0].mxu0
        %v2722 = vadd.f32 0.0, %v2721
        %v2723 = vpop.f32.mrb[0].mxu0
        %v2724 = vpop.f32.mrb[0].mxu0
        %v2725 = vadd.f32 0.0, %v2724
        %v2726 = vpop.f32.mrb[0].mxu0
        %2727 = vmatprep.mubr.bf16.mxu0 0
        %2728 = vmatmul.mubr.bf16.gmra.mrb[0].mxu0 %v2492
        %v2729 = vpop.f32.mrb[0].mxu0
        %v2730 = vadd.f32 0.0, %v2729
        %v2731 = vpop.f32.mrb[0].mxu0
        %v2732 = vpop.f32.mrb[0].mxu0
        %v2733 = vadd.f32 0.0, %v2732
        %v2734 = vpop.f32.mrb[0].mxu0
        %2735 = vmatprep.mubr.bf16.mxu0 0
        %2736 = vmatmul.mubr.bf16.gmra.mrb[0].mxu0 %v2493
        %v2737 = vpop.f32.mrb[0].mxu0
        %v2738 = vadd.f32 0.0, %v2737
        %v2739 = vpop.f32.mrb[0].mxu0
        %v2740 = vpop.f32.mrb[0].mxu0
        %v2741 = vadd.f32 0.0, %v2740
        %v2742 = vpop.f32.mrb[0].mxu0
        %2743 = vmatprep.mubr.bf16.mxu0 0
        %2744 = vmatmul.mubr.bf16.gmra.mrb[0].mxu0 %v2494
        %v2745 = vpop.f32.mrb[0].mxu0
        %v2746 = vadd.f32 0.0, %v2745
        %v2747 = vpop.f32.mrb[0].mxu0
        %v2748 = vpop.f32.mrb[0].mxu0
        %v2749 = vadd.f32 0.0, %v2748
        %v2750 = vpop.f32.mrb[0].mxu0
        %2751 = vmatprep.mubr.bf16.mxu0 0
        %2752 = vmatmul.mubr.bf16.gmra.mrb[0].mxu0 %v2495
        %v2753 = vpop.f32.mrb[0].mxu0
        %v2754 = vadd.f32 0.0, %v2753
        %v2755 = vpop.f32.mrb[0].mxu0
        %v2756 = vpop.f32.mrb[0].mxu0
        %v2757 = vadd.f32 0.0, %v2756
        %v2758 = vpop.f32.mrb[0].mxu0
        %2759 = vmatprep.mubr.bf16.mxu0 0
        %2760 = vmatmul.mubr.bf16.gmra.mrb[0].mxu0 %v2496
        %v2761 = vpop.f32.mrb[0].mxu0
        %v2762 = vadd.f32 0.0, %v2761
        %v2763 = vpop.f32.mrb[0].mxu0
        %v2764 = vpop.f32.mrb[0].mxu0
        %v2765 = vadd.f32 0.0, %v2764
        %v2766 = vpop.f32.mrb[0].mxu0
        %2767 = vmatprep.mubr.bf16.mxu0 0
        %2768 = vmatmul.mubr.bf16.gmra.mrb[0].mxu0 %v2497
        %v2769 = vpop.f32.mrb[0].mxu0
        %v2770 = vadd.f32 0.0, %v2769
        %v2771 = vpop.f32.mrb[0].mxu0
        %v2772 = vpop.f32.mrb[0].mxu0
        %v2773 = vadd.f32 0.0, %v2772
        %v2774 = vpop.f32.mrb[0].mxu0
        %2775 = vmatprep.mubr.bf16.mxu0 0
        %2776 = vmatmul.mubr.bf16.gmra.mrb[0].mxu0 %v2498
        %v2777 = vpop.f32.mrb[0].mxu0
        %v2778 = vadd.f32 0.0, %v2777
        %v2779 = vpop.f32.mrb[0].mxu0
        %v2780 = vpop.f32.mrb[0].mxu0
        %v2781 = vadd.f32 0.0, %v2780
        %v2782 = vpop.f32.mrb[0].mxu0
        %2783 = vmatprep.mubr.bf16.mxu0 0
        %2784 = vmatmul.mubr.bf16.gmra.mrb[0].mxu0 %v2499
        %v2785 = vpop.f32.mrb[0].mxu0
        %v2786 = vadd.f32 0.0, %v2785
        %v2787 = vpop.f32.mrb[0].mxu0
        %v2788 = vpop.f32.mrb[0].mxu0
        %v2789 = vadd.f32 0.0, %v2788
        %v2790 = vpop.f32.mrb[0].mxu0
        %2791 = vmatprep.mubr.bf16.mxu0 0
        %2792 = vmatmul.mubr.bf16.gmra.mrb[0].mxu0 %v2500
        %v2793 = vpop.f32.mrb[0].mxu0
        %v2794 = vadd.f32 0.0, %v2793
        %v2795 = vpop.f32.mrb[0].mxu0
        %v2796 = vpop.f32.mrb[0].mxu0
        %v2797 = vadd.f32 0.0, %v2796
        %v2798 = vpop.f32.mrb[0].mxu0
        %2799 = vmatprep.mubr.bf16.mxu0 0
        %2800 = vmatmul.mubr.bf16.gmra.mrb[0].mxu0 %v2501
        %v2801 = vpop.f32.mrb[0].mxu0
        %v2802 = vadd.f32 0.0, %v2801
        %v2803 = vpop.f32.mrb[0].mxu0
        %v2804 = vpop.f32.mrb[0].mxu0
        %v2805 = vadd.f32 0.0, %v2804
        %v2806 = vpop.f32.mrb[0].mxu0
        %2807 = vmatprep.mubr.bf16.mxu0 0
        %2808 = vmatmul.mubr.bf16.gmra.mrb[0].mxu0 %v2502
        %v2809 = vpop.f32.mrb[0].mxu0
        %v2810 = vadd.f32 0.0, %v2809
        %v2811 = vpop.f32.mrb[0].mxu0
        %v2812 = vpop.f32.mrb[0].mxu0
        %v2813 = vadd.f32 0.0, %v2812
        %v2814 = vpop.f32.mrb[0].mxu0
        %2815 = vmatprep.mubr.bf16.mxu0 0
        %2816 = vmatmul.mubr.bf16.gmra.mrb[0].mxu0 %v2503
        %v2817 = vpop.f32.mrb[0].mxu0
        %v2818 = vadd.f32 0.0, %v2817
        %v2819 = vpop.f32.mrb[0].mxu0
        %v2820 = vpop.f32.mrb[0].mxu0
        %v2821 = vadd.f32 0.0, %v2820
        %v2822 = vpop.f32.mrb[0].mxu0
        %2823 = vmatprep.mubr.bf16.mxu0 0
        %2824 = vmatmul.mubr.bf16.gmra.mrb[0].mxu0 %v2504
        %v2825 = vpop.f32.mrb[0].mxu0
        %v2826 = vadd.f32 0.0, %v2825
        %v2827 = vpop.f32.mrb[0].mxu0
        %v2828 = vpop.f32.mrb[0].mxu0
        %v2829 = vadd.f32 0.0, %v2828
        %v2830 = vpop.f32.mrb[0].mxu0
        %2831 = vmatprep.mubr.bf16.mxu0 0
        %2832 = vmatmul.mubr.bf16.gmra.mrb[0].mxu0 %v2505
        %v2833 = vpop.f32.mrb[0].mxu0
        %v2834 = vadd.f32 0.0, %v2833
        %v2835 = vpop.f32.mrb[0].mxu0
        %v2836 = vpop.f32.mrb[0].mxu0
        %v2837 = vadd.f32 0.0, %v2836
        %v2838 = vpop.f32.mrb[0].mxu0
        %2839 = vmatprep.mubr.bf16.mxu0 0
        %2840 = vmatmul.mubr.bf16.gmra.mrb[0].mxu0 %v2506
        %v2841 = vpop.f32.mrb[0].mxu0
        %v2842 = vadd.f32 0.0, %v2841
        %v2843 = vpop.f32.mrb[0].mxu0
        %v2844 = vpop.f32.mrb[0].mxu0
        %v2845 = vadd.f32 0.0, %v2844
        %v2846 = vpop.f32.mrb[0].mxu0
        %2847 = vmatprep.mubr.bf16.mxu0 0
        %2848 = vmatmul.mubr.bf16.gmra.mrb[0].mxu0 %v2507
        %v2849 = vpop.f32.mrb[0].mxu0
        %v2850 = vadd.f32 0.0, %v2849
        %v2851 = vpop.f32.mrb[0].mxu0
        %v2852 = vpop.f32.mrb[0].mxu0
        %v2853 = vadd.f32 0.0, %v2852
        %v2854 = vpop.f32.mrb[0].mxu0
        %2855 = vmatprep.mubr.bf16.mxu0 0
        %2856 = vmatmul.mubr.bf16.gmra.mrb[0].mxu0 %v2508
        %v2857 = vpop.f32.mrb[0].mxu0
        %v2858 = vadd.f32 0.0, %v2857
        %v2859 = vpop.f32.mrb[0].mxu0
        %v2860 = vpop.f32.mrb[0].mxu0
        %v2861 = vadd.f32 0.0, %v2860
        %v2862 = vpop.f32.mrb[0].mxu0
        %2863 = vmatprep.mubr.bf16.mxu0 0
        %2864 = vmatmul.mubr.bf16.gmra.mrb[0].mxu0 %v2509
        %v2865 = vpop.f32.mrb[0].mxu0
        %v2866 = vadd.f32 0.0, %v2865
        %v2867 = vpop.f32.mrb[0].mxu0
        %v2868 = vpop.f32.mrb[0].mxu0
        %v2869 = vadd.f32 0.0, %v2868
        %v2870 = vpop.f32.mrb[0].mxu0
        %2871 = vmatprep.mubr.bf16.mxu0 0
        %2872 = vmatmul.mubr.bf16.gmra.mrb[0].mxu0 %v2510
        %v2873 = vpop.f32.mrb[0].mxu0
        %v2874 = vadd.f32 0.0, %v2873
        %v2875 = vpop.f32.mrb[0].mxu0
        %v2876 = vpop.f32.mrb[0].mxu0
        %v2877 = vadd.f32 0.0, %v2876
        %v2878 = vpop.f32.mrb[0].mxu0
        %2879 = vdwg.mxu0
        %v2880 = vadd.f32 %v1382, %v2626
        %v2881 = vadd.f32 %v1386, %v2629
        %v2882 = vadd.f32 %v1392, %v2634
        %v2883 = vadd.f32 %v1396, %v2637
        %v2884 = vadd.f32 %v1402, %v2642
        %v2885 = vadd.f32 %v1406, %v2645
        %v2886 = vadd.f32 %v1412, %v2650
        %v2887 = vadd.f32 %v1416, %v2653
        %v2888 = vadd.f32 %v1422, %v2658
        %v2889 = vadd.f32 %v1426, %v2661
        %v2890 = vadd.f32 %v1432, %v2666
        %v2891 = vadd.f32 %v1436, %v2669
        %v2892 = vadd.f32 %v1442, %v2674
        %v2893 = vadd.f32 %v1446, %v2677
        %v2894 = vadd.f32 %v1452, %v2682
        %v2895 = vadd.f32 %v1456, %v2685
        %v2896 = vadd.f32 %v1382, %v2690
        %v2897 = vadd.f32 %v1386, %v2693
        %v2898 = vadd.f32 %v1392, %v2698
        %v2899 = vadd.f32 %v1396, %v2701
        %v2900 = vadd.f32 %v1402, %v2706
        %v2901 = vadd.f32 %v1406, %v2709
        %v2902 = vadd.f32 %v1412, %v2714
        %v2903 = vadd.f32 %v1416, %v2717
        %v2904 = vadd.f32 %v1422, %v2722
        %v2905 = vadd.f32 %v1426, %v2725
        %v2906 = vadd.f32 %v1432, %v2730
        %v2907 = vadd.f32 %v1436, %v2733
        %v2908 = vadd.f32 %v1442, %v2738
        %v2909 = vadd.f32 %v1446, %v2741
        %v2910 = vadd.f32 %v1452, %v2746
        %v2911 = vadd.f32 %v1456, %v2749
        %v2912 = vadd.f32 %v1382, %v2754
        %v2913 = vadd.f32 %v1386, %v2757
        %v2914 = vadd.f32 %v1392, %v2762
        %v2915 = vadd.f32 %v1396, %v2765
        %v2916 = vadd.f32 %v1402, %v2770
        %v2917 = vadd.f32 %v1406, %v2773
        %v2918 = vadd.f32 %v1412, %v2778
        %v2919 = vadd.f32 %v1416, %v2781
        %v2920 = vadd.f32 %v1422, %v2786
        %v2921 = vadd.f32 %v1426, %v2789
        %v2922 = vadd.f32 %v1432, %v2794
        %v2923 = vadd.f32 %v1436, %v2797
        %v2924 = vadd.f32 %v1442, %v2802
        %v2925 = vadd.f32 %v1446, %v2805
        %v2926 = vadd.f32 %v1452, %v2810
        %v2927 = vadd.f32 %v1456, %v2813
        %v2928 = vadd.f32 %v1382, %v2818
        %v2929 = vadd.f32 %v1386, %v2821
        %v2930 = vadd.f32 %v1392, %v2826
        %v2931 = vadd.f32 %v1396, %v2829
        %v2932 = vadd.f32 %v1402, %v2834
        %v2933 = vadd.f32 %v1406, %v2837
        %v2934 = vadd.f32 %v1412, %v2842
        %v2935 = vadd.f32 %v1416, %v2845
        %v2936 = vadd.f32 %v1422, %v2850
        %v2937 = vadd.f32 %v1426, %v2853
        %v2938 = vadd.f32 %v1432, %v2858
        %v2939 = vadd.f32 %v1436, %v2861
        %v2940 = vadd.f32 %v1442, %v2866
        %v2941 = vadd.f32 %v1446, %v2869
        %v2942 = vadd.f32 %v1452, %v2874
        %v2943 = vadd.f32 %v1456, %v2877
        %v2944 = vxor.u32 %v2880, 2147483648
        %v2945 = vxor.u32 %v2881, 2147483648
        %v2946 = vxor.u32 %v2882, 2147483648
        %v2947 = vxor.u32 %v2883, 2147483648
        %v2948 = vxor.u32 %v2884, 2147483648
        %v2949 = vxor.u32 %v2885, 2147483648
        %v2950 = vxor.u32 %v2886, 2147483648
        %v2951 = vxor.u32 %v2887, 2147483648
        %v2952 = vxor.u32 %v2888, 2147483648
        %v2953 = vxor.u32 %v2889, 2147483648
        %v2954 = vxor.u32 %v2890, 2147483648
        %v2955 = vxor.u32 %v2891, 2147483648
        %v2956 = vxor.u32 %v2892, 2147483648
        %v2957 = vxor.u32 %v2893, 2147483648
        %v2958 = vxor.u32 %v2894, 2147483648
        %v2959 = vxor.u32 %v2895, 2147483648
        %v2960 = vxor.u32 %v2896, 2147483648
        %v2961 = vxor.u32 %v2897, 2147483648
        %v2962 = vxor.u32 %v2898, 2147483648
        %v2963 = vxor.u32 %v2899, 2147483648
        %v2964 = vxor.u32 %v2900, 2147483648
        %v2965 = vxor.u32 %v2901, 2147483648
        %v2966 = vxor.u32 %v2902, 2147483648
        %v2967 = vxor.u32 %v2903, 2147483648
        %v2968 = vxor.u32 %v2904, 2147483648
        %v2969 = vxor.u32 %v2905, 2147483648
        %v2970 = vxor.u32 %v2906, 2147483648
        %v2971 = vxor.u32 %v2907, 2147483648
        %v2972 = vxor.u32 %v2908, 2147483648
        %v2973 = vxor.u32 %v2909, 2147483648
        %v2974 = vxor.u32 %v2910, 2147483648
        %v2975 = vxor.u32 %v2911, 2147483648
        %v2976 = vxor.u32 %v2912, 2147483648
        %v2977 = vxor.u32 %v2913, 2147483648
        %v2978 = vxor.u32 %v2914, 2147483648
        %v2979 = vxor.u32 %v2915, 2147483648
        %v2980 = vxor.u32 %v2916, 2147483648
        %v2981 = vxor.u32 %v2917, 2147483648
        %v2982 = vxor.u32 %v2918, 2147483648
        %v2983 = vxor.u32 %v2919, 2147483648
        %v2984 = vxor.u32 %v2920, 2147483648
        %v2985 = vxor.u32 %v2921, 2147483648
        %v2986 = vxor.u32 %v2922, 2147483648
        %v2987 = vxor.u32 %v2923, 2147483648
        %v2988 = vxor.u32 %v2924, 2147483648
        %v2989 = vxor.u32 %v2925, 2147483648
        %v2990 = vxor.u32 %v2926, 2147483648
        %v2991 = vxor.u32 %v2927, 2147483648
        %v2992 = vxor.u32 %v2928, 2147483648
        %v2993 = vxor.u32 %v2929, 2147483648
        %v2994 = vxor.u32 %v2930, 2147483648
        %v2995 = vxor.u32 %v2931, 2147483648
        %v2996 = vxor.u32 %v2932, 2147483648
        %v2997 = vxor.u32 %v2933, 2147483648
        %v2998 = vxor.u32 %v2934, 2147483648
        %v2999 = vxor.u32 %v2935, 2147483648
        %v3000 = vxor.u32 %v2936, 2147483648
        %v3001 = vxor.u32 %v2937, 2147483648
        %v3002 = vxor.u32 %v2938, 2147483648
        %v3003 = vxor.u32 %v2939, 2147483648
        %v3004 = vxor.u32 %v2940, 2147483648
        %v3005 = vxor.u32 %v2941, 2147483648
        %v3006 = vxor.u32 %v2942, 2147483648
        %v3007 = vxor.u32 %v2943, 2147483648
        %v3008 = vmul.f32 %v2944, 1.442695
        %v3009 = vpow.pop %v3008
        %v3010 = vmul.f32 %v2945, 1.442695
        %v3011 = vpow.pop %v3010
        %v3012 = vmul.f32 %v2946, 1.442695
        %v3013 = vpow.pop %v3012
        %v3014 = vmul.f32 %v2947, 1.442695
        %v3015 = vpow.pop %v3014
        %v3016 = vmul.f32 %v2948, 1.442695
        %v3017 = vpow.pop %v3016
        %v3018 = vmul.f32 %v2949, 1.442695
        %v3019 = vpow.pop %v3018
        %v3020 = vmul.f32 %v2950, 1.442695
        %v3021 = vpow.pop %v3020
        %v3022 = vmul.f32 %v2951, 1.442695
        %v3023 = vpow.pop %v3022
        %v3024 = vmul.f32 %v2952, 1.442695
        %v3025 = vpow.pop %v3024
        %v3026 = vmul.f32 %v2953, 1.442695
        %v3027 = vpow.pop %v3026
        %v3028 = vmul.f32 %v2954, 1.442695
        %v3029 = vpow.pop %v3028
        %v3030 = vmul.f32 %v2955, 1.442695
        %v3031 = vpow.pop %v3030
        %v3032 = vmul.f32 %v2956, 1.442695
        %v3033 = vpow.pop %v3032
        %v3034 = vmul.f32 %v2957, 1.442695
        %v3035 = vpow.pop %v3034
        %v3036 = vmul.f32 %v2958, 1.442695
        %v3037 = vpow.pop %v3036
        %v3038 = vmul.f32 %v2959, 1.442695
        %v3039 = vpow.pop %v3038
        %v3040 = vmul.f32 %v2960, 1.442695
        %v3041 = vpow.pop %v3040
        %v3042 = vmul.f32 %v2961, 1.442695
        %v3043 = vpow.pop %v3042
        %v3044 = vmul.f32 %v2962, 1.442695
        %v3045 = vpow.pop %v3044
        %v3046 = vmul.f32 %v2963, 1.442695
        %v3047 = vpow.pop %v3046
        %v3048 = vmul.f32 %v2964, 1.442695
        %v3049 = vpow.pop %v3048
        %v3050 = vmul.f32 %v2965, 1.442695
        %v3051 = vpow.pop %v3050
        %v3052 = vmul.f32 %v2966, 1.442695
        %v3053 = vpow.pop %v3052
        %v3054 = vmul.f32 %v2967, 1.442695
        %v3055 = vpow.pop %v3054
        %v3056 = vmul.f32 %v2968, 1.442695
        %v3057 = vpow.pop %v3056
        %v3058 = vmul.f32 %v2969, 1.442695
        %v3059 = vpow.pop %v3058
        %v3060 = vmul.f32 %v2970, 1.442695
        %v3061 = vpow.pop %v3060
        %v3062 = vmul.f32 %v2971, 1.442695
        %v3063 = vpow.pop %v3062
        %v3064 = vmul.f32 %v2972, 1.442695
        %v3065 = vpow.pop %v3064
        %v3066 = vmul.f32 %v2973, 1.442695
        %v3067 = vpow.pop %v3066
        %v3068 = vmul.f32 %v2974, 1.442695
        %v3069 = vpow.pop %v3068
        %v3070 = vmul.f32 %v2975, 1.442695
        %v3071 = vpow.pop %v3070
        %v3072 = vmul.f32 %v2976, 1.442695
        %v3073 = vpow.pop %v3072
        %v3074 = vmul.f32 %v2977, 1.442695
        %v3075 = vpow.pop %v3074
        %v3076 = vmul.f32 %v2978, 1.442695
        %v3077 = vpow.pop %v3076
        %v3078 = vmul.f32 %v2979, 1.442695
        %v3079 = vpow.pop %v3078
        %v3080 = vmul.f32 %v2980, 1.442695
        %v3081 = vpow.pop %v3080
        %v3082 = vmul.f32 %v2981, 1.442695
        %v3083 = vpow.pop %v3082
        %v3084 = vmul.f32 %v2982, 1.442695
        %v3085 = vpow.pop %v3084
        %v3086 = vmul.f32 %v2983, 1.442695
        %v3087 = vpow.pop %v3086
        %v3088 = vmul.f32 %v2984, 1.442695
        %v3089 = vpow.pop %v3088
        %v3090 = vmul.f32 %v2985, 1.442695
        %v3091 = vpow.pop %v3090
        %v3092 = vmul.f32 %v2986, 1.442695
        %v3093 = vpow.pop %v3092
        %v3094 = vmul.f32 %v2987, 1.442695
        %v3095 = vpow.pop %v3094
        %v3096 = vmul.f32 %v2988, 1.442695
        %v3097 = vpow.pop %v3096
        %v3098 = vmul.f32 %v2989, 1.442695
        %v3099 = vpow.pop %v3098
        %v3100 = vmul.f32 %v2990, 1.442695
        %v3101 = vpow.pop %v3100
        %v3102 = vmul.f32 %v2991, 1.442695
        %v3103 = vpow.pop %v3102
        %v3104 = vmul.f32 %v2992, 1.442695
        %v3105 = vpow.pop %v3104
        %v3106 = vmul.f32 %v2993, 1.442695
        %v3107 = vpow.pop %v3106
        %v3108 = vmul.f32 %v2994, 1.442695
        %v3109 = vpow.pop %v3108
        %v3110 = vmul.f32 %v2995, 1.442695
        %v3111 = vpow.pop %v3110
        %v3112 = vmul.f32 %v2996, 1.442695
        %v3113 = vpow.pop %v3112
        %v3114 = vmul.f32 %v2997, 1.442695
        %v3115 = vpow.pop %v3114
        %v3116 = vmul.f32 %v2998, 1.442695
        %v3117 = vpow.pop %v3116
        %v3118 = vmul.f32 %v2999, 1.442695
        %v3119 = vpow.pop %v3118
        %v3120 = vmul.f32 %v3000, 1.442695
        %v3121 = vpow.pop %v3120
        %v3122 = vmul.f32 %v3001, 1.442695
        %v3123 = vpow.pop %v3122
        %v3124 = vmul.f32 %v3002, 1.442695
        %v3125 = vpow.pop %v3124
        %v3126 = vmul.f32 %v3003, 1.442695
        %v3127 = vpow.pop %v3126
        %v3128 = vmul.f32 %v3004, 1.442695
        %v3129 = vpow.pop %v3128
        %v3130 = vmul.f32 %v3005, 1.442695
        %v3131 = vpow.pop %v3130
        %v3132 = vmul.f32 %v3006, 1.442695
        %v3133 = vpow.pop %v3132
        %v3134 = vmul.f32 %v3007, 1.442695
        %v3135 = vpow.pop %v3134
        %v3136 = vadd.f32 %v3009, 1.0
        %v3137 = vadd.f32 %v3011, 1.0
        %v3138 = vadd.f32 %v3013, 1.0
        %v3139 = vadd.f32 %v3015, 1.0
        %v3140 = vadd.f32 %v3017, 1.0
        %v3141 = vadd.f32 %v3019, 1.0
        %v3142 = vadd.f32 %v3021, 1.0
        %v3143 = vadd.f32 %v3023, 1.0
        %v3144 = vadd.f32 %v3025, 1.0
        %v3145 = vadd.f32 %v3027, 1.0
        %v3146 = vadd.f32 %v3029, 1.0
        %v3147 = vadd.f32 %v3031, 1.0
        %v3148 = vadd.f32 %v3033, 1.0
        %v3149 = vadd.f32 %v3035, 1.0
        %v3150 = vadd.f32 %v3037, 1.0
        %v3151 = vadd.f32 %v3039, 1.0
        %v3152 = vadd.f32 %v3041, 1.0
        %v3153 = vadd.f32 %v3043, 1.0
        %v3154 = vadd.f32 %v3045, 1.0
        %v3155 = vadd.f32 %v3047, 1.0
        %v3156 = vadd.f32 %v3049, 1.0
        %v3157 = vadd.f32 %v3051, 1.0
        %v3158 = vadd.f32 %v3053, 1.0
        %v3159 = vadd.f32 %v3055, 1.0
        %v3160 = vadd.f32 %v3057, 1.0
        %v3161 = vadd.f32 %v3059, 1.0
        %v3162 = vadd.f32 %v3061, 1.0
        %v3163 = vadd.f32 %v3063, 1.0
        %v3164 = vadd.f32 %v3065, 1.0
        %v3165 = vadd.f32 %v3067, 1.0
        %v3166 = vadd.f32 %v3069, 1.0
        %v3167 = vadd.f32 %v3071, 1.0
        %v3168 = vadd.f32 %v3073, 1.0
        %v3169 = vadd.f32 %v3075, 1.0
        %v3170 = vadd.f32 %v3077, 1.0
        %v3171 = vadd.f32 %v3079, 1.0
        %v3172 = vadd.f32 %v3081, 1.0
        %v3173 = vadd.f32 %v3083, 1.0
        %v3174 = vadd.f32 %v3085, 1.0
        %v3175 = vadd.f32 %v3087, 1.0
        %v3176 = vadd.f32 %v3089, 1.0
        %v3177 = vadd.f32 %v3091, 1.0
        %v3178 = vadd.f32 %v3093, 1.0
        %v3179 = vadd.f32 %v3095, 1.0
        %v3180 = vadd.f32 %v3097, 1.0
        %v3181 = vadd.f32 %v3099, 1.0
        %v3182 = vadd.f32 %v3101, 1.0
        %v3183 = vadd.f32 %v3103, 1.0
        %v3184 = vadd.f32 %v3105, 1.0
        %v3185 = vadd.f32 %v3107, 1.0
        %v3186 = vadd.f32 %v3109, 1.0
        %v3187 = vadd.f32 %v3111, 1.0
        %v3188 = vadd.f32 %v3113, 1.0
        %v3189 = vadd.f32 %v3115, 1.0
        %v3190 = vadd.f32 %v3117, 1.0
        %v3191 = vadd.f32 %v3119, 1.0
        %v3192 = vadd.f32 %v3121, 1.0
        %v3193 = vadd.f32 %v3123, 1.0
        %v3194 = vadd.f32 %v3125, 1.0
        %v3195 = vadd.f32 %v3127, 1.0
        %v3196 = vadd.f32 %v3129, 1.0
        %v3197 = vadd.f32 %v3131, 1.0
        %v3198 = vadd.f32 %v3133, 1.0
        %v3199 = vadd.f32 %v3135, 1.0
        %v3200 = vrcp.pop %v3136
        %v3201 = vmul.f32 1.0, %v3200
        %v3202 = vrcp.pop %v3137
        %v3203 = vmul.f32 1.0, %v3202
        %v3204 = vrcp.pop %v3138
        %v3205 = vmul.f32 1.0, %v3204
        %v3206 = vrcp.pop %v3139
        %v3207 = vmul.f32 1.0, %v3206
        %v3208 = vrcp.pop %v3140
        %v3209 = vmul.f32 1.0, %v3208
        %v3210 = vrcp.pop %v3141
        %v3211 = vmul.f32 1.0, %v3210
        %v3212 = vrcp.pop %v3142
        %v3213 = vmul.f32 1.0, %v3212
        %v3214 = vrcp.pop %v3143
        %v3215 = vmul.f32 1.0, %v3214
        %v3216 = vrcp.pop %v3144
        %v3217 = vmul.f32 1.0, %v3216
        %v3218 = vrcp.pop %v3145
        %v3219 = vmul.f32 1.0, %v3218
        %v3220 = vrcp.pop %v3146
        %v3221 = vmul.f32 1.0, %v3220
        %v3222 = vrcp.pop %v3147
        %v3223 = vmul.f32 1.0, %v3222
        %v3224 = vrcp.pop %v3148
        %v3225 = vmul.f32 1.0, %v3224
        %v3226 = vrcp.pop %v3149
        %v3227 = vmul.f32 1.0, %v3226
        %v3228 = vrcp.pop %v3150
        %v3229 = vmul.f32 1.0, %v3228
        %v3230 = vrcp.pop %v3151
        %v3231 = vmul.f32 1.0, %v3230
        %v3232 = vrcp.pop %v3152
        %v3233 = vmul.f32 1.0, %v3232
        %v3234 = vrcp.pop %v3153
        %v3235 = vmul.f32 1.0, %v3234
        %v3236 = vrcp.pop %v3154
        %v3237 = vmul.f32 1.0, %v3236
        %v3238 = vrcp.pop %v3155
        %v3239 = vmul.f32 1.0, %v3238
        %v3240 = vrcp.pop %v3156
        %v3241 = vmul.f32 1.0, %v3240
        %v3242 = vrcp.pop %v3157
        %v3243 = vmul.f32 1.0, %v3242
        %v3244 = vrcp.pop %v3158
        %v3245 = vmul.f32 1.0, %v3244
        %v3246 = vrcp.pop %v3159
        %v3247 = vmul.f32 1.0, %v3246
        %v3248 = vrcp.pop %v3160
        %v3249 = vmul.f32 1.0, %v3248
        %v3250 = vrcp.pop %v3161
        %v3251 = vmul.f32 1.0, %v3250
        %v3252 = vrcp.pop %v3162
        %v3253 = vmul.f32 1.0, %v3252
        %v3254 = vrcp.pop %v3163
        %v3255 = vmul.f32 1.0, %v3254
        %v3256 = vrcp.pop %v3164
        %v3257 = vmul.f32 1.0, %v3256
        %v3258 = vrcp.pop %v3165
        %v3259 = vmul.f32 1.0, %v3258
        %v3260 = vrcp.pop %v3166
        %v3261 = vmul.f32 1.0, %v3260
        %v3262 = vrcp.pop %v3167
        %v3263 = vmul.f32 1.0, %v3262
        %v3264 = vrcp.pop %v3168
        %v3265 = vmul.f32 1.0, %v3264
        %v3266 = vrcp.pop %v3169
        %v3267 = vmul.f32 1.0, %v3266
        %v3268 = vrcp.pop %v3170
        %v3269 = vmul.f32 1.0, %v3268
        %v3270 = vrcp.pop %v3171
        %v3271 = vmul.f32 1.0, %v3270
        %v3272 = vrcp.pop %v3172
        %v3273 = vmul.f32 1.0, %v3272
        %v3274 = vrcp.pop %v3173
        %v3275 = vmul.f32 1.0, %v3274
        %v3276 = vrcp.pop %v3174
        %v3277 = vmul.f32 1.0, %v3276
        %v3278 = vrcp.pop %v3175
        %v3279 = vmul.f32 1.0, %v3278
        %v3280 = vrcp.pop %v3176
        %v3281 = vmul.f32 1.0, %v3280
        %v3282 = vrcp.pop %v3177
        %v3283 = vmul.f32 1.0, %v3282
        %v3284 = vrcp.pop %v3178
        %v3285 = vmul.f32 1.0, %v3284
        %v3286 = vrcp.pop %v3179
        %v3287 = vmul.f32 1.0, %v3286
        %v3288 = vrcp.pop %v3180
        %v3289 = vmul.f32 1.0, %v3288
        %v3290 = vrcp.pop %v3181
        %v3291 = vmul.f32 1.0, %v3290
        %v3292 = vrcp.pop %v3182
        %v3293 = vmul.f32 1.0, %v3292
        %v3294 = vrcp.pop %v3183
        %v3295 = vmul.f32 1.0, %v3294
        %v3296 = vrcp.pop %v3184
        %v3297 = vmul.f32 1.0, %v3296
        %v3298 = vrcp.pop %v3185
        %v3299 = vmul.f32 1.0, %v3298
        %v3300 = vrcp.pop %v3186
        %v3301 = vmul.f32 1.0, %v3300
        %v3302 = vrcp.pop %v3187
        %v3303 = vmul.f32 1.0, %v3302
        %v3304 = vrcp.pop %v3188
        %v3305 = vmul.f32 1.0, %v3304
        %v3306 = vrcp.pop %v3189
        %v3307 = vmul.f32 1.0, %v3306
        %v3308 = vrcp.pop %v3190
        %v3309 = vmul.f32 1.0, %v3308
        %v3310 = vrcp.pop %v3191
        %v3311 = vmul.f32 1.0, %v3310
        %v3312 = vrcp.pop %v3192
        %v3313 = vmul.f32 1.0, %v3312
        %v3314 = vrcp.pop %v3193
        %v3315 = vmul.f32 1.0, %v3314
        %v3316 = vrcp.pop %v3194
        %v3317 = vmul.f32 1.0, %v3316
        %v3318 = vrcp.pop %v3195
        %v3319 = vmul.f32 1.0, %v3318
        %v3320 = vrcp.pop %v3196
        %v3321 = vmul.f32 1.0, %v3320
        %v3322 = vrcp.pop %v3197
        %v3323 = vmul.f32 1.0, %v3322
        %v3324 = vrcp.pop %v3198
        %v3325 = vmul.f32 1.0, %v3324
        %v3326 = vrcp.pop %v3199
        %v3327 = vmul.f32 1.0, %v3326
        %v3328 = vld [vmem:[%s888] sm:$0xf]
        %v3329 = vld [vmem:[%s888 + $0x4] sm:$0xf]
        %v3330 = vld [vmem:[%s888 + $0x8] sm:$0xf]
        %v3331 = vld [vmem:[%s888 + $0xc] sm:$0xf]
        %v3332 = vld [vmem:[%s888 + $0x10] sm:$0xf]
        %v3333 = vld [vmem:[%s888 + $0x14] sm:$0xf]
        %v3334 = vld [vmem:[%s888 + $0x18] sm:$0xf]
        %v3335 = vld [vmem:[%s888 + $0x1c] sm:$0xf]
        %v3336 = vld [vmem:[%s888 + $0x20] sm:$0xf]
        %v3337 = vld [vmem:[%s888 + $0x24] sm:$0xf]
        %v3338 = vld [vmem:[%s888 + $0x28] sm:$0xf]
        %v3339 = vld [vmem:[%s888 + $0x2c] sm:$0xf]
        %v3340 = vld [vmem:[%s888 + $0x30] sm:$0xf]
        %v3341 = vld [vmem:[%s888 + $0x34] sm:$0xf]
        %v3342 = vld [vmem:[%s888 + $0x38] sm:$0xf]
        %v3343 = vld [vmem:[%s888 + $0x3c] sm:$0xf]
        %v3344 = vld [vmem:[%s888 + $0x40] sm:$0xf]
        %v3345 = vld [vmem:[%s888 + $0x44] sm:$0xf]
        %v3346 = vld [vmem:[%s888 + $0x48] sm:$0xf]
        %v3347 = vld [vmem:[%s888 + $0x4c] sm:$0xf]
        %v3348 = vld [vmem:[%s888 + $0x50] sm:$0xf]
        %v3349 = vld [vmem:[%s888 + $0x54] sm:$0xf]
        %v3350 = vld [vmem:[%s888 + $0x58] sm:$0xf]
        %v3351 = vld [vmem:[%s888 + $0x5c] sm:$0xf]
        %v3352 = vld [vmem:[%s888 + $0x60] sm:$0xf]
        %v3353 = vld [vmem:[%s888 + $0x64] sm:$0xf]
        %v3354 = vld [vmem:[%s888 + $0x68] sm:$0xf]
        %v3355 = vld [vmem:[%s888 + $0x6c] sm:$0xf]
        %v3356 = vld [vmem:[%s888 + $0x70] sm:$0xf]
        %v3357 = vld [vmem:[%s888 + $0x74] sm:$0xf]
        %v3358 = vld [vmem:[%s888 + $0x78] sm:$0xf]
        %v3359 = vld [vmem:[%s888 + $0x7c] sm:$0xf]
        %v3360 = vld [vmem:[%s888 + $0x80] sm:$0xf]
        %v3361 = vld [vmem:[%s888 + $0x84] sm:$0xf]
        %v3362 = vld [vmem:[%s888 + $0x88] sm:$0xf]
        %v3363 = vld [vmem:[%s888 + $0x8c] sm:$0xf]
        %v3364 = vld [vmem:[%s888 + $0x90] sm:$0xf]
        %v3365 = vld [vmem:[%s888 + $0x94] sm:$0xf]
        %v3366 = vld [vmem:[%s888 + $0x98] sm:$0xf]
        %v3367 = vld [vmem:[%s888 + $0x9c] sm:$0xf]
        %v3368 = vld [vmem:[%s888 + $0xa0] sm:$0xf]
        %v3369 = vld [vmem:[%s888 + $0xa4] sm:$0xf]
        %v3370 = vld [vmem:[%s888 + $0xa8] sm:$0xf]
        %v3371 = vld [vmem:[%s888 + $0xac] sm:$0xf]
        %v3372 = vld [vmem:[%s888 + $0xb0] sm:$0xf]
        %v3373 = vld [vmem:[%s888 + $0xb4] sm:$0xf]
        %v3374 = vld [vmem:[%s888 + $0xb8] sm:$0xf]
        %v3375 = vld [vmem:[%s888 + $0xbc] sm:$0xf]
        %v3376 = vld [vmem:[%s888 + $0xc0] sm:$0xf]
        %v3377 = vld [vmem:[%s888 + $0xc4] sm:$0xf]
        %v3378 = vld [vmem:[%s888 + $0xc8] sm:$0xf]
        %v3379 = vld [vmem:[%s888 + $0xcc] sm:$0xf]
        %v3380 = vld [vmem:[%s888 + $0xd0] sm:$0xf]
        %v3381 = vld [vmem:[%s888 + $0xd4] sm:$0xf]
        %v3382 = vld [vmem:[%s888 + $0xd8] sm:$0xf]
        %v3383 = vld [vmem:[%s888 + $0xdc] sm:$0xf]
        %v3384 = vld [vmem:[%s888 + $0xe0] sm:$0xf]
        %v3385 = vld [vmem:[%s888 + $0xe4] sm:$0xf]
        %v3386 = vld [vmem:[%s888 + $0xe8] sm:$0xf]
        %v3387 = vld [vmem:[%s888 + $0xec] sm:$0xf]
        %v3388 = vld [vmem:[%s888 + $0xf0] sm:$0xf]
        %v3389 = vld [vmem:[%s888 + $0xf4] sm:$0xf]
        %v3390 = vld [vmem:[%s888 + $0xf8] sm:$0xf]
        %v3391 = vld [vmem:[%s888 + $0xfc] sm:$0xf]
        %v3392 = vunpack.c.l.bf16 %v3328
        %v3393 = vunpack.c.l.bf16 %v3329
        %v3394 = vunpack.c.l.bf16 %v3330
        %v3395 = vunpack.c.l.bf16 %v3331
        %v3396 = vunpack.c.l.bf16 %v3332
        %v3397 = vunpack.c.l.bf16 %v3333
        %v3398 = vunpack.c.l.bf16 %v3334
        %v3399 = vunpack.c.l.bf16 %v3335
        %v3400 = vunpack.c.l.bf16 %v3336
        %v3401 = vunpack.c.l.bf16 %v3337
        %v3402 = vunpack.c.l.bf16 %v3338
        %v3403 = vunpack.c.l.bf16 %v3339
        %v3404 = vunpack.c.l.bf16 %v3340
        %v3405 = vunpack.c.l.bf16 %v3341
        %v3406 = vunpack.c.l.bf16 %v3342
        %v3407 = vunpack.c.l.bf16 %v3343
        %v3408 = vunpack.c.l.bf16 %v3344
        %v3409 = vunpack.c.l.bf16 %v3345
        %v3410 = vunpack.c.l.bf16 %v3346
        %v3411 = vunpack.c.l.bf16 %v3347
        %v3412 = vunpack.c.l.bf16 %v3348
        %v3413 = vunpack.c.l.bf16 %v3349
        %v3414 = vunpack.c.l.bf16 %v3350
        %v3415 = vunpack.c.l.bf16 %v3351
        %v3416 = vunpack.c.l.bf16 %v3352
        %v3417 = vunpack.c.l.bf16 %v3353
        %v3418 = vunpack.c.l.bf16 %v3354
        %v3419 = vunpack.c.l.bf16 %v3355
        %v3420 = vunpack.c.l.bf16 %v3356
        %v3421 = vunpack.c.l.bf16 %v3357
        %v3422 = vunpack.c.l.bf16 %v3358
        %v3423 = vunpack.c.l.bf16 %v3359
        %v3424 = vunpack.c.l.bf16 %v3360
        %v3425 = vunpack.c.l.bf16 %v3361
        %v3426 = vunpack.c.l.bf16 %v3362
        %v3427 = vunpack.c.l.bf16 %v3363
        %v3428 = vunpack.c.l.bf16 %v3364
        %v3429 = vunpack.c.l.bf16 %v3365
        %v3430 = vunpack.c.l.bf16 %v3366
        %v3431 = vunpack.c.l.bf16 %v3367
        %v3432 = vunpack.c.l.bf16 %v3368
        %v3433 = vunpack.c.l.bf16 %v3369
        %v3434 = vunpack.c.l.bf16 %v3370
        %v3435 = vunpack.c.l.bf16 %v3371
        %v3436 = vunpack.c.l.bf16 %v3372
        %v3437 = vunpack.c.l.bf16 %v3373
        %v3438 = vunpack.c.l.bf16 %v3374
        %v3439 = vunpack.c.l.bf16 %v3375
        %v3440 = vunpack.c.l.bf16 %v3376
        %v3441 = vunpack.c.l.bf16 %v3377
        %v3442 = vunpack.c.l.bf16 %v3378
        %v3443 = vunpack.c.l.bf16 %v3379
        %v3444 = vunpack.c.l.bf16 %v3380
        %v3445 = vunpack.c.l.bf16 %v3381
        %v3446 = vunpack.c.l.bf16 %v3382
        %v3447 = vunpack.c.l.bf16 %v3383
        %v3448 = vunpack.c.l.bf16 %v3384
        %v3449 = vunpack.c.l.bf16 %v3385
        %v3450 = vunpack.c.l.bf16 %v3386
        %v3451 = vunpack.c.l.bf16 %v3387
        %v3452 = vunpack.c.l.bf16 %v3388
        %v3453 = vunpack.c.l.bf16 %v3389
        %v3454 = vunpack.c.l.bf16 %v3390
        %v3455 = vunpack.c.l.bf16 %v3391
        %v3456 = vmul.f32 %v3201, %v3392
        %v3457 = vmul.f32 %v3203, %v3393
        %v3458 = vmul.f32 %v3205, %v3394
        %v3459 = vmul.f32 %v3207, %v3395
        %v3460 = vmul.f32 %v3209, %v3396
        %v3461 = vmul.f32 %v3211, %v3397
        %v3462 = vmul.f32 %v3213, %v3398
        %v3463 = vmul.f32 %v3215, %v3399
        %v3464 = vmul.f32 %v3217, %v3400
        %v3465 = vmul.f32 %v3219, %v3401
        %v3466 = vmul.f32 %v3221, %v3402
        %v3467 = vmul.f32 %v3223, %v3403
        %v3468 = vmul.f32 %v3225, %v3404
        %v3469 = vmul.f32 %v3227, %v3405
        %v3470 = vmul.f32 %v3229, %v3406
        %v3471 = vmul.f32 %v3231, %v3407
        %v3472 = vmul.f32 %v3233, %v3408
        %v3473 = vmul.f32 %v3235, %v3409
        %v3474 = vmul.f32 %v3237, %v3410
        %v3475 = vmul.f32 %v3239, %v3411
        %v3476 = vmul.f32 %v3241, %v3412
        %v3477 = vmul.f32 %v3243, %v3413
        %v3478 = vmul.f32 %v3245, %v3414
        %v3479 = vmul.f32 %v3247, %v3415
        %v3480 = vmul.f32 %v3249, %v3416
        %v3481 = vmul.f32 %v3251, %v3417
        %v3482 = vmul.f32 %v3253, %v3418
        %v3483 = vmul.f32 %v3255, %v3419
        %v3484 = vmul.f32 %v3257, %v3420
        %v3485 = vmul.f32 %v3259, %v3421
        %v3486 = vmul.f32 %v3261, %v3422
        %v3487 = vmul.f32 %v3263, %v3423
        %v3488 = vmul.f32 %v3265, %v3424
        %v3489 = vmul.f32 %v3267, %v3425
        %v3490 = vmul.f32 %v3269, %v3426
        %v3491 = vmul.f32 %v3271, %v3427
        %v3492 = vmul.f32 %v3273, %v3428
        %v3493 = vmul.f32 %v3275, %v3429
        %v3494 = vmul.f32 %v3277, %v3430
        %v3495 = vmul.f32 %v3279, %v3431
        %v3496 = vmul.f32 %v3281, %v3432
        %v3497 = vmul.f32 %v3283, %v3433
        %v3498 = vmul.f32 %v3285, %v3434
        %v3499 = vmul.f32 %v3287, %v3435
        %v3500 = vmul.f32 %v3289, %v3436
        %v3501 = vmul.f32 %v3291, %v3437
        %v3502 = vmul.f32 %v3293, %v3438
        %v3503 = vmul.f32 %v3295, %v3439
        %v3504 = vmul.f32 %v3297, %v3440
        %v3505 = vmul.f32 %v3299, %v3441
        %v3506 = vmul.f32 %v3301, %v3442
        %v3507 = vmul.f32 %v3303, %v3443
        %v3508 = vmul.f32 %v3305, %v3444
        %v3509 = vmul.f32 %v3307, %v3445
        %v3510 = vmul.f32 %v3309, %v3446
        %v3511 = vmul.f32 %v3311, %v3447
        %v3512 = vmul.f32 %v3313, %v3448
        %v3513 = vmul.f32 %v3315, %v3449
        %v3514 = vmul.f32 %v3317, %v3450
        %v3515 = vmul.f32 %v3319, %v3451
        %v3516 = vmul.f32 %v3321, %v3452
        %v3517 = vmul.f32 %v3323, %v3453
        %v3518 = vmul.f32 %v3325, %v3454
        %v3519 = vmul.f32 %v3327, %v3455
        %v3520 = vadd.f32 %v3456, %v3472
        %v3521 = vadd.f32 %v3520, %v3488
        %v3522 = vadd.f32 %v3521, %v3504
        %v3523 = vadd.f32 %v3457, %v3473
        %v3524 = vadd.f32 %v3523, %v3489
        %v3525 = vadd.f32 %v3524, %v3505
        %v3526 = vadd.f32 %v3458, %v3474
        %v3527 = vadd.f32 %v3526, %v3490
        %v3528 = vadd.f32 %v3527, %v3506
        %v3529 = vadd.f32 %v3459, %v3475
        %v3530 = vadd.f32 %v3529, %v3491
        %v3531 = vadd.f32 %v3530, %v3507
        %v3532 = vadd.f32 %v3460, %v3476
        %v3533 = vadd.f32 %v3532, %v3492
        %v3534 = vadd.f32 %v3533, %v3508
        %v3535 = vadd.f32 %v3461, %v3477
        %v3536 = vadd.f32 %v3535, %v3493
        %v3537 = vadd.f32 %v3536, %v3509
        %v3538 = vadd.f32 %v3462, %v3478
        %v3539 = vadd.f32 %v3538, %v3494
        %v3540 = vadd.f32 %v3539, %v3510
        %v3541 = vadd.f32 %v3463, %v3479
        %v3542 = vadd.f32 %v3541, %v3495
        %v3543 = vadd.f32 %v3542, %v3511
        %v3544 = vadd.f32 %v3464, %v3480
        %v3545 = vadd.f32 %v3544, %v3496
        %v3546 = vadd.f32 %v3545, %v3512
        %v3547 = vadd.f32 %v3465, %v3481
        %v3548 = vadd.f32 %v3547, %v3497
        %v3549 = vadd.f32 %v3548, %v3513
        %v3550 = vadd.f32 %v3466, %v3482
        %v3551 = vadd.f32 %v3550, %v3498
        %v3552 = vadd.f32 %v3551, %v3514
        %v3553 = vadd.f32 %v3467, %v3483
        %v3554 = vadd.f32 %v3553, %v3499
        %v3555 = vadd.f32 %v3554, %v3515
        %v3556 = vadd.f32 %v3468, %v3484
        %v3557 = vadd.f32 %v3556, %v3500
        %v3558 = vadd.f32 %v3557, %v3516
        %v3559 = vadd.f32 %v3469, %v3485
        %v3560 = vadd.f32 %v3559, %v3501
        %v3561 = vadd.f32 %v3560, %v3517
        %v3562 = vadd.f32 %v3470, %v3486
        %v3563 = vadd.f32 %v3562, %v3502
        %v3564 = vadd.f32 %v3563, %v3518
        %v3565 = vadd.f32 %v3471, %v3487
        %v3566 = vadd.f32 %v3565, %v3503
        %v3567 = vadd.f32 %v3566, %v3519
        %v3568 = vmul.f32 %v2096, %v2255
        %v3569 = vmul.f32 %v2098, %v2256
        %v3570 = vmul.f32 %v2100, %v2257
        %v3571 = vmul.f32 %v2102, %v2258
        %v3572 = vmul.f32 %v2104, %v2259
        %v3573 = vmul.f32 %v2106, %v2260
        %v3574 = vmul.f32 %v2108, %v2261
        %v3575 = vmul.f32 %v2110, %v2262
        %v3576 = vmul.f32 %v2112, %v2263
        %v3577 = vmul.f32 %v2114, %v2264
        %v3578 = vmul.f32 %v2116, %v2265
        %v3579 = vmul.f32 %v2118, %v2266
        %v3580 = vmul.f32 %v2120, %v2267
        %v3581 = vmul.f32 %v2122, %v2268
        %v3582 = vmul.f32 %v2124, %v2269
        %v3583 = vmul.f32 %v2126, %v2270
        %v3584 = vadd.f32 %v3568, %v3522
        %v3585 = vadd.f32 %v3569, %v3525
        %v3586 = vadd.f32 %v3570, %v3528
        %v3587 = vadd.f32 %v3571, %v3531
        %v3588 = vadd.f32 %v3572, %v3534
        %v3589 = vadd.f32 %v3573, %v3537
        %v3590 = vadd.f32 %v3574, %v3540
        %v3591 = vadd.f32 %v3575, %v3543
        %v3592 = vadd.f32 %v3576, %v3546
        %v3593 = vadd.f32 %v3577, %v3549
        %v3594 = vadd.f32 %v3578, %v3552
        %v3595 = vadd.f32 %v3579, %v3555
        %v3596 = vadd.f32 %v3580, %v3558
        %v3597 = vadd.f32 %v3581, %v3561
        %v3598 = vadd.f32 %v3582, %v3564
        %v3599 = vadd.f32 %v3583, %v3567
        %v3600 = vtanh.pop %v3584
        %v3601 = vtanh.pop %v3585
        %v3602 = vtanh.pop %v3586
        %v3603 = vtanh.pop %v3587
        %v3604 = vtanh.pop %v3588
        %v3605 = vtanh.pop %v3589
        %v3606 = vtanh.pop %v3590
        %v3607 = vtanh.pop %v3591
        %v3608 = vtanh.pop %v3592
        %v3609 = vtanh.pop %v3593
        %v3610 = vtanh.pop %v3594
        %v3611 = vtanh.pop %v3595
        %v3612 = vtanh.pop %v3596
        %v3613 = vtanh.pop %v3597
        %v3614 = vtanh.pop %v3598
        %v3615 = vtanh.pop %v3599
        %v3616 = vmul.f32 %v2208, %v3600
        %v3617 = vmul.f32 %v2210, %v3601
        %v3618 = vmul.f32 %v2212, %v3602
        %v3619 = vmul.f32 %v2214, %v3603
        %v3620 = vmul.f32 %v2216, %v3604
        %v3621 = vmul.f32 %v2218, %v3605
        %v3622 = vmul.f32 %v2220, %v3606
        %v3623 = vmul.f32 %v2222, %v3607
        %v3624 = vmul.f32 %v2224, %v3608
        %v3625 = vmul.f32 %v2226, %v3609
        %v3626 = vmul.f32 %v2228, %v3610
        %v3627 = vmul.f32 %v2230, %v3611
        %v3628 = vmul.f32 %v2232, %v3612
        %v3629 = vmul.f32 %v2234, %v3613
        %v3630 = vmul.f32 %v2236, %v3614
        %v3631 = vmul.f32 %v2238, %v3615
        %3632 = vst [vmem:[%s945] sm:$0xff] %v3616
        %3633 = vst [vmem:[%s945 + $0x8] sm:$0xff] %v3617
        %3634 = vst [vmem:[%s945 + $0x10] sm:$0xff] %v3618
        %3635 = vst [vmem:[%s945 + $0x18] sm:$0xff] %v3619
        %3636 = vst [vmem:[%s945 + $0x20] sm:$0xff] %v3620
        %3637 = vst [vmem:[%s945 + $0x28] sm:$0xff] %v3621
        %3638 = vst [vmem:[%s945 + $0x30] sm:$0xff] %v3622
        %3639 = vst [vmem:[%s945 + $0x38] sm:$0xff] %v3623
        %3640 = vst [vmem:[%s945 + $0x40] sm:$0xff] %v3624
        %3641 = vst [vmem:[%s945 + $0x48] sm:$0xff] %v3625
        %3642 = vst [vmem:[%s945 + $0x50] sm:$0xff] %v3626
        %3643 = vst [vmem:[%s945 + $0x58] sm:$0xff] %v3627
        %3644 = vst [vmem:[%s945 + $0x60] sm:$0xff] %v3628
        %3645 = vst [vmem:[%s945 + $0x68] sm:$0xff] %v3629
        %3646 = vst [vmem:[%s945 + $0x70] sm:$0xff] %v3630
        %3647 = vst [vmem:[%s945 + $0x78] sm:$0xff] %v3631
        %3648 = vst [vmem:[%s951] sm:$0xff] %v3584
        %3649 = vst [vmem:[%s951 + $0x8] sm:$0xff] %v3585
        %3650 = vst [vmem:[%s951 + $0x10] sm:$0xff] %v3586
        %3651 = vst [vmem:[%s951 + $0x18] sm:$0xff] %v3587
        %3652 = vst [vmem:[%s951 + $0x20] sm:$0xff] %v3588
        %3653 = vst [vmem:[%s951 + $0x28] sm:$0xff] %v3589
        %3654 = vst [vmem:[%s951 + $0x30] sm:$0xff] %v3590
        %3655 = vst [vmem:[%s951 + $0x38] sm:$0xff] %v3591
        %3656 = vst [vmem:[%s951 + $0x40] sm:$0xff] %v3592
        %3657 = vst [vmem:[%s951 + $0x48] sm:$0xff] %v3593
        %3658 = vst [vmem:[%s951 + $0x50] sm:$0xff] %v3594
        %3659 = vst [vmem:[%s951 + $0x58] sm:$0xff] %v3595
        %3660 = vst [vmem:[%s951 + $0x60] sm:$0xff] %v3596
        %3661 = vst [vmem:[%s951 + $0x68] sm:$0xff] %v3597
        %3662 = vst [vmem:[%s951 + $0x70] sm:$0xff] %v3598
        %3663 = vst [vmem:[%s951 + $0x78] sm:$0xff] %v3599
        %s3664 = smul.u32 16, %s20
        %p3665 = scmp.lt.s32.totalorder %s3664, 31
        %s3666 = scalar_select %p3665, %s3664, 31
        %s3667 = smul.addr %s3666, 8
        %s3668 = scalar_lea.vmem %s7, %s3667
        %s3669 = smul.u32 16, %s20
        %p3670 = scmp.lt.s32.totalorder %s3669, 31
        %s3671 = scalar_select %p3670, %s3669, 31
        %s3672 = smul.addr %s3671, 8
        %s3673 = scalar_lea.vmem %s8, %s3672
        // Predicated region
        $region131: #{child_sum_tree_lstm_level.1} parent=121 // pred_check
          %p3674 = pneg %p200
        $region132: #{child_sum_tree_lstm_level.1} parent=121 // pred_check_branch
          %3676 = sbr.rel (%p3674) target = $region134
        $region133: #{child_sum_tree_lstm_level.1} parent=121 // pred_region
          %s3677 = smul.u32 16, %s20
        $region134: #{child_sum_tree_lstm_level.1} parent=121 // pred_fallthru
          _
        // Predicated region
        $region135: #{child_sum_tree_lstm_level.1} parent=121 // pred_check
          %p3678 = pneg %p226
        $region136: #{child_sum_tree_lstm_level.1} parent=121 // pred_check_branch
          %3680 = sbr.rel (%p3678) target = $region138
        $region137: #{child_sum_tree_lstm_level.1} parent=121 // pred_region
          %s3681 = smul.u32 16, %s20
        $region138: #{child_sum_tree_lstm_level.1} parent=121 // pred_fallthru
          _
      $region122: #{child_sum_tree_lstm_level.1} parent=5 // pred_fallthru
        _
      %p3682 = scmp.le.s32.totalorder 2, %s15
      // Predicated region
      $region139: #{child_sum_tree_lstm_level.1} parent=5 // pred_check
        %p3683 = pneg %p3682
      $region140: #{child_sum_tree_lstm_level.1} parent=5 // pred_check_branch
        %3685 = sbr.rel (%p3683) target = $region142
      $region141: #{child_sum_tree_lstm_level.1} parent=5 // pred_region
        %s3686 = ssub.s32 %s15, 2
        // Predicated region
        $region143: #{child_sum_tree_lstm_level.1} parent=141 // pred_check
          %p3687 = pneg %p206
        $region144: #{child_sum_tree_lstm_level.1} parent=141 // pred_check_branch
          %3689 = sbr.rel (%p3687) target = $region146
        $region145: #{child_sum_tree_lstm_level.1} parent=141 // pred_region
          %s3690 = smul.u32 16, %s21
          %p3691 = scmp.lt.s32.totalorder %s3690, 31
          %s3692 = scalar_select %p3691, %s3690, 31
          %s3693 = smul.addr %s3692, 8
          %s3694 = scalar_lea.vmem %s7, %s3693
        $region146: #{child_sum_tree_lstm_level.1} parent=141 // pred_fallthru
          _
        // Predicated region
        $region147: #{child_sum_tree_lstm_level.1} parent=141 // pred_check
          %p3695 = pneg %p232
        $region148: #{child_sum_tree_lstm_level.1} parent=141 // pred_check_branch
          %3697 = sbr.rel (%p3695) target = $region150
        $region149: #{child_sum_tree_lstm_level.1} parent=141 // pred_region
          %s3698 = smul.u32 16, %s21
          %p3699 = scmp.lt.s32.totalorder %s3698, 31
          %s3700 = scalar_select %p3699, %s3698, 31
          %s3701 = smul.addr %s3700, 8
          %s3702 = scalar_lea.vmem %s8, %s3701
        $region150: #{child_sum_tree_lstm_level.1} parent=141 // pred_fallthru
          _
      $region142: #{child_sum_tree_lstm_level.1} parent=5 // pred_fallthru
        _
    $region6: #{child_sum_tree_lstm_level.1} parent=1 // loop_footer
      %s19 = sadd.s32 1, %s15
    $region7: #{child_sum_tree_lstm_level.1} parent=1 // loop_footer_branch
      %14 = sbr.rel target = $region3
    $region8: #{child_sum_tree_lstm_level.1} parent=1 // loop_exit
      _

</llo_original>
